<compile_context>
chip_gen: v6e
topology: v6e:2x2x1
jax: 0.10.0
libtpu: 0.0.40
codegen_flags: <defaults>
</compile_context>

<pallas_src>
import math

import jax
import jax.numpy as jnp
from jax.experimental import pallas as pl
from jax.experimental.pallas import tpu as pltpu

# ---------------- config (small synthetic BERT) ----------------
VOCAB = 100
MAX_POS = 64
HIDDEN = 128            # bert-base uses 768; scaled down for the synthetic test
N_HEADS = 2
HEAD_DIM = HIDDEN // N_HEADS
INTERMEDIATE = 4 * HIDDEN
N_LAYERS = 2
N_CLS_HIDDEN = 50       # matches nn.Linear(n_input, 50)
N_OUT = 5               # matches nn.Linear(50, 5)
CLS_PAD = 128           # lane-dense padding for the classifier head
LN_EPS = 1e-12


# ---------------- in-kernel helpers (f32 math) ----------------
def _layernorm(x, g, b):
    mu = jnp.mean(x, axis=-1, keepdims=True)
    var = jnp.mean(jnp.square(x - mu), axis=-1, keepdims=True)
    return (x - mu) * jax.lax.rsqrt(var + LN_EPS) * g + b


def _gelu(x):
    # TODO(synk): HF BERT uses exact erf-based GELU; tanh approximation kept for
    # robust Mosaic lowering (tiny numerical difference).
    c = math.sqrt(2.0 / math.pi)
    return 0.5 * x * (1.0 + jnp.tanh(c * (x + 0.044715 * x * x * x)))


# ---------------- fused Pallas kernel (grid over layers) ----------------
def bert_fused_kernel(
        # step-invariant inputs
        emb_ref, mask_ref, seg_row_ref, seg_col_ref, emb_g_ref, emb_b_ref,
        # per-layer (streamed) weights; leading N_LAYERS axis squeezed away
        w_qkv_ref, b_qkv_ref, w_o_ref, b_o_ref,
        ln1_g_ref, ln1_b_ref, w_in_ref, b_in_ref, w_out_ref, b_out_ref,
        ln2_g_ref, ln2_b_ref,
        # classifier head (only touched on the last grid step)
        cls_w1_ref, cls_b1_ref, cls_w2_ref, cls_b2_ref,
        # output + carried activation scratch
        o_ref, x_scratch):
    l = pl.program_id(0)

    # First grid step: embedding layernorm initializes the carried activation.
    @pl.when(l == 0)
    def _():
        x_scratch[...] = _layernorm(emb_ref[...], emb_g_ref[...], emb_b_ref[...])

    # Additive attention bias rebuilt in-kernel from O(B*S) vectors (no quadratic DMA):
    #   HF-style padding bias per key + block-diagonal bias for cross-example pairs.
    key_bias = (1.0 - mask_ref[...]) * -10000.0                          # (1, M)
    cross = jnp.where(seg_row_ref[...] == seg_col_ref[...], 0.0, -1e9)   # (M, M)
    bias = cross + key_bias

    x = x_scratch[...]                                                   # (M, H) f32
    xb = x.astype(jnp.bfloat16)

    # Fused QKV projection: one N=3H matmul; 1/sqrt(head_dim) already folded into Q.
    qkv = jnp.dot(xb, w_qkv_ref[...],
                  preferred_element_type=jnp.float32) + b_qkv_ref[...]
    q = qkv[:, :HIDDEN]
    k = qkv[:, HIDDEN:2 * HIDDEN]
    v = qkv[:, 2 * HIDDEN:]

    attn = None
    for h in range(N_HEADS):                         # static unroll over heads
        sl = slice(h * HEAD_DIM, (h + 1) * HEAD_DIM)
        qh = q[:, sl].astype(jnp.bfloat16)
        kh = k[:, sl].astype(jnp.bfloat16)
        vh = v[:, sl].astype(jnp.bfloat16)
        # q_h @ k_h^T without materializing a transpose (scale pre-folded).
        scores = jax.lax.dot_general(
            qh, kh, (((1,), (1,)), ((), ())),
            preferred_element_type=jnp.float32) + bias
        scores = scores - jnp.max(scores, axis=-1, keepdims=True)
        p = jnp.exp(scores)
        p = p * pl.reciprocal(jnp.sum(p, axis=-1, keepdims=True), approx=True)
        ctx = jnp.dot(p.astype(jnp.bfloat16), vh,
                      preferred_element_type=jnp.float32)                # (M, HEAD_DIM)
        # Slice the weight *ref* (VMEM addressing) and accumulate this head's
        # contribution directly into the output projection.
        contrib = jnp.dot(ctx.astype(jnp.bfloat16),
                          w_o_ref[pl.ds(h * HEAD_DIM, HEAD_DIM), :],
                          preferred_element_type=jnp.float32)
        attn = contrib if attn is None else attn + contrib
    attn = attn + b_o_ref[...]

    h1 = _layernorm(x + attn, ln1_g_ref[...], ln1_b_ref[...])
    f = _gelu(jnp.dot(h1.astype(jnp.bfloat16), w_in_ref[...],
                      preferred_element_type=jnp.float32) + b_in_ref[...])
    f = jnp.dot(f.astype(jnp.bfloat16), w_out_ref[...],
                preferred_element_type=jnp.float32) + b_out_ref[...]
    x_new = _layernorm(h1 + f, ln2_g_ref[...], ln2_b_ref[...])
    x_scratch[...] = x_new

    # Last grid step: classifier head on all rows (lane-padded to 128); wrapper
    # selects CLS rows + first N_OUT lanes.
    @pl.when(l == pl.num_programs(0) - 1)
    def _():
        hb = x_new.astype(jnp.bfloat16)
        hcls = jnp.dot(hb, cls_w1_ref[...],
                       preferred_element_type=jnp.float32) + cls_b1_ref[...]
        hcls = jnp.maximum(hcls, 0.0)                                    # ReLU
        o_ref[...] = jnp.dot(hcls.astype(jnp.bfloat16), cls_w2_ref[...],
                             preferred_element_type=jnp.float32) + cls_b2_ref[...]


# ---------------- forward (glue in plain JAX) ----------------
def bert_classifier_forward(params, input_ids, attention_mask):
    B, S = input_ids.shape
    M = B * S

    # Embedding gather (glue).
    emb = (params["word_emb"][input_ids]
           + params["pos_emb"][:S][None, :, :]
           + params["type_emb"][0][None, None, :]).astype(jnp.float32)
    emb = emb.reshape(M, HIDDEN)

    # O(B*S) bias ingredients; the (M, M) bias itself is built inside the kernel.
    mask_row = attention_mask.astype(jnp.float32).reshape(1, M)
    seg = (jnp.arange(M, dtype=jnp.int32) // S).astype(jnp.float32)
    seg_row = seg.reshape(M, 1)
    seg_col = seg.reshape(1, M)

    st = params["stacked"]

    def const(*shape):       # same block every grid step (Pallas skips re-DMA)
        return pl.BlockSpec(shape, lambda l, _n=len(shape): (0,) * _n)

    def layer(*shape):       # per-layer streamed block; leading layer dim squeezed
        return pl.BlockSpec((None,) + shape,
                            lambda l, _n=len(shape): (l,) + (0,) * _n)

    grid_spec = pltpu.PrefetchScalarGridSpec(
        num_scalar_prefetch=0,
        grid=(N_LAYERS,),
        in_specs=[
            const(M, HIDDEN),              # emb
            const(1, M),                   # mask_row
            const(M, 1),                   # seg_row
            const(1, M),                   # seg_col
            const(1, HIDDEN),              # emb_ln_g
            const(1, HIDDEN),              # emb_ln_b
            layer(HIDDEN, 3 * HIDDEN),     # w_qkv
            layer(1, 3 * HIDDEN),          # b_qkv
            layer(HIDDEN, HIDDEN),         # w_o
            layer(1, HIDDEN),              # b_o
            layer(1, HIDDEN),              # ln1_g
            layer(1, HIDDEN),              # ln1_b
            layer(HIDDEN, INTERMEDIATE),   # w_in
            layer(1, INTERMEDIATE),        # b_in
            layer(INTERMEDIATE, HIDDEN),   # w_out
            layer(1, HIDDEN),              # b_out
            layer(1, HIDDEN),              # ln2_g
            layer(1, HIDDEN),              # ln2_b
            const(HIDDEN, CLS_PAD),        # cls_w1
            const(1, CLS_PAD),             # cls_b1
            const(CLS_PAD, CLS_PAD),       # cls_w2
            const(1, CLS_PAD),             # cls_b2
        ],
        out_specs=pl.BlockSpec((M, CLS_PAD), lambda l: (0, 0)),
        scratch_shapes=[pltpu.VMEM((M, HIDDEN), jnp.float32)],
    )

    out = pl.pallas_call(
        bert_fused_kernel,
        out_shape=jax.ShapeDtypeStruct((M, CLS_PAD), jnp.float32),
        grid_spec=grid_spec,
        compiler_params=pltpu.CompilerParams(
            dimension_semantics=("arbitrary",),        # sequential layer carry
            vmem_limit_bytes=32 * 1024 * 1024),
    )(emb, mask_row, seg_row, seg_col, params["emb_ln_g"], params["emb_ln_b"],
      st["w_qkv"], st["b_qkv"], st["w_o"], st["b_o"],
      st["ln1_g"], st["ln1_b"], st["w_in"], st["b_in"],
      st["w_out"], st["b_out"], st["ln2_g"], st["ln2_b"],
      params["cls_w1"], params["cls_b1"], params["cls_w2"], params["cls_b2"])

    # Rows 0, S, 2S, ... are the [CLS] tokens; real logits are the first N_OUT lanes.
    return out[0::S, :N_OUT]


# ---------------- deterministic parameter init / packing ----------------
def init_params(key):
    keys = iter(jax.random.split(key, 64))

    def nrm(shape, scale=0.02):
        return scale * jax.random.normal(next(keys), shape, dtype=jnp.float32)

    zeros = lambda shape: jnp.zeros(shape, jnp.float32)
    ones = lambda shape: jnp.ones(shape, jnp.float32)

    # Classifier weights zero-padded to lane-dense (128) widths; the padded region
    # MUST stay exactly zero so the wrapper's logits slice is correct.
    cls_w1 = zeros((HIDDEN, CLS_PAD)).at[:, :N_CLS_HIDDEN].set(
        nrm((HIDDEN, N_CLS_HIDDEN)))
    cls_w2 = zeros((CLS_PAD, CLS_PAD)).at[:N_CLS_HIDDEN, :N_OUT].set(
        nrm((N_CLS_HIDDEN, N_OUT)))
    assert float(jnp.max(jnp.abs(cls_w1[:, N_CLS_HIDDEN:]))) == 0.0
    assert float(jnp.max(jnp.abs(cls_w2[N_CLS_HIDDEN:, :]))) == 0.0
    assert float(jnp.max(jnp.abs(cls_w2[:, N_OUT:]))) == 0.0

    inv_sqrt_d = 1.0 / math.sqrt(HEAD_DIM)

    w_qkv, b_qkv, w_o, b_o = [], [], [], []
    ln1_g, ln1_b, w_in, b_in, w_out, b_out, ln2_g, ln2_b = ([] for _ in range(8))
    for _ in range(N_LAYERS):
        # Fold the 1/sqrt(head_dim) attention scale into the Q projection.
        wq = nrm((HIDDEN, HIDDEN)) * inv_sqrt_d
        wk = nrm((HIDDEN, HIDDEN))
        wv = nrm((HIDDEN, HIDDEN))
        bq = zeros((1, HIDDEN)) * inv_sqrt_d
        bk = zeros((1, HIDDEN))
        bv = zeros((1, HIDDEN))
        w_qkv.append(jnp.concatenate([wq, wk, wv], axis=1).astype(jnp.bfloat16))
        b_qkv.append(jnp.concatenate([bq, bk, bv], axis=1))
        w_o.append(nrm((HIDDEN, HIDDEN)).astype(jnp.bfloat16))
        b_o.append(zeros((1, HIDDEN)))
        ln1_g.append(ones((1, HIDDEN)))
        ln1_b.append(zeros((1, HIDDEN)))
        w_in.append(nrm((HIDDEN, INTERMEDIATE)).astype(jnp.bfloat16))
        b_in.append(zeros((1, INTERMEDIATE)))
        w_out.append(nrm((INTERMEDIATE, HIDDEN)).astype(jnp.bfloat16))
        b_out.append(zeros((1, HIDDEN)))
        ln2_g.append(ones((1, HIDDEN)))
        ln2_b.append(zeros((1, HIDDEN)))

    stacked = {name: jnp.stack(vals) for name, vals in dict(
        w_qkv=w_qkv, b_qkv=b_qkv, w_o=w_o, b_o=b_o,
        ln1_g=ln1_g, ln1_b=ln1_b, w_in=w_in, b_in=b_in,
        w_out=w_out, b_out=b_out, ln2_g=ln2_g, ln2_b=ln2_b).items()}

    return {
        "word_emb": nrm((VOCAB, HIDDEN)),
        "pos_emb": nrm((MAX_POS, HIDDEN)),
        "type_emb": nrm((2, HIDDEN)),
        "emb_ln_g": ones((1, HIDDEN)),
        "emb_ln_b": zeros((1, HIDDEN)),
        "cls_w1": cls_w1.astype(jnp.bfloat16),
        "cls_b1": zeros((1, CLS_PAD)),
        "cls_w2": cls_w2.astype(jnp.bfloat16),
        "cls_b2": zeros((1, CLS_PAD)),
        "stacked": stacked,
    }


# ---------------- main ----------------
if __name__ == "__main__":
    key = jax.random.PRNGKey(0)
    pkey, ikey = jax.random.split(key)
    params = init_params(pkey)

    B, S = 2, 8
    input_ids = jax.random.randint(ikey, (B, S), 0, VOCAB, dtype=jnp.int32)
    attention_mask = jnp.ones((B, S), dtype=jnp.int32)

    fwd = jax.jit(bert_classifier_forward)
    logits = jax.block_until_ready(fwd(params, input_ids, attention_mask))

    assert logits.shape == (B, N_OUT), logits.shape
    assert bool(jnp.all(jnp.isfinite(logits)))
    print("KERNEL_OK")
</pallas_src>

<mosaic_0001>
module attributes {stable_mosaic.version = 11 : i64} {
  func.func @bert_fused_kernel(%arg0: i32, %arg1: memref<16x128xf32, #tpu.memory_space<vmem>>, %arg2: memref<1x16xf32, #tpu.memory_space<vmem>>, %arg3: memref<16x1xf32, #tpu.memory_space<vmem>>, %arg4: memref<1x16xf32, #tpu.memory_space<vmem>>, %arg5: memref<1x128xf32, #tpu.memory_space<vmem>>, %arg6: memref<1x128xf32, #tpu.memory_space<vmem>>, %arg7: memref<1x128x384xbf16, #tpu.memory_space<vmem>>, %arg8: memref<1x1x384xf32, #tpu.memory_space<vmem>>, %arg9: memref<1x128x128xbf16, #tpu.memory_space<vmem>>, %arg10: memref<1x1x128xf32, #tpu.memory_space<vmem>>, %arg11: memref<1x1x128xf32, #tpu.memory_space<vmem>>, %arg12: memref<1x1x128xf32, #tpu.memory_space<vmem>>, %arg13: memref<1x128x512xbf16, #tpu.memory_space<vmem>>, %arg14: memref<1x1x512xf32, #tpu.memory_space<vmem>>, %arg15: memref<1x512x128xbf16, #tpu.memory_space<vmem>>, %arg16: memref<1x1x128xf32, #tpu.memory_space<vmem>>, %arg17: memref<1x1x128xf32, #tpu.memory_space<vmem>>, %arg18: memref<1x1x128xf32, #tpu.memory_space<vmem>>, %arg19: memref<128x128xbf16, #tpu.memory_space<vmem>>, %arg20: memref<1x128xf32, #tpu.memory_space<vmem>>, %arg21: memref<128x128xbf16, #tpu.memory_space<vmem>>, %arg22: memref<1x128xf32, #tpu.memory_space<vmem>>, %arg23: memref<16x128xf32, #tpu.memory_space<vmem>>, %arg24: memref<16x128xf32, #tpu.memory_space<vmem>>) attributes {dimension_semantics = [#tpu.dimension_semantics<arbitrary>], iteration_bounds = array<i64: 2>, scalar_prefetch = 0 : i64, scratch_operands = 1 : i64, tpu.core_type = #tpu.core_type<tc>, window_params = [{pipeline_mode = #tpu.pipeline_mode<synchronous>, transform_indices = @transform_0, window_bounds = array<i64: 16, 128>}, {pipeline_mode = #tpu.pipeline_mode<synchronous>, transform_indices = @transform_1, window_bounds = array<i64: 1, 16>}, {pipeline_mode = #tpu.pipeline_mode<synchronous>, transform_indices = @transform_2, window_bounds = array<i64: 16, 1>}, {pipeline_mode = #tpu.pipeline_mode<synchronous>, transform_indices = @transform_3, window_bounds = array<i64: 1, 16>}, {pipeline_mode = #tpu.pipeline_mode<synchronous>, transform_indices = @transform_4, window_bounds = array<i64: 1, 128>}, {pipeline_mode = #tpu.pipeline_mode<synchronous>, transform_indices = @transform_5, window_bounds = array<i64: 1, 128>}, {transform_indices = @transform_6, window_bounds = array<i64: 1, 128, 384>}, {transform_indices = @transform_7, window_bounds = array<i64: 1, 1, 384>}, {transform_indices = @transform_8, window_bounds = array<i64: 1, 128, 128>}, {transform_indices = @transform_9, window_bounds = array<i64: 1, 1, 128>}, {transform_indices = @transform_10, window_bounds = array<i64: 1, 1, 128>}, {transform_indices = @transform_11, window_bounds = array<i64: 1, 1, 128>}, {transform_indices = @transform_12, window_bounds = array<i64: 1, 128, 512>}, {transform_indices = @transform_13, window_bounds = array<i64: 1, 1, 512>}, {transform_indices = @transform_14, window_bounds = array<i64: 1, 512, 128>}, {transform_indices = @transform_15, window_bounds = array<i64: 1, 1, 128>}, {transform_indices = @transform_16, window_bounds = array<i64: 1, 1, 128>}, {transform_indices = @transform_17, window_bounds = array<i64: 1, 1, 128>}, {pipeline_mode = #tpu.pipeline_mode<synchronous>, transform_indices = @transform_18, window_bounds = array<i64: 128, 128>}, {pipeline_mode = #tpu.pipeline_mode<synchronous>, transform_indices = @transform_19, window_bounds = array<i64: 1, 128>}, {pipeline_mode = #tpu.pipeline_mode<synchronous>, transform_indices = @transform_20, window_bounds = array<i64: 128, 128>}, {pipeline_mode = #tpu.pipeline_mode<synchronous>, transform_indices = @transform_21, window_bounds = array<i64: 1, 128>}, {pipeline_mode = #tpu.pipeline_mode<synchronous>, transform_indices = @transform_22, window_bounds = array<i64: 16, 128>}]} {
    %c0_i32 = arith.constant 0 : i32
    %0 = arith.cmpi eq, %arg0, %c0_i32 : i32
    %1 = arith.extui %0 : i1 to i32
    %c0_i32_0 = arith.constant 0 : i32
    %2 = arith.cmpi ne, %1, %c0_i32_0 : i32
    scf.if %2 {
      %c0_79 = arith.constant 0 : index
      %c0_80 = arith.constant 0 : index
      %170 = vector.load %arg1[%c0_79, %c0_80] : memref<16x128xf32, #tpu.memory_space<vmem>>, vector<16x128xf32>
      %c0_81 = arith.constant 0 : index
      %c0_82 = arith.constant 0 : index
      %171 = vector.load %arg5[%c0_81, %c0_82] : memref<1x128xf32, #tpu.memory_space<vmem>>, vector<1x128xf32>
      %c0_83 = arith.constant 0 : index
      %c0_84 = arith.constant 0 : index
      %172 = vector.load %arg6[%c0_83, %c0_84] : memref<1x128xf32, #tpu.memory_space<vmem>>, vector<1x128xf32>
      %cst_85 = arith.constant dense<0.000000e+00> : vector<16xf32>
      %173 = vector.multi_reduction <add>, %170, %cst_85 [1] : vector<16x128xf32> to vector<16xf32>
      %174 = vector.shape_cast %173 : vector<16xf32> to vector<16x1xf32>
      %cst_86 = arith.constant 1.280000e+02 : f32
      %175 = vector.broadcast %cst_86 : f32 to vector<16x1xf32>
      %176 = arith.divf %174, %175 : vector<16x1xf32>
      %177 = vector.broadcast %176 : vector<16x1xf32> to vector<16x128xf32>
      %178 = arith.subf %170, %177 : vector<16x128xf32>
      %179 = arith.mulf %178, %178 : vector<16x128xf32>
      %cst_87 = arith.constant dense<0.000000e+00> : vector<16xf32>
      %180 = vector.multi_reduction <add>, %179, %cst_87 [1] : vector<16x128xf32> to vector<16xf32>
      %181 = vector.shape_cast %180 : vector<16xf32> to vector<16x1xf32>
      %cst_88 = arith.constant 1.280000e+02 : f32
      %182 = vector.broadcast %cst_88 : f32 to vector<16x1xf32>
      %183 = arith.divf %181, %182 : vector<16x1xf32>
      %184 = vector.broadcast %176 : vector<16x1xf32> to vector<16x128xf32>
      %185 = arith.subf %170, %184 : vector<16x128xf32>
      %cst_89 = arith.constant 9.99999996E-13 : f32
      %186 = vector.broadcast %cst_89 : f32 to vector<16x1xf32>
      %187 = arith.addf %183, %186 : vector<16x1xf32>
      %188 = math.rsqrt %187 : vector<16x1xf32>
      %189 = vector.broadcast %188 : vector<16x1xf32> to vector<16x128xf32>
      %190 = arith.mulf %185, %189 : vector<16x128xf32>
      %191 = vector.broadcast %171 : vector<1x128xf32> to vector<16x128xf32>
      %192 = arith.mulf %190, %191 : vector<16x128xf32>
      %193 = vector.broadcast %172 : vector<1x128xf32> to vector<16x128xf32>
      %194 = arith.addf %192, %193 : vector<16x128xf32>
      %c0_90 = arith.constant 0 : index
      %c0_91 = arith.constant 0 : index
      %195 = vector.load %arg24[%c0_90, %c0_91] : memref<16x128xf32, #tpu.memory_space<vmem>>, vector<16x128xf32>
      tpu.vector_store %arg24[%c0_90, %c0_91], %194 {strides = array<i32>} : memref<16x128xf32, #tpu.memory_space<vmem>>, vector<16x128xf32>,
    } else {
    }
    %c0 = arith.constant 0 : index
    %c0_1 = arith.constant 0 : index
    %3 = vector.load %arg2[%c0, %c0_1] : memref<1x16xf32, #tpu.memory_space<vmem>>, vector<1x16xf32>
    %cst = arith.constant 1.000000e+00 : f32
    %4 = vector.broadcast %cst : f32 to vector<1x16xf32>
    %5 = arith.subf %4, %3 : vector<1x16xf32>
    %cst_2 = arith.constant -1.000000e+04 : f32
    %6 = vector.broadcast %cst_2 : f32 to vector<1x16xf32>
    %7 = arith.mulf %5, %6 : vector<1x16xf32>
    %c0_3 = arith.constant 0 : index
    %c0_4 = arith.constant 0 : index
    %8 = vector.load %arg3[%c0_3, %c0_4] : memref<16x1xf32, #tpu.memory_space<vmem>>, vector<16x1xf32>
    %c0_5 = arith.constant 0 : index
    %c0_6 = arith.constant 0 : index
    %9 = vector.load %arg4[%c0_5, %c0_6] : memref<1x16xf32, #tpu.memory_space<vmem>>, vector<1x16xf32>
    %10 = vector.broadcast %8 : vector<16x1xf32> to vector<16x16xf32>
    %11 = vector.broadcast %9 : vector<1x16xf32> to vector<16x16xf32>
    %12 = arith.cmpf oeq, %10, %11 : vector<16x16xf32>
    %cst_7 = arith.constant 0.000000e+00 : f32
    %cst_8 = arith.constant -1.000000e+09 : f32
    %13 = vector.broadcast %cst_7 : f32 to vector<16x16xf32>
    %14 = vector.broadcast %cst_8 : f32 to vector<16x16xf32>
    %15 = arith.select %12, %13, %14 : vector<16x16xi1>, vector<16x16xf32>
    %16 = vector.broadcast %7 : vector<1x16xf32> to vector<16x16xf32>
    %17 = arith.addf %15, %16 : vector<16x16xf32>
    %c0_9 = arith.constant 0 : index
    %c0_10 = arith.constant 0 : index
    %18 = vector.load %arg24[%c0_9, %c0_10] : memref<16x128xf32, #tpu.memory_space<vmem>>, vector<16x128xf32>
    %19 = arith.truncf %18 : vector<16x128xf32> to vector<16x128xbf16>
    %c0_11 = arith.constant 0 : index
    %c0_12 = arith.constant 0 : index
    %c0_13 = arith.constant 0 : index
    %20 = vector.load %arg7[%c0_11, %c0_12, %c0_13] : memref<1x128x384xbf16, #tpu.memory_space<vmem>>, vector<1x128x384xbf16>
    %21 = vector.shape_cast %20 : vector<1x128x384xbf16> to vector<128x384xbf16>
    %cst_14 = arith.constant dense<0.000000e+00> : vector<16x384xf32>
    %22 = tpu.matmul %19, %21, %cst_14 {dimension_numbers = #tpu.dot_dimension_numbers<[1], [0], [0], [1], [0, 0, 1, 1], [], []>} : vector<16x128xbf16>, vector<128x384xbf16>, vector<16x384xf32> -> vector<16x384xf32>
    %c0_15 = arith.constant 0 : index
    %c0_16 = arith.constant 0 : index
    %c0_17 = arith.constant 0 : index
    %23 = vector.load %arg8[%c0_15, %c0_16, %c0_17] : memref<1x1x384xf32, #tpu.memory_space<vmem>>, vector<1x1x384xf32>
    %24 = vector.shape_cast %23 : vector<1x1x384xf32> to vector<1x384xf32>
    %25 = vector.broadcast %24 : vector<1x384xf32> to vector<16x384xf32>
    %26 = arith.addf %22, %25 : vector<16x384xf32>
    %27 = vector.extract_strided_slice %26 {offsets = [0, 0], sizes = [16, 128], strides = [1, 1]} : vector<16x384xf32> to vector<16x128xf32>
    %28 = vector.extract_strided_slice %26 {offsets = [0, 128], sizes = [16, 128], strides = [1, 1]} : vector<16x384xf32> to vector<16x128xf32>
    %29 = vector.extract_strided_slice %26 {offsets = [0, 256], sizes = [16, 128], strides = [1, 1]} : vector<16x384xf32> to vector<16x128xf32>
    %30 = vector.extract_strided_slice %27 {offsets = [0, 0], sizes = [16, 64], strides = [1, 1]} : vector<16x128xf32> to vector<16x64xf32>
    %31 = arith.truncf %30 : vector<16x64xf32> to vector<16x64xbf16>
    %32 = vector.extract_strided_slice %28 {offsets = [0, 0], sizes = [16, 64], strides = [1, 1]} : vector<16x128xf32> to vector<16x64xf32>
    %33 = arith.truncf %32 : vector<16x64xf32> to vector<16x64xbf16>
    %34 = vector.extract_strided_slice %29 {offsets = [0, 0], sizes = [16, 64], strides = [1, 1]} : vector<16x128xf32> to vector<16x64xf32>
    %35 = arith.truncf %34 : vector<16x64xf32> to vector<16x64xbf16>
    %cst_18 = arith.constant dense<0.000000e+00> : vector<16x16xf32>
    %36 = tpu.matmul %31, %33, %cst_18 {dimension_numbers = #tpu.dot_dimension_numbers<[1], [1], [0], [0], [0, 0, 1, 0], [], []>} : vector<16x64xbf16>, vector<16x64xbf16>, vector<16x16xf32> -> vector<16x16xf32>
    %37 = arith.addf %36, %17 : vector<16x16xf32>
    %cst_19 = arith.constant dense<0xFF800000> : vector<16xf32>
    %38 = vector.multi_reduction <maximumf>, %37, %cst_19 [1] : vector<16x16xf32> to vector<16xf32>
    %39 = vector.shape_cast %38 : vector<16xf32> to vector<16x1xf32>
    %40 = vector.broadcast %39 : vector<16x1xf32> to vector<16x16xf32>
    %41 = arith.subf %37, %40 : vector<16x16xf32>
    %42 = math.exp %41 : vector<16x16xf32>
    %cst_20 = arith.constant dense<0.000000e+00> : vector<16xf32>
    %43 = vector.multi_reduction <add>, %42, %cst_20 [1] : vector<16x16xf32> to vector<16xf32>
    %44 = vector.shape_cast %43 : vector<16xf32> to vector<16x1xf32>
    %45 = tpu.reciprocal %44 {approx = true} : vector<16x1xf32> -> vector<16x1xf32>
    %46 = vector.broadcast %45 : vector<16x1xf32> to vector<16x16xf32>
    %47 = arith.mulf %42, %46 : vector<16x16xf32>
    %48 = arith.truncf %47 : vector<16x16xf32> to vector<16x16xbf16>
    %cst_21 = arith.constant dense<0.000000e+00> : vector<16x64xf32>
    %49 = tpu.matmul %48, %35, %cst_21 {dimension_numbers = #tpu.dot_dimension_numbers<[1], [0], [0], [1], [0, 0, 1, 1], [], []>} : vector<16x16xbf16>, vector<16x64xbf16>, vector<16x64xf32> -> vector<16x64xf32>
    %50 = arith.truncf %49 : vector<16x64xf32> to vector<16x64xbf16>
    %c0_22 = arith.constant 0 : index
    %c0_23 = arith.constant 0 : index
    %c0_24 = arith.constant 0 : index
    %51 = vector.load %arg9[%c0_22, %c0_23, %c0_24] : memref<1x128x128xbf16, #tpu.memory_space<vmem>>, vector<1x64x128xbf16>
    %52 = vector.shape_cast %51 : vector<1x64x128xbf16> to vector<64x128xbf16>
    %cst_25 = arith.constant dense<0.000000e+00> : vector<16x128xf32>
    %53 = tpu.matmul %50, %52, %cst_25 {dimension_numbers = #tpu.dot_dimension_numbers<[1], [0], [0], [1], [0, 0, 1, 1], [], []>} : vector<16x64xbf16>, vector<64x128xbf16>, vector<16x128xf32> -> vector<16x128xf32>
    %54 = vector.extract_strided_slice %27 {offsets = [0, 64], sizes = [16, 64], strides = [1, 1]} : vector<16x128xf32> to vector<16x64xf32>
    %55 = arith.truncf %54 : vector<16x64xf32> to vector<16x64xbf16>
    %56 = vector.extract_strided_slice %28 {offsets = [0, 64], sizes = [16, 64], strides = [1, 1]} : vector<16x128xf32> to vector<16x64xf32>
    %57 = arith.truncf %56 : vector<16x64xf32> to vector<16x64xbf16>
    %58 = vector.extract_strided_slice %29 {offsets = [0, 64], sizes = [16, 64], strides = [1, 1]} : vector<16x128xf32> to vector<16x64xf32>
    %59 = arith.truncf %58 : vector<16x64xf32> to vector<16x64xbf16>
    %cst_26 = arith.constant dense<0.000000e+00> : vector<16x16xf32>
    %60 = tpu.matmul %55, %57, %cst_26 {dimension_numbers = #tpu.dot_dimension_numbers<[1], [1], [0], [0], [0, 0, 1, 0], [], []>} : vector<16x64xbf16>, vector<16x64xbf16>, vector<16x16xf32> -> vector<16x16xf32>
    %61 = arith.addf %60, %17 : vector<16x16xf32>
    %cst_27 = arith.constant dense<0xFF800000> : vector<16xf32>
    %62 = vector.multi_reduction <maximumf>, %61, %cst_27 [1] : vector<16x16xf32> to vector<16xf32>
    %63 = vector.shape_cast %62 : vector<16xf32> to vector<16x1xf32>
    %64 = vector.broadcast %63 : vector<16x1xf32> to vector<16x16xf32>
    %65 = arith.subf %61, %64 : vector<16x16xf32>
    %66 = math.exp %65 : vector<16x16xf32>
    %cst_28 = arith.constant dense<0.000000e+00> : vector<16xf32>
    %67 = vector.multi_reduction <add>, %66, %cst_28 [1] : vector<16x16xf32> to vector<16xf32>
    %68 = vector.shape_cast %67 : vector<16xf32> to vector<16x1xf32>
    %69 = tpu.reciprocal %68 {approx = true} : vector<16x1xf32> -> vector<16x1xf32>
    %70 = vector.broadcast %69 : vector<16x1xf32> to vector<16x16xf32>
    %71 = arith.mulf %66, %70 : vector<16x16xf32>
    %72 = arith.truncf %71 : vector<16x16xf32> to vector<16x16xbf16>
    %cst_29 = arith.constant dense<0.000000e+00> : vector<16x64xf32>
    %73 = tpu.matmul %72, %59, %cst_29 {dimension_numbers = #tpu.dot_dimension_numbers<[1], [0], [0], [1], [0, 0, 1, 1], [], []>} : vector<16x16xbf16>, vector<16x64xbf16>, vector<16x64xf32> -> vector<16x64xf32>
    %74 = arith.truncf %73 : vector<16x64xf32> to vector<16x64xbf16>
    %c0_30 = arith.constant 0 : index
    %c64 = arith.constant 64 : index
    %c0_31 = arith.constant 0 : index
    %75 = vector.load %arg9[%c0_30, %c64, %c0_31] : memref<1x128x128xbf16, #tpu.memory_space<vmem>>, vector<1x64x128xbf16>
    %76 = vector.shape_cast %75 : vector<1x64x128xbf16> to vector<64x128xbf16>
    %cst_32 = arith.constant dense<0.000000e+00> : vector<16x128xf32>
    %77 = tpu.matmul %74, %76, %cst_32 {dimension_numbers = #tpu.dot_dimension_numbers<[1], [0], [0], [1], [0, 0, 1, 1], [], []>} : vector<16x64xbf16>, vector<64x128xbf16>, vector<16x128xf32> -> vector<16x128xf32>
    %78 = arith.addf %53, %77 : vector<16x128xf32>
    %c0_33 = arith.constant 0 : index
    %c0_34 = arith.constant 0 : index
    %c0_35 = arith.constant 0 : index
    %79 = vector.load %arg10[%c0_33, %c0_34, %c0_35] : memref<1x1x128xf32, #tpu.memory_space<vmem>>, vector<1x1x128xf32>
    %80 = vector.shape_cast %79 : vector<1x1x128xf32> to vector<1x128xf32>
    %81 = vector.broadcast %80 : vector<1x128xf32> to vector<16x128xf32>
    %82 = arith.addf %78, %81 : vector<16x128xf32>
    %83 = arith.addf %18, %82 : vector<16x128xf32>
    %c0_36 = arith.constant 0 : index
    %c0_37 = arith.constant 0 : index
    %c0_38 = arith.constant 0 : index
    %84 = vector.load %arg11[%c0_36, %c0_37, %c0_38] : memref<1x1x128xf32, #tpu.memory_space<vmem>>, vector<1x1x128xf32>
    %85 = vector.shape_cast %84 : vector<1x1x128xf32> to vector<1x128xf32>
    %c0_39 = arith.constant 0 : index
    %c0_40 = arith.constant 0 : index
    %c0_41 = arith.constant 0 : index
    %86 = vector.load %arg12[%c0_39, %c0_40, %c0_41] : memref<1x1x128xf32, #tpu.memory_space<vmem>>, vector<1x1x128xf32>
    %87 = vector.shape_cast %86 : vector<1x1x128xf32> to vector<1x128xf32>
    %cst_42 = arith.constant dense<0.000000e+00> : vector<16xf32>
    %88 = vector.multi_reduction <add>, %83, %cst_42 [1] : vector<16x128xf32> to vector<16xf32>
    %89 = vector.shape_cast %88 : vector<16xf32> to vector<16x1xf32>
    %cst_43 = arith.constant 1.280000e+02 : f32
    %90 = vector.broadcast %cst_43 : f32 to vector<16x1xf32>
    %91 = arith.divf %89, %90 : vector<16x1xf32>
    %92 = vector.broadcast %91 : vector<16x1xf32> to vector<16x128xf32>
    %93 = arith.subf %83, %92 : vector<16x128xf32>
    %94 = arith.mulf %93, %93 : vector<16x128xf32>
    %cst_44 = arith.constant dense<0.000000e+00> : vector<16xf32>
    %95 = vector.multi_reduction <add>, %94, %cst_44 [1] : vector<16x128xf32> to vector<16xf32>
    %96 = vector.shape_cast %95 : vector<16xf32> to vector<16x1xf32>
    %cst_45 = arith.constant 1.280000e+02 : f32
    %97 = vector.broadcast %cst_45 : f32 to vector<16x1xf32>
    %98 = arith.divf %96, %97 : vector<16x1xf32>
    %99 = vector.broadcast %91 : vector<16x1xf32> to vector<16x128xf32>
    %100 = arith.subf %83, %99 : vector<16x128xf32>
    %cst_46 = arith.constant 9.99999996E-13 : f32
    %101 = vector.broadcast %cst_46 : f32 to vector<16x1xf32>
    %102 = arith.addf %98, %101 : vector<16x1xf32>
    %103 = math.rsqrt %102 : vector<16x1xf32>
    %104 = vector.broadcast %103 : vector<16x1xf32> to vector<16x128xf32>
    %105 = arith.mulf %100, %104 : vector<16x128xf32>
    %106 = vector.broadcast %85 : vector<1x128xf32> to vector<16x128xf32>
    %107 = arith.mulf %105, %106 : vector<16x128xf32>
    %108 = vector.broadcast %87 : vector<1x128xf32> to vector<16x128xf32>
    %109 = arith.addf %107, %108 : vector<16x128xf32>
    %110 = arith.truncf %109 : vector<16x128xf32> to vector<16x128xbf16>
    %c0_47 = arith.constant 0 : index
    %c0_48 = arith.constant 0 : index
    %c0_49 = arith.constant 0 : index
    %111 = vector.load %arg13[%c0_47, %c0_48, %c0_49] : memref<1x128x512xbf16, #tpu.memory_space<vmem>>, vector<1x128x512xbf16>
    %112 = vector.shape_cast %111 : vector<1x128x512xbf16> to vector<128x512xbf16>
    %cst_50 = arith.constant dense<0.000000e+00> : vector<16x512xf32>
    %113 = tpu.matmul %110, %112, %cst_50 {dimension_numbers = #tpu.dot_dimension_numbers<[1], [0], [0], [1], [0, 0, 1, 1], [], []>} : vector<16x128xbf16>, vector<128x512xbf16>, vector<16x512xf32> -> vector<16x512xf32>
    %c0_51 = arith.constant 0 : index
    %c0_52 = arith.constant 0 : index
    %c0_53 = arith.constant 0 : index
    %114 = vector.load %arg14[%c0_51, %c0_52, %c0_53] : memref<1x1x512xf32, #tpu.memory_space<vmem>>, vector<1x1x512xf32>
    %115 = vector.shape_cast %114 : vector<1x1x512xf32> to vector<1x512xf32>
    %116 = vector.broadcast %115 : vector<1x512xf32> to vector<16x512xf32>
    %117 = arith.addf %113, %116 : vector<16x512xf32>
    %cst_54 = arith.constant 5.000000e-01 : f32
    %118 = vector.broadcast %cst_54 : f32 to vector<16x512xf32>
    %119 = arith.mulf %118, %117 : vector<16x512xf32>
    %cst_55 = arith.constant 4.471500e-02 : f32
    %120 = vector.broadcast %cst_55 : f32 to vector<16x512xf32>
    %121 = arith.mulf %120, %117 : vector<16x512xf32>
    %122 = arith.mulf %121, %117 : vector<16x512xf32>
    %123 = arith.mulf %122, %117 : vector<16x512xf32>
    %124 = arith.addf %117, %123 : vector<16x512xf32>
    %cst_56 = arith.constant 0.797884583 : f32
    %125 = vector.broadcast %cst_56 : f32 to vector<16x512xf32>
    %126 = arith.mulf %125, %124 : vector<16x512xf32>
    %127 = math.tanh %126 : vector<16x512xf32>
    %cst_57 = arith.constant 1.000000e+00 : f32
    %128 = vector.broadcast %cst_57 : f32 to vector<16x512xf32>
    %129 = arith.addf %128, %127 : vector<16x512xf32>
    %130 = arith.mulf %119, %129 : vector<16x512xf32>
    %131 = arith.truncf %130 : vector<16x512xf32> to vector<16x512xbf16>
    %c0_58 = arith.constant 0 : index
    %c0_59 = arith.constant 0 : index
    %c0_60 = arith.constant 0 : index
    %132 = vector.load %arg15[%c0_58, %c0_59, %c0_60] : memref<1x512x128xbf16, #tpu.memory_space<vmem>>, vector<1x512x128xbf16>
    %133 = vector.shape_cast %132 : vector<1x512x128xbf16> to vector<512x128xbf16>
    %cst_61 = arith.constant dense<0.000000e+00> : vector<16x128xf32>
    %134 = tpu.matmul %131, %133, %cst_61 {dimension_numbers = #tpu.dot_dimension_numbers<[1], [0], [0], [1], [0, 0, 1, 1], [], []>} : vector<16x512xbf16>, vector<512x128xbf16>, vector<16x128xf32> -> vector<16x128xf32>
    %c0_62 = arith.constant 0 : index
    %c0_63 = arith.constant 0 : index
    %c0_64 = arith.constant 0 : index
    %135 = vector.load %arg16[%c0_62, %c0_63, %c0_64] : memref<1x1x128xf32, #tpu.memory_space<vmem>>, vector<1x1x128xf32>
    %136 = vector.shape_cast %135 : vector<1x1x128xf32> to vector<1x128xf32>
    %137 = vector.broadcast %136 : vector<1x128xf32> to vector<16x128xf32>
    %138 = arith.addf %134, %137 : vector<16x128xf32>
    %139 = arith.addf %109, %138 : vector<16x128xf32>
    %c0_65 = arith.constant 0 : index
    %c0_66 = arith.constant 0 : index
    %c0_67 = arith.constant 0 : index
    %140 = vector.load %arg17[%c0_65, %c0_66, %c0_67] : memref<1x1x128xf32, #tpu.memory_space<vmem>>, vector<1x1x128xf32>
    %141 = vector.shape_cast %140 : vector<1x1x128xf32> to vector<1x128xf32>
    %c0_68 = arith.constant 0 : index
    %c0_69 = arith.constant 0 : index
    %c0_70 = arith.constant 0 : index
    %142 = vector.load %arg18[%c0_68, %c0_69, %c0_70] : memref<1x1x128xf32, #tpu.memory_space<vmem>>, vector<1x1x128xf32>
    %143 = vector.shape_cast %142 : vector<1x1x128xf32> to vector<1x128xf32>
    %cst_71 = arith.constant dense<0.000000e+00> : vector<16xf32>
    %144 = vector.multi_reduction <add>, %139, %cst_71 [1] : vector<16x128xf32> to vector<16xf32>
    %145 = vector.shape_cast %144 : vector<16xf32> to vector<16x1xf32>
    %cst_72 = arith.constant 1.280000e+02 : f32
    %146 = vector.broadcast %cst_72 : f32 to vector<16x1xf32>
    %147 = arith.divf %145, %146 : vector<16x1xf32>
    %148 = vector.broadcast %147 : vector<16x1xf32> to vector<16x128xf32>
    %149 = arith.subf %139, %148 : vector<16x128xf32>
    %150 = arith.mulf %149, %149 : vector<16x128xf32>
    %cst_73 = arith.constant dense<0.000000e+00> : vector<16xf32>
    %151 = vector.multi_reduction <add>, %150, %cst_73 [1] : vector<16x128xf32> to vector<16xf32>
    %152 = vector.shape_cast %151 : vector<16xf32> to vector<16x1xf32>
    %cst_74 = arith.constant 1.280000e+02 : f32
    %153 = vector.broadcast %cst_74 : f32 to vector<16x1xf32>
    %154 = arith.divf %152, %153 : vector<16x1xf32>
    %155 = vector.broadcast %147 : vector<16x1xf32> to vector<16x128xf32>
    %156 = arith.subf %139, %155 : vector<16x128xf32>
    %cst_75 = arith.constant 9.99999996E-13 : f32
    %157 = vector.broadcast %cst_75 : f32 to vector<16x1xf32>
    %158 = arith.addf %154, %157 : vector<16x1xf32>
    %159 = math.rsqrt %158 : vector<16x1xf32>
    %160 = vector.broadcast %159 : vector<16x1xf32> to vector<16x128xf32>
    %161 = arith.mulf %156, %160 : vector<16x128xf32>
    %162 = vector.broadcast %141 : vector<1x128xf32> to vector<16x128xf32>
    %163 = arith.mulf %161, %162 : vector<16x128xf32>
    %164 = vector.broadcast %143 : vector<1x128xf32> to vector<16x128xf32>
    %165 = arith.addf %163, %164 : vector<16x128xf32>
    %c0_76 = arith.constant 0 : index
    %c0_77 = arith.constant 0 : index
    %166 = vector.load %arg24[%c0_76, %c0_77] : memref<16x128xf32, #tpu.memory_space<vmem>>, vector<16x128xf32>
    tpu.vector_store %arg24[%c0_76, %c0_77], %165 {strides = array<i32>} : memref<16x128xf32, #tpu.memory_space<vmem>>, vector<16x128xf32>,
    %c1_i32 = arith.constant 1 : i32
    %167 = arith.cmpi eq, %arg0, %c1_i32 : i32
    %168 = arith.extui %167 : i1 to i32
    %c0_i32_78 = arith.constant 0 : i32
    %169 = arith.cmpi ne, %168, %c0_i32_78 : i32
    scf.if %169 {
      %170 = arith.truncf %165 : vector<16x128xf32> to vector<16x128xbf16>
      %c0_79 = arith.constant 0 : index
      %c0_80 = arith.constant 0 : index
      %171 = vector.load %arg19[%c0_79, %c0_80] : memref<128x128xbf16, #tpu.memory_space<vmem>>, vector<128x128xbf16>
      %cst_81 = arith.constant dense<0.000000e+00> : vector<16x128xf32>
      %172 = tpu.matmul %170, %171, %cst_81 {dimension_numbers = #tpu.dot_dimension_numbers<[1], [0], [0], [1], [0, 0, 1, 1], [], []>} : vector<16x128xbf16>, vector<128x128xbf16>, vector<16x128xf32> -> vector<16x128xf32>
      %c0_82 = arith.constant 0 : index
      %c0_83 = arith.constant 0 : index
      %173 = vector.load %arg20[%c0_82, %c0_83] : memref<1x128xf32, #tpu.memory_space<vmem>>, vector<1x128xf32>
      %174 = vector.broadcast %173 : vector<1x128xf32> to vector<16x128xf32>
      %175 = arith.addf %172, %174 : vector<16x128xf32>
      %cst_84 = arith.constant 0.000000e+00 : f32
      %176 = vector.broadcast %cst_84 : f32 to vector<16x128xf32>
      %177 = arith.maximumf %175, %176 : vector<16x128xf32>
      %178 = arith.truncf %177 : vector<16x128xf32> to vector<16x128xbf16>
      %c0_85 = arith.constant 0 : index
      %c0_86 = arith.constant 0 : index
      %179 = vector.load %arg21[%c0_85, %c0_86] : memref<128x128xbf16, #tpu.memory_space<vmem>>, vector<128x128xbf16>
      %cst_87 = arith.constant dense<0.000000e+00> : vector<16x128xf32>
      %180 = tpu.matmul %178, %179, %cst_87 {dimension_numbers = #tpu.dot_dimension_numbers<[1], [0], [0], [1], [0, 0, 1, 1], [], []>} : vector<16x128xbf16>, vector<128x128xbf16>, vector<16x128xf32> -> vector<16x128xf32>
      %c0_88 = arith.constant 0 : index
      %c0_89 = arith.constant 0 : index
      %181 = vector.load %arg22[%c0_88, %c0_89] : memref<1x128xf32, #tpu.memory_space<vmem>>, vector<1x128xf32>
      %182 = vector.broadcast %181 : vector<1x128xf32> to vector<16x128xf32>
      %183 = arith.addf %180, %182 : vector<16x128xf32>
      %c0_90 = arith.constant 0 : index
      %c0_91 = arith.constant 0 : index
      %184 = vector.load %arg23[%c0_90, %c0_91] : memref<16x128xf32, #tpu.memory_space<vmem>>, vector<16x128xf32>
      tpu.vector_store %arg23[%c0_90, %c0_91], %183 {strides = array<i32>} : memref<16x128xf32, #tpu.memory_space<vmem>>, vector<16x128xf32>,
    } else {
    }
    return
  }
  func.func @transform_0(%arg0: i32) -> (i32, i32) {
    %c0_i32 = arith.constant 0 : i32
    %c0_i32_0 = arith.constant 0 : i32
    %c0_i32_1 = arith.constant 0 : i32
    return %c0_i32, %c0_i32_0 : i32, i32
  }
  func.func @transform_1(%arg0: i32) -> (i32, i32) {
    %c0_i32 = arith.constant 0 : i32
    %c0_i32_0 = arith.constant 0 : i32
    %c0_i32_1 = arith.constant 0 : i32
    return %c0_i32, %c0_i32_0 : i32, i32
  }
  func.func @transform_2(%arg0: i32) -> (i32, i32) {
    %c0_i32 = arith.constant 0 : i32
    %c0_i32_0 = arith.constant 0 : i32
    %c0_i32_1 = arith.constant 0 : i32
    return %c0_i32, %c0_i32_0 : i32, i32
  }
  func.func @transform_3(%arg0: i32) -> (i32, i32) {
    %c0_i32 = arith.constant 0 : i32
    %c0_i32_0 = arith.constant 0 : i32
    %c0_i32_1 = arith.constant 0 : i32
    return %c0_i32, %c0_i32_0 : i32, i32
  }
  func.func @transform_4(%arg0: i32) -> (i32, i32) {
    %c0_i32 = arith.constant 0 : i32
    %c0_i32_0 = arith.constant 0 : i32
    %c0_i32_1 = arith.constant 0 : i32
    return %c0_i32, %c0_i32_0 : i32, i32
  }
  func.func @transform_5(%arg0: i32) -> (i32, i32) {
    %c0_i32 = arith.constant 0 : i32
    %c0_i32_0 = arith.constant 0 : i32
    %c0_i32_1 = arith.constant 0 : i32
    return %c0_i32, %c0_i32_0 : i32, i32
  }
  func.func @transform_6(%arg0: i32) -> (i32, i32, i32) {
    %c0_i32 = arith.constant 0 : i32
    %c0_i32_0 = arith.constant 0 : i32
    %c0_i32_1 = arith.constant 0 : i32
    return %arg0, %c0_i32, %c0_i32_0 : i32, i32, i32
  }
  func.func @transform_7(%arg0: i32) -> (i32, i32, i32) {
    %c0_i32 = arith.constant 0 : i32
    %c0_i32_0 = arith.constant 0 : i32
    %c0_i32_1 = arith.constant 0 : i32
    return %arg0, %c0_i32, %c0_i32_0 : i32, i32, i32
  }
  func.func @transform_8(%arg0: i32) -> (i32, i32, i32) {
    %c0_i32 = arith.constant 0 : i32
    %c0_i32_0 = arith.constant 0 : i32
    %c0_i32_1 = arith.constant 0 : i32
    return %arg0, %c0_i32, %c0_i32_0 : i32, i32, i32
  }
  func.func @transform_9(%arg0: i32) -> (i32, i32, i32) {
    %c0_i32 = arith.constant 0 : i32
    %c0_i32_0 = arith.constant 0 : i32
    %c0_i32_1 = arith.constant 0 : i32
    return %arg0, %c0_i32, %c0_i32_0 : i32, i32, i32
  }
  func.func @transform_10(%arg0: i32) -> (i32, i32, i32) {
    %c0_i32 = arith.constant 0 : i32
    %c0_i32_0 = arith.constant 0 : i32
    %c0_i32_1 = arith.constant 0 : i32
    return %arg0, %c0_i32, %c0_i32_0 : i32, i32, i32
  }
  func.func @transform_11(%arg0: i32) -> (i32, i32, i32) {
    %c0_i32 = arith.constant 0 : i32
    %c0_i32_0 = arith.constant 0 : i32
    %c0_i32_1 = arith.constant 0 : i32
    return %arg0, %c0_i32, %c0_i32_0 : i32, i32, i32
  }
  func.func @transform_12(%arg0: i32) -> (i32, i32, i32) {
    %c0_i32 = arith.constant 0 : i32
    %c0_i32_0 = arith.constant 0 : i32
    %c0_i32_1 = arith.constant 0 : i32
    return %arg0, %c0_i32, %c0_i32_0 : i32, i32, i32
  }
  func.func @transform_13(%arg0: i32) -> (i32, i32, i32) {
    %c0_i32 = arith.constant 0 : i32
    %c0_i32_0 = arith.constant 0 : i32
    %c0_i32_1 = arith.constant 0 : i32
    return %arg0, %c0_i32, %c0_i32_0 : i32, i32, i32
  }
  func.func @transform_14(%arg0: i32) -> (i32, i32, i32) {
    %c0_i32 = arith.constant 0 : i32
    %c0_i32_0 = arith.constant 0 : i32
    %c0_i32_1 = arith.constant 0 : i32
    return %arg0, %c0_i32, %c0_i32_0 : i32, i32, i32
  }
  func.func @transform_15(%arg0: i32) -> (i32, i32, i32) {
    %c0_i32 = arith.constant 0 : i32
    %c0_i32_0 = arith.constant 0 : i32
    %c0_i32_1 = arith.constant 0 : i32
    return %arg0, %c0_i32, %c0_i32_0 : i32, i32, i32
  }
  func.func @transform_16(%arg0: i32) -> (i32, i32, i32) {
    %c0_i32 = arith.constant 0 : i32
    %c0_i32_0 = arith.constant 0 : i32
    %c0_i32_1 = arith.constant 0 : i32
    return %arg0, %c0_i32, %c0_i32_0 : i32, i32, i32
  }
  func.func @transform_17(%arg0: i32) -> (i32, i32, i32) {
    %c0_i32 = arith.constant 0 : i32
    %c0_i32_0 = arith.constant 0 : i32
    %c0_i32_1 = arith.constant 0 : i32
    return %arg0, %c0_i32, %c0_i32_0 : i32, i32, i32
  }
  func.func @transform_18(%arg0: i32) -> (i32, i32) {
    %c0_i32 = arith.constant 0 : i32
    %c0_i32_0 = arith.constant 0 : i32
    %c0_i32_1 = arith.constant 0 : i32
    return %c0_i32, %c0_i32_0 : i32, i32
  }
  func.func @transform_19(%arg0: i32) -> (i32, i32) {
    %c0_i32 = arith.constant 0 : i32
    %c0_i32_0 = arith.constant 0 : i32
    %c0_i32_1 = arith.constant 0 : i32
    return %c0_i32, %c0_i32_0 : i32, i32
  }
  func.func @transform_20(%arg0: i32) -> (i32, i32) {
    %c0_i32 = arith.constant 0 : i32
    %c0_i32_0 = arith.constant 0 : i32
    %c0_i32_1 = arith.constant 0 : i32
    return %c0_i32, %c0_i32_0 : i32, i32
  }
  func.func @transform_21(%arg0: i32) -> (i32, i32) {
    %c0_i32 = arith.constant 0 : i32
    %c0_i32_0 = arith.constant 0 : i32
    %c0_i32_1 = arith.constant 0 : i32
    return %c0_i32, %c0_i32_0 : i32, i32
  }
  func.func @transform_22(%arg0: i32) -> (i32, i32) {
    %c0_i32 = arith.constant 0 : i32
    %c0_i32_0 = arith.constant 0 : i32
    %c0_i32_1 = arith.constant 0 : i32
    return %c0_i32, %c0_i32_0 : i32, i32
  }
}

</mosaic_0001>

<llo_original>
// kernel: bert_classifier_forward.1
$region0: #{bert_classifier_forward.1}
  #allocation0 [shape = 'u32[]', space=smem, size = 0x4, offset = 0x4, fixed_abs, tag = 'smem constant byte address 0x4 - core index']
  #allocation1 [shape = 'u32[144,128]{1,0:T(1,128)}', space=vmem, size = 0x12000, scoped, tag = 'internal scratch']
  #allocation2 [shape = 'f32[16,128]{1,0:T(8,128)}', space=vmem, size = 0x2000, scoped, tag = 'scratch operand']
  %s0 = inlined_call_operand.vmem [shape: f32[16,128], index: 0, kind: input, shape index: {}]
  %s1 = inlined_call_operand.vmem [shape: f32[1,16], index: 1, kind: input, shape index: {}]
  %s2 = inlined_call_operand.vmem [shape: f32[16,1], index: 2, kind: input, shape index: {}]
  %s3 = inlined_call_operand.vmem [shape: f32[1,16], index: 3, kind: input, shape index: {}]
  %s4 = inlined_call_operand.hbm [shape: f32[1,128], index: 4, kind: input, shape index: {}]
  %s5 = inlined_call_operand.hbm [shape: f32[1,128], index: 5, kind: input, shape index: {}]
  %s6 = inlined_call_operand.hbm [shape: bf16[2,128,384], index: 6, kind: input, shape index: {}]
  %s7 = inlined_call_operand.vmem [shape: f32[2,1,384], index: 7, kind: input, shape index: {}]
  %s8 = inlined_call_operand.vmem [shape: bf16[2,128,128], index: 8, kind: input, shape index: {}]
  %s9 = inlined_call_operand.vmem [shape: f32[2,1,128], index: 9, kind: input, shape index: {}]
  %s10 = inlined_call_operand.vmem [shape: f32[2,1,128], index: 10, kind: input, shape index: {}]
  %s11 = inlined_call_operand.hbm [shape: f32[2,1,128], index: 11, kind: input, shape index: {}]
  %s12 = inlined_call_operand.hbm [shape: bf16[2,128,512], index: 12, kind: input, shape index: {}]
  %s13 = inlined_call_operand.hbm [shape: f32[2,1,512], index: 13, kind: input, shape index: {}]
  %s14 = inlined_call_operand.hbm [shape: bf16[2,512,128], index: 14, kind: input, shape index: {}]
  %s15 = inlined_call_operand.hbm [shape: f32[2,1,128], index: 15, kind: input, shape index: {}]
  %s16 = inlined_call_operand.vmem [shape: f32[2,1,128], index: 16, kind: input, shape index: {}]
  %s17 = inlined_call_operand.hbm [shape: f32[2,1,128], index: 17, kind: input, shape index: {}]
  %s18 = inlined_call_operand.vmem [shape: bf16[128,128], index: 18, kind: input, shape index: {}]
  %s19 = inlined_call_operand.hbm [shape: f32[1,128], index: 19, kind: input, shape index: {}]
  %s20 = inlined_call_operand.vmem [shape: bf16[128,128], index: 20, kind: input, shape index: {}]
  %s21 = inlined_call_operand.hbm [shape: f32[1,128], index: 21, kind: input, shape index: {}]
  %s22 = inlined_call_operand.vmem [shape: f32[16,128], index: 22, kind: output, shape index: {}]
  %s23 = sld [smem:[#allocation0]]
  $region173: #{bert_classifier_forward.1} parent=0
    _
  %s25 = ssub.s32 1, %s23
  %s26 = scalar_select 0, %s25, %s23
  $region1: #{bert_classifier_forward.1} parent=0
    #allocation3 [shape = 'u8[512]{0}', space=vmem, size = 0x400, scoped, tag = 'input window, operand 4, single buffered']
    #allocation4 [shape = 's32[2]{0}', space=sflag, size = 0x8, scoped, tag = 'scoped memory for bert_classifier_forward.1']
    #allocation5 [shape = 'u8[512]{0}', space=vmem, size = 0x400, scoped, tag = 'input window, operand 5, single buffered']
    #allocation6 [shape = 's32[1]{0}', space=sflag, size = 0x4, scoped, tag = 'scoped memory for bert_classifier_forward.1']
    #allocation7 [shape = 'u8[196608]{0}', space=vmem, size = 0x30000, scoped, tag = 'input window, operand 6']
    #allocation8 [shape = 'u8[1024]{0}', space=vmem, size = 0x400, scoped, tag = 'input window, operand 11']
    #allocation9 [shape = 'u8[262144]{0}', space=vmem, size = 0x40000, scoped, tag = 'input window, operand 12']
    #allocation10 [shape = 'u8[4096]{0}', space=vmem, size = 0x1000, scoped, tag = 'input window, operand 13']
    #allocation11 [shape = 'u8[262144]{0}', space=vmem, size = 0x40000, scoped, tag = 'input window, operand 14']
    #allocation12 [shape = 'u8[1024]{0}', space=vmem, size = 0x400, scoped, tag = 'input window, operand 15']
    #allocation13 [shape = 'u8[1024]{0}', space=vmem, size = 0x400, scoped, tag = 'input window, operand 17']
    #allocation14 [shape = 'u8[512]{0}', space=vmem, size = 0x400, scoped, tag = 'input window, operand 19, single buffered']
    #allocation15 [shape = 'u8[512]{0}', space=vmem, size = 0x400, scoped, tag = 'input window, operand 21, single buffered']
    #allocation16 [shape = 's32[1]{0}', space=sflag, size = 0x4, scoped, tag = 'scoped memory for bert_classifier_forward.1']
    %27 = vsyncpa [#allocation4], 0
    %28 = vsyncpa [#allocation6], 0
    %29 = vsyncpa [#allocation16], 0
    loop: start=0, step=1, limit=4
    $region2: #{bert_classifier_forward.1} parent=1 // loop_pre_header
      _
    $region3: #{bert_classifier_forward.1} parent=1 // loop_header
      %s31 = sphi 0, %s35
      %p32 = scmp.ge.s32.totalorder %s31, 4
      %s39 = sphi 0, %s39
      %s41 = sphi 0, %s39
      %s42 = sphi 0, %s41
      %s56 = sphi 0, %s42
      %s60 = sphi 0, %s60
      %s62 = sphi 0, %s60
      %s63 = sphi 0, %s62
      %s77 = sphi 0, %s63
      %s81 = sphi 0, %s81
      %s83 = sphi 0, %s81
      %s84 = sphi 0, %s83
      %s98 = sphi 0, %s84
      %s102 = sphi 0, %s102
      %s104 = sphi 0, %s102
      %s105 = sphi 0, %s104
      %s119 = sphi 0, %s105
      %s123 = sphi 0, %s123
      %s125 = sphi 0, %s123
      %s126 = sphi 0, %s125
      %s140 = sphi 0, %s126
      %s144 = sphi 0, %s144
      %s146 = sphi 0, %s144
      %s147 = sphi 0, %s146
      %s161 = sphi 0, %s147
      %s167 = sphi 0, %s169
      %s170 = sphi 0, %s167
      %s171 = sphi 0, %s170
      %s187 = sphi 0, %s171
      %s193 = sphi 0, %s195
      %s196 = sphi 0, %s193
      %s197 = sphi 0, %s196
      %s213 = sphi 0, %s197
      %s219 = sphi 0, %s221
      %s222 = sphi 0, %s219
      %s223 = sphi 0, %s222
      %s239 = sphi 0, %s223
      %s245 = sphi 0, %s247
      %s248 = sphi 0, %s245
      %s249 = sphi 0, %s248
      %s265 = sphi 0, %s249
      %s271 = sphi 0, %s273
      %s274 = sphi 0, %s271
      %s275 = sphi 0, %s274
      %s291 = sphi 0, %s275
      %s297 = sphi 0, %s299
      %s300 = sphi 0, %s297
      %s301 = sphi 0, %s300
      %s317 = sphi 0, %s301
      %s323 = sphi 0, %s325
      %s326 = sphi 0, %s323
      %s327 = sphi 0, %s326
      %s343 = sphi 0, %s327
      %s349 = sphi 0, %s351
      %s352 = sphi 0, %s349
      %s353 = sphi 0, %s352
      %s369 = sphi 0, %s353
      %s375 = sphi 0, %s377
      %s378 = sphi 0, %s375
      %s379 = sphi 0, %s378
      %s395 = sphi 0, %s379
      %s401 = sphi 0, %s403
      %s404 = sphi 0, %s401
      %s405 = sphi 0, %s404
      %s421 = sphi 0, %s405
      %s427 = sphi 0, %s429
      %s430 = sphi 0, %s427
      %s431 = sphi 0, %s430
      %s447 = sphi 0, %s431
      %s453 = sphi 0, %s455
      %s456 = sphi 0, %s453
      %s457 = sphi 0, %s456
      %s473 = sphi 0, %s457
      %s477 = sphi 0, %s477
      %s479 = sphi 0, %s477
      %s480 = sphi 0, %s479
      %s494 = sphi 0, %s480
      %s498 = sphi 0, %s498
      %s500 = sphi 0, %s498
      %s501 = sphi 0, %s500
      %s515 = sphi 0, %s501
      %s519 = sphi 0, %s519
      %s521 = sphi 0, %s519
      %s522 = sphi 0, %s521
      %s536 = sphi 0, %s522
      %s540 = sphi 0, %s540
      %s542 = sphi 0, %s540
      %s543 = sphi 0, %s542
      %s557 = sphi 0, %s543
      %s561 = sphi 0, %s561
      %s563 = sphi 0, %s561
      %s564 = sphi 0, %s563
      %s578 = sphi 0, %s564
    $region4: #{bert_classifier_forward.1} parent=1 // loop_header_branch
      %34 = sbr.rel (%p32) target = $region8
    $region5: #{bert_classifier_forward.1} parent=1 // loop_body
      %s36 = ssub.s32 %s31, 1
      %s37 = ssub.s32 %s31, 2
      %s38 = sadd.s32 %s31, 1
      %s40 = sadd.s32 %s39, 1
      %p43 = scmp.eq.s32.totalorder %s31, 1
      %p44 = scmp.ne.s32.totalorder %s39, %s41
      %p45 = scmp.eq.s32.totalorder %s31, 0
      %p46 = por %p44, %p45
      %p47 = scmp.ne.s32.totalorder %s39, %s41
      %p48 = scmp.eq.s32.totalorder %s36, 1
      %p49 = por %p47, %p48
      %p50 = scmp.ne.s32.totalorder %s41, %s42
      %p51 = scmp.eq.s32.totalorder %s36, 0
      %p52 = por %p50, %p51
      %p53 = scmp.ne.s32.totalorder %s41, %s42
      %p54 = scmp.eq.s32.totalorder %s37, 1
      %p55 = por %p53, %p54
      %p57 = scmp.ne.s32.totalorder %s42, %s56
      %p58 = scmp.eq.s32.totalorder %s37, 0
      %p59 = por %p57, %p58
      %s61 = sadd.s32 %s60, 1
      %p64 = scmp.eq.s32.totalorder %s31, 1
      %p65 = scmp.ne.s32.totalorder %s60, %s62
      %p66 = scmp.eq.s32.totalorder %s31, 0
      %p67 = por %p65, %p66
      %p68 = scmp.ne.s32.totalorder %s60, %s62
      %p69 = scmp.eq.s32.totalorder %s36, 1
      %p70 = por %p68, %p69
      %p71 = scmp.ne.s32.totalorder %s62, %s63
      %p72 = scmp.eq.s32.totalorder %s36, 0
      %p73 = por %p71, %p72
      %p74 = scmp.ne.s32.totalorder %s62, %s63
      %p75 = scmp.eq.s32.totalorder %s37, 1
      %p76 = por %p74, %p75
      %p78 = scmp.ne.s32.totalorder %s63, %s77
      %p79 = scmp.eq.s32.totalorder %s37, 0
      %p80 = por %p78, %p79
      %s82 = sadd.s32 %s81, 1
      %p85 = scmp.eq.s32.totalorder %s31, 1
      %p86 = scmp.ne.s32.totalorder %s81, %s83
      %p87 = scmp.eq.s32.totalorder %s31, 0
      %p88 = por %p86, %p87
      %p89 = scmp.ne.s32.totalorder %s81, %s83
      %p90 = scmp.eq.s32.totalorder %s36, 1
      %p91 = por %p89, %p90
      %p92 = scmp.ne.s32.totalorder %s83, %s84
      %p93 = scmp.eq.s32.totalorder %s36, 0
      %p94 = por %p92, %p93
      %p95 = scmp.ne.s32.totalorder %s83, %s84
      %p96 = scmp.eq.s32.totalorder %s37, 1
      %p97 = por %p95, %p96
      %p99 = scmp.ne.s32.totalorder %s84, %s98
      %p100 = scmp.eq.s32.totalorder %s37, 0
      %p101 = por %p99, %p100
      %s103 = sadd.s32 %s102, 1
      %p106 = scmp.eq.s32.totalorder %s31, 1
      %p107 = scmp.ne.s32.totalorder %s102, %s104
      %p108 = scmp.eq.s32.totalorder %s31, 0
      %p109 = por %p107, %p108
      %p110 = scmp.ne.s32.totalorder %s102, %s104
      %p111 = scmp.eq.s32.totalorder %s36, 1
      %p112 = por %p110, %p111
      %p113 = scmp.ne.s32.totalorder %s104, %s105
      %p114 = scmp.eq.s32.totalorder %s36, 0
      %p115 = por %p113, %p114
      %p116 = scmp.ne.s32.totalorder %s104, %s105
      %p117 = scmp.eq.s32.totalorder %s37, 1
      %p118 = por %p116, %p117
      %p120 = scmp.ne.s32.totalorder %s105, %s119
      %p121 = scmp.eq.s32.totalorder %s37, 0
      %p122 = por %p120, %p121
      %s124 = sadd.s32 %s123, 1
      %p127 = scmp.eq.s32.totalorder %s31, 1
      %p128 = scmp.ne.s32.totalorder %s123, %s125
      %p129 = scmp.eq.s32.totalorder %s31, 0
      %p130 = por %p128, %p129
      %p131 = scmp.ne.s32.totalorder %s123, %s125
      %p132 = scmp.eq.s32.totalorder %s36, 1
      %p133 = por %p131, %p132
      %p134 = scmp.ne.s32.totalorder %s125, %s126
      %p135 = scmp.eq.s32.totalorder %s36, 0
      %p136 = por %p134, %p135
      %p137 = scmp.ne.s32.totalorder %s125, %s126
      %p138 = scmp.eq.s32.totalorder %s37, 1
      %p139 = por %p137, %p138
      %p141 = scmp.ne.s32.totalorder %s126, %s140
      %p142 = scmp.eq.s32.totalorder %s37, 0
      %p143 = por %p141, %p142
      %s145 = sadd.s32 %s144, 1
      %p148 = scmp.eq.s32.totalorder %s31, 1
      %p149 = scmp.ne.s32.totalorder %s144, %s146
      %p150 = scmp.eq.s32.totalorder %s31, 0
      %p151 = por %p149, %p150
      %p152 = scmp.ne.s32.totalorder %s144, %s146
      %p153 = scmp.eq.s32.totalorder %s36, 1
      %p154 = por %p152, %p153
      %p155 = scmp.ne.s32.totalorder %s146, %s147
      %p156 = scmp.eq.s32.totalorder %s36, 0
      %p157 = por %p155, %p156
      %p158 = scmp.ne.s32.totalorder %s146, %s147
      %p159 = scmp.eq.s32.totalorder %s37, 1
      %p160 = por %p158, %p159
      %p162 = scmp.ne.s32.totalorder %s147, %s161
      %p163 = scmp.eq.s32.totalorder %s37, 0
      %p164 = por %p162, %p163
      %s165 = ssub.s32 %s31, %s38
      %p166 = scmp.eq.s32.totalorder %s165, 0
      %s168 = sadd.s32 %s167, 1
      %s169 = scalar_select %p166, %s167, %s168
      %p172 = pneg %p166
      %p173 = scmp.eq.s32.totalorder %s31, 1
      %p174 = por %p172, %p173
      %p175 = scmp.ne.s32.totalorder %s167, %s170
      %p176 = scmp.eq.s32.totalorder %s31, 0
      %p177 = por %p175, %p176
      %p178 = scmp.ne.s32.totalorder %s167, %s170
      %p179 = scmp.eq.s32.totalorder %s36, 1
      %p180 = por %p178, %p179
      %p181 = scmp.ne.s32.totalorder %s170, %s171
      %p182 = scmp.eq.s32.totalorder %s36, 0
      %p183 = por %p181, %p182
      %p184 = scmp.ne.s32.totalorder %s170, %s171
      %p185 = scmp.eq.s32.totalorder %s37, 1
      %p186 = por %p184, %p185
      %p188 = scmp.ne.s32.totalorder %s171, %s187
      %p189 = scmp.eq.s32.totalorder %s37, 0
      %p190 = por %p188, %p189
      %s191 = ssub.s32 %s31, %s38
      %p192 = scmp.eq.s32.totalorder %s191, 0
      %s194 = sadd.s32 %s193, 1
      %s195 = scalar_select %p192, %s193, %s194
      %p198 = pneg %p192
      %p199 = scmp.eq.s32.totalorder %s31, 1
      %p200 = por %p198, %p199
      %p201 = scmp.ne.s32.totalorder %s193, %s196
      %p202 = scmp.eq.s32.totalorder %s31, 0
      %p203 = por %p201, %p202
      %p204 = scmp.ne.s32.totalorder %s193, %s196
      %p205 = scmp.eq.s32.totalorder %s36, 1
      %p206 = por %p204, %p205
      %p207 = scmp.ne.s32.totalorder %s196, %s197
      %p208 = scmp.eq.s32.totalorder %s36, 0
      %p209 = por %p207, %p208
      %p210 = scmp.ne.s32.totalorder %s196, %s197
      %p211 = scmp.eq.s32.totalorder %s37, 1
      %p212 = por %p210, %p211
      %p214 = scmp.ne.s32.totalorder %s197, %s213
      %p215 = scmp.eq.s32.totalorder %s37, 0
      %p216 = por %p214, %p215
      %s217 = ssub.s32 %s31, %s38
      %p218 = scmp.eq.s32.totalorder %s217, 0
      %s220 = sadd.s32 %s219, 1
      %s221 = scalar_select %p218, %s219, %s220
      %p224 = pneg %p218
      %p225 = scmp.eq.s32.totalorder %s31, 1
      %p226 = por %p224, %p225
      %p227 = scmp.ne.s32.totalorder %s219, %s222
      %p228 = scmp.eq.s32.totalorder %s31, 0
      %p229 = por %p227, %p228
      %p230 = scmp.ne.s32.totalorder %s219, %s222
      %p231 = scmp.eq.s32.totalorder %s36, 1
      %p232 = por %p230, %p231
      %p233 = scmp.ne.s32.totalorder %s222, %s223
      %p234 = scmp.eq.s32.totalorder %s36, 0
      %p235 = por %p233, %p234
      %p236 = scmp.ne.s32.totalorder %s222, %s223
      %p237 = scmp.eq.s32.totalorder %s37, 1
      %p238 = por %p236, %p237
      %p240 = scmp.ne.s32.totalorder %s223, %s239
      %p241 = scmp.eq.s32.totalorder %s37, 0
      %p242 = por %p240, %p241
      %s243 = ssub.s32 %s31, %s38
      %p244 = scmp.eq.s32.totalorder %s243, 0
      %s246 = sadd.s32 %s245, 1
      %s247 = scalar_select %p244, %s245, %s246
      %p250 = pneg %p244
      %p251 = scmp.eq.s32.totalorder %s31, 1
      %p252 = por %p250, %p251
      %p253 = scmp.ne.s32.totalorder %s245, %s248
      %p254 = scmp.eq.s32.totalorder %s31, 0
      %p255 = por %p253, %p254
      %p256 = scmp.ne.s32.totalorder %s245, %s248
      %p257 = scmp.eq.s32.totalorder %s36, 1
      %p258 = por %p256, %p257
      %p259 = scmp.ne.s32.totalorder %s248, %s249
      %p260 = scmp.eq.s32.totalorder %s36, 0
      %p261 = por %p259, %p260
      %p262 = scmp.ne.s32.totalorder %s248, %s249
      %p263 = scmp.eq.s32.totalorder %s37, 1
      %p264 = por %p262, %p263
      %p266 = scmp.ne.s32.totalorder %s249, %s265
      %p267 = scmp.eq.s32.totalorder %s37, 0
      %p268 = por %p266, %p267
      %s269 = ssub.s32 %s31, %s38
      %p270 = scmp.eq.s32.totalorder %s269, 0
      %s272 = sadd.s32 %s271, 1
      %s273 = scalar_select %p270, %s271, %s272
      %p276 = pneg %p270
      %p277 = scmp.eq.s32.totalorder %s31, 1
      %p278 = por %p276, %p277
      %p279 = scmp.ne.s32.totalorder %s271, %s274
      %p280 = scmp.eq.s32.totalorder %s31, 0
      %p281 = por %p279, %p280
      %p282 = scmp.ne.s32.totalorder %s271, %s274
      %p283 = scmp.eq.s32.totalorder %s36, 1
      %p284 = por %p282, %p283
      %p285 = scmp.ne.s32.totalorder %s274, %s275
      %p286 = scmp.eq.s32.totalorder %s36, 0
      %p287 = por %p285, %p286
      %p288 = scmp.ne.s32.totalorder %s274, %s275
      %p289 = scmp.eq.s32.totalorder %s37, 1
      %p290 = por %p288, %p289
      %p292 = scmp.ne.s32.totalorder %s275, %s291
      %p293 = scmp.eq.s32.totalorder %s37, 0
      %p294 = por %p292, %p293
      %s295 = ssub.s32 %s31, %s38
      %p296 = scmp.eq.s32.totalorder %s295, 0
      %s298 = sadd.s32 %s297, 1
      %s299 = scalar_select %p296, %s297, %s298
      %p302 = pneg %p296
      %p303 = scmp.eq.s32.totalorder %s31, 1
      %p304 = por %p302, %p303
      %p305 = scmp.ne.s32.totalorder %s297, %s300
      %p306 = scmp.eq.s32.totalorder %s31, 0
      %p307 = por %p305, %p306
      %p308 = scmp.ne.s32.totalorder %s297, %s300
      %p309 = scmp.eq.s32.totalorder %s36, 1
      %p310 = por %p308, %p309
      %p311 = scmp.ne.s32.totalorder %s300, %s301
      %p312 = scmp.eq.s32.totalorder %s36, 0
      %p313 = por %p311, %p312
      %p314 = scmp.ne.s32.totalorder %s300, %s301
      %p315 = scmp.eq.s32.totalorder %s37, 1
      %p316 = por %p314, %p315
      %p318 = scmp.ne.s32.totalorder %s301, %s317
      %p319 = scmp.eq.s32.totalorder %s37, 0
      %p320 = por %p318, %p319
      %s321 = ssub.s32 %s31, %s38
      %p322 = scmp.eq.s32.totalorder %s321, 0
      %s324 = sadd.s32 %s323, 1
      %s325 = scalar_select %p322, %s323, %s324
      %p328 = pneg %p322
      %p329 = scmp.eq.s32.totalorder %s31, 1
      %p330 = por %p328, %p329
      %p331 = scmp.ne.s32.totalorder %s323, %s326
      %p332 = scmp.eq.s32.totalorder %s31, 0
      %p333 = por %p331, %p332
      %p334 = scmp.ne.s32.totalorder %s323, %s326
      %p335 = scmp.eq.s32.totalorder %s36, 1
      %p336 = por %p334, %p335
      %p337 = scmp.ne.s32.totalorder %s326, %s327
      %p338 = scmp.eq.s32.totalorder %s36, 0
      %p339 = por %p337, %p338
      %p340 = scmp.ne.s32.totalorder %s326, %s327
      %p341 = scmp.eq.s32.totalorder %s37, 1
      %p342 = por %p340, %p341
      %p344 = scmp.ne.s32.totalorder %s327, %s343
      %p345 = scmp.eq.s32.totalorder %s37, 0
      %p346 = por %p344, %p345
      %s347 = ssub.s32 %s31, %s38
      %p348 = scmp.eq.s32.totalorder %s347, 0
      %s350 = sadd.s32 %s349, 1
      %s351 = scalar_select %p348, %s349, %s350
      %p354 = pneg %p348
      %p355 = scmp.eq.s32.totalorder %s31, 1
      %p356 = por %p354, %p355
      %p357 = scmp.ne.s32.totalorder %s349, %s352
      %p358 = scmp.eq.s32.totalorder %s31, 0
      %p359 = por %p357, %p358
      %p360 = scmp.ne.s32.totalorder %s349, %s352
      %p361 = scmp.eq.s32.totalorder %s36, 1
      %p362 = por %p360, %p361
      %p363 = scmp.ne.s32.totalorder %s352, %s353
      %p364 = scmp.eq.s32.totalorder %s36, 0
      %p365 = por %p363, %p364
      %p366 = scmp.ne.s32.totalorder %s352, %s353
      %p367 = scmp.eq.s32.totalorder %s37, 1
      %p368 = por %p366, %p367
      %p370 = scmp.ne.s32.totalorder %s353, %s369
      %p371 = scmp.eq.s32.totalorder %s37, 0
      %p372 = por %p370, %p371
      %s373 = ssub.s32 %s31, %s38
      %p374 = scmp.eq.s32.totalorder %s373, 0
      %s376 = sadd.s32 %s375, 1
      %s377 = scalar_select %p374, %s375, %s376
      %p380 = pneg %p374
      %p381 = scmp.eq.s32.totalorder %s31, 1
      %p382 = por %p380, %p381
      %p383 = scmp.ne.s32.totalorder %s375, %s378
      %p384 = scmp.eq.s32.totalorder %s31, 0
      %p385 = por %p383, %p384
      %p386 = scmp.ne.s32.totalorder %s375, %s378
      %p387 = scmp.eq.s32.totalorder %s36, 1
      %p388 = por %p386, %p387
      %p389 = scmp.ne.s32.totalorder %s378, %s379
      %p390 = scmp.eq.s32.totalorder %s36, 0
      %p391 = por %p389, %p390
      %p392 = scmp.ne.s32.totalorder %s378, %s379
      %p393 = scmp.eq.s32.totalorder %s37, 1
      %p394 = por %p392, %p393
      %p396 = scmp.ne.s32.totalorder %s379, %s395
      %p397 = scmp.eq.s32.totalorder %s37, 0
      %p398 = por %p396, %p397
      %s399 = ssub.s32 %s31, %s38
      %p400 = scmp.eq.s32.totalorder %s399, 0
      %s402 = sadd.s32 %s401, 1
      %s403 = scalar_select %p400, %s401, %s402
      %p406 = pneg %p400
      %p407 = scmp.eq.s32.totalorder %s31, 1
      %p408 = por %p406, %p407
      %p409 = scmp.ne.s32.totalorder %s401, %s404
      %p410 = scmp.eq.s32.totalorder %s31, 0
      %p411 = por %p409, %p410
      %p412 = scmp.ne.s32.totalorder %s401, %s404
      %p413 = scmp.eq.s32.totalorder %s36, 1
      %p414 = por %p412, %p413
      %p415 = scmp.ne.s32.totalorder %s404, %s405
      %p416 = scmp.eq.s32.totalorder %s36, 0
      %p417 = por %p415, %p416
      %p418 = scmp.ne.s32.totalorder %s404, %s405
      %p419 = scmp.eq.s32.totalorder %s37, 1
      %p420 = por %p418, %p419
      %p422 = scmp.ne.s32.totalorder %s405, %s421
      %p423 = scmp.eq.s32.totalorder %s37, 0
      %p424 = por %p422, %p423
      %s425 = ssub.s32 %s31, %s38
      %p426 = scmp.eq.s32.totalorder %s425, 0
      %s428 = sadd.s32 %s427, 1
      %s429 = scalar_select %p426, %s427, %s428
      %p432 = pneg %p426
      %p433 = scmp.eq.s32.totalorder %s31, 1
      %p434 = por %p432, %p433
      %p435 = scmp.ne.s32.totalorder %s427, %s430
      %p436 = scmp.eq.s32.totalorder %s31, 0
      %p437 = por %p435, %p436
      %p438 = scmp.ne.s32.totalorder %s427, %s430
      %p439 = scmp.eq.s32.totalorder %s36, 1
      %p440 = por %p438, %p439
      %p441 = scmp.ne.s32.totalorder %s430, %s431
      %p442 = scmp.eq.s32.totalorder %s36, 0
      %p443 = por %p441, %p442
      %p444 = scmp.ne.s32.totalorder %s430, %s431
      %p445 = scmp.eq.s32.totalorder %s37, 1
      %p446 = por %p444, %p445
      %p448 = scmp.ne.s32.totalorder %s431, %s447
      %p449 = scmp.eq.s32.totalorder %s37, 0
      %p450 = por %p448, %p449
      %s451 = ssub.s32 %s31, %s38
      %p452 = scmp.eq.s32.totalorder %s451, 0
      %s454 = sadd.s32 %s453, 1
      %s455 = scalar_select %p452, %s453, %s454
      %p458 = pneg %p452
      %p459 = scmp.eq.s32.totalorder %s31, 1
      %p460 = por %p458, %p459
      %p461 = scmp.ne.s32.totalorder %s453, %s456
      %p462 = scmp.eq.s32.totalorder %s31, 0
      %p463 = por %p461, %p462
      %p464 = scmp.ne.s32.totalorder %s453, %s456
      %p465 = scmp.eq.s32.totalorder %s36, 1
      %p466 = por %p464, %p465
      %p467 = scmp.ne.s32.totalorder %s456, %s457
      %p468 = scmp.eq.s32.totalorder %s36, 0
      %p469 = por %p467, %p468
      %p470 = scmp.ne.s32.totalorder %s456, %s457
      %p471 = scmp.eq.s32.totalorder %s37, 1
      %p472 = por %p470, %p471
      %p474 = scmp.ne.s32.totalorder %s457, %s473
      %p475 = scmp.eq.s32.totalorder %s37, 0
      %p476 = por %p474, %p475
      %s478 = sadd.s32 %s477, 1
      %p481 = scmp.eq.s32.totalorder %s31, 1
      %p482 = scmp.ne.s32.totalorder %s477, %s479
      %p483 = scmp.eq.s32.totalorder %s31, 0
      %p484 = por %p482, %p483
      %p485 = scmp.ne.s32.totalorder %s477, %s479
      %p486 = scmp.eq.s32.totalorder %s36, 1
      %p487 = por %p485, %p486
      %p488 = scmp.ne.s32.totalorder %s479, %s480
      %p489 = scmp.eq.s32.totalorder %s36, 0
      %p490 = por %p488, %p489
      %p491 = scmp.ne.s32.totalorder %s479, %s480
      %p492 = scmp.eq.s32.totalorder %s37, 1
      %p493 = por %p491, %p492
      %p495 = scmp.ne.s32.totalorder %s480, %s494
      %p496 = scmp.eq.s32.totalorder %s37, 0
      %p497 = por %p495, %p496
      %s499 = sadd.s32 %s498, 1
      %p502 = scmp.eq.s32.totalorder %s31, 1
      %p503 = scmp.ne.s32.totalorder %s498, %s500
      %p504 = scmp.eq.s32.totalorder %s31, 0
      %p505 = por %p503, %p504
      %p506 = scmp.ne.s32.totalorder %s498, %s500
      %p507 = scmp.eq.s32.totalorder %s36, 1
      %p508 = por %p506, %p507
      %p509 = scmp.ne.s32.totalorder %s500, %s501
      %p510 = scmp.eq.s32.totalorder %s36, 0
      %p511 = por %p509, %p510
      %p512 = scmp.ne.s32.totalorder %s500, %s501
      %p513 = scmp.eq.s32.totalorder %s37, 1
      %p514 = por %p512, %p513
      %p516 = scmp.ne.s32.totalorder %s501, %s515
      %p517 = scmp.eq.s32.totalorder %s37, 0
      %p518 = por %p516, %p517
      %s520 = sadd.s32 %s519, 1
      %p523 = scmp.eq.s32.totalorder %s31, 1
      %p524 = scmp.ne.s32.totalorder %s519, %s521
      %p525 = scmp.eq.s32.totalorder %s31, 0
      %p526 = por %p524, %p525
      %p527 = scmp.ne.s32.totalorder %s519, %s521
      %p528 = scmp.eq.s32.totalorder %s36, 1
      %p529 = por %p527, %p528
      %p530 = scmp.ne.s32.totalorder %s521, %s522
      %p531 = scmp.eq.s32.totalorder %s36, 0
      %p532 = por %p530, %p531
      %p533 = scmp.ne.s32.totalorder %s521, %s522
      %p534 = scmp.eq.s32.totalorder %s37, 1
      %p535 = por %p533, %p534
      %p537 = scmp.ne.s32.totalorder %s522, %s536
      %p538 = scmp.eq.s32.totalorder %s37, 0
      %p539 = por %p537, %p538
      %s541 = sadd.s32 %s540, 1
      %p544 = scmp.eq.s32.totalorder %s31, 1
      %p545 = scmp.ne.s32.totalorder %s540, %s542
      %p546 = scmp.eq.s32.totalorder %s31, 0
      %p547 = por %p545, %p546
      %p548 = scmp.ne.s32.totalorder %s540, %s542
      %p549 = scmp.eq.s32.totalorder %s36, 1
      %p550 = por %p548, %p549
      %p551 = scmp.ne.s32.totalorder %s542, %s543
      %p552 = scmp.eq.s32.totalorder %s36, 0
      %p553 = por %p551, %p552
      %p554 = scmp.ne.s32.totalorder %s542, %s543
      %p555 = scmp.eq.s32.totalorder %s37, 1
      %p556 = por %p554, %p555
      %p558 = scmp.ne.s32.totalorder %s543, %s557
      %p559 = scmp.eq.s32.totalorder %s37, 0
      %p560 = por %p558, %p559
      %s562 = sadd.s32 %s561, 1
      %p565 = scmp.eq.s32.totalorder %s31, 1
      %p566 = scmp.ne.s32.totalorder %s561, %s563
      %p567 = scmp.eq.s32.totalorder %s31, 0
      %p568 = por %p566, %p567
      %p569 = scmp.ne.s32.totalorder %s561, %s563
      %p570 = scmp.eq.s32.totalorder %s36, 1
      %p571 = por %p569, %p570
      %p572 = scmp.ne.s32.totalorder %s563, %s564
      %p573 = scmp.eq.s32.totalorder %s36, 0
      %p574 = por %p572, %p573
      %p575 = scmp.ne.s32.totalorder %s563, %s564
      %p576 = scmp.eq.s32.totalorder %s37, 1
      %p577 = por %p575, %p576
      %p579 = scmp.ne.s32.totalorder %s564, %s578
      %p580 = scmp.eq.s32.totalorder %s37, 0
      %p581 = por %p579, %p580
      %p582 = scmp.le.s32.totalorder 1, %s31
      %p583 = scmp.lt.s32.totalorder %s31, 3
      %p584 = pnand %p582, %p583
      %p585 = pneg %p584
      // Predicated region
      $region9: #{bert_classifier_forward.1} parent=5 // pred_check
        _
      $region10: #{bert_classifier_forward.1} parent=5 // pred_check_branch
        %587 = sbr.rel (%p584) target = $region12
      $region11: #{bert_classifier_forward.1} parent=5 // pred_region
        %s588 = ssub.s32 %s31, 1
        // Predicated region
        $region13: #{bert_classifier_forward.1} parent=11 // pred_check
          %p589 = pneg %p52
        $region14: #{bert_classifier_forward.1} parent=11 // pred_check_branch
          %591 = sbr.rel (%p589) target = $region16
        $region15: #{bert_classifier_forward.1} parent=11 // pred_region
          _
        $region16: #{bert_classifier_forward.1} parent=11 // pred_fallthru
          _
        // Predicated region
        $region17: #{bert_classifier_forward.1} parent=11 // pred_check
          %p592 = pneg %p73
        $region18: #{bert_classifier_forward.1} parent=11 // pred_check_branch
          %594 = sbr.rel (%p592) target = $region20
        $region19: #{bert_classifier_forward.1} parent=11 // pred_region
          _
        $region20: #{bert_classifier_forward.1} parent=11 // pred_fallthru
          _
        // Predicated region
        $region21: #{bert_classifier_forward.1} parent=11 // pred_check
          %p595 = pneg %p94
        $region22: #{bert_classifier_forward.1} parent=11 // pred_check_branch
          %597 = sbr.rel (%p595) target = $region24
        $region23: #{bert_classifier_forward.1} parent=11 // pred_region
          _
        $region24: #{bert_classifier_forward.1} parent=11 // pred_fallthru
          _
        // Predicated region
        $region25: #{bert_classifier_forward.1} parent=11 // pred_check
          %p598 = pneg %p115
        $region26: #{bert_classifier_forward.1} parent=11 // pred_check_branch
          %600 = sbr.rel (%p598) target = $region28
        $region27: #{bert_classifier_forward.1} parent=11 // pred_region
          _
        $region28: #{bert_classifier_forward.1} parent=11 // pred_fallthru
          _
        // Predicated region
        $region29: #{bert_classifier_forward.1} parent=11 // pred_check
          %p601 = pneg %p136
        $region30: #{bert_classifier_forward.1} parent=11 // pred_check_branch
          %603 = sbr.rel (%p601) target = $region32
        $region31: #{bert_classifier_forward.1} parent=11 // pred_region
          %s605 = ssub.s32 16, 16
          %606 = vsyncadd [#allocation4], %s605
          %s608 = sshll.u32 [#allocation3], 4
          %s609 = int_to_ptr.vmem [resolvable:$true] %s608
          %611 = dma.hbm_to_vmem [thread:$0]  %s4, 16, %s609, [#allocation4]
        $region32: #{bert_classifier_forward.1} parent=11 // pred_fallthru
          _
        // Predicated region
        $region33: #{bert_classifier_forward.1} parent=11 // pred_check
          %p612 = pneg %p157
        $region34: #{bert_classifier_forward.1} parent=11 // pred_check_branch
          %614 = sbr.rel (%p612) target = $region36
        $region35: #{bert_classifier_forward.1} parent=11 // pred_region
          %s616 = ssub.s32 16, 16
          %617 = vsyncadd [#allocation6], %s616
          %s619 = sshll.u32 [#allocation5], 4
          %s620 = int_to_ptr.vmem [resolvable:$true] %s619
          %622 = dma.hbm_to_vmem [thread:$0]  %s5, 16, %s620, [#allocation6]
        $region36: #{bert_classifier_forward.1} parent=11 // pred_fallthru
          _
        // Predicated region
        $region37: #{bert_classifier_forward.1} parent=11 // pred_check
          %p623 = pneg %p490
        $region38: #{bert_classifier_forward.1} parent=11 // pred_check_branch
          %625 = sbr.rel (%p623) target = $region40
        $region39: #{bert_classifier_forward.1} parent=11 // pred_region
          _
        $region40: #{bert_classifier_forward.1} parent=11 // pred_fallthru
          _
        // Predicated region
        $region41: #{bert_classifier_forward.1} parent=11 // pred_check
          %p626 = pneg %p511
        $region42: #{bert_classifier_forward.1} parent=11 // pred_check_branch
          %628 = sbr.rel (%p626) target = $region44
        $region43: #{bert_classifier_forward.1} parent=11 // pred_region
          %s630 = ssub.s32 16, 16
          %631 = vsyncadd [#allocation6], %s630
          %s633 = sshll.u32 [#allocation14], 4
          %s634 = int_to_ptr.vmem [resolvable:$true] %s633
          %636 = dma.hbm_to_vmem [thread:$0]  %s19, 16, %s634, [#allocation6]
        $region44: #{bert_classifier_forward.1} parent=11 // pred_fallthru
          _
        // Predicated region
        $region45: #{bert_classifier_forward.1} parent=11 // pred_check
          %p637 = pneg %p532
        $region46: #{bert_classifier_forward.1} parent=11 // pred_check_branch
          %639 = sbr.rel (%p637) target = $region48
        $region47: #{bert_classifier_forward.1} parent=11 // pred_region
          _
        $region48: #{bert_classifier_forward.1} parent=11 // pred_fallthru
          _
        // Predicated region
        $region49: #{bert_classifier_forward.1} parent=11 // pred_check
          %p640 = pneg %p553
        $region50: #{bert_classifier_forward.1} parent=11 // pred_check_branch
          %642 = sbr.rel (%p640) target = $region52
        $region51: #{bert_classifier_forward.1} parent=11 // pred_region
          %s644 = ssub.s32 16, 16
          %645 = vsyncadd [#allocation16], %s644
          %s647 = sshll.u32 [#allocation15], 4
          %s648 = int_to_ptr.vmem [resolvable:$true] %s647
          %650 = dma.hbm_to_vmem [thread:$0]  %s21, 16, %s648, [#allocation16]
        $region52: #{bert_classifier_forward.1} parent=11 // pred_fallthru
          _
      $region12: #{bert_classifier_forward.1} parent=5 // pred_fallthru
        _
      %p651 = scmp.lt.s32.totalorder %s31, 2
      // Predicated region
      $region53: #{bert_classifier_forward.1} parent=5 // pred_check
        %p652 = pneg %p651
      $region54: #{bert_classifier_forward.1} parent=5 // pred_check_branch
        %654 = sbr.rel (%p652) target = $region56
      $region55: #{bert_classifier_forward.1} parent=5 // pred_region
        // Predicated region
        $region57: #{bert_classifier_forward.1} parent=55 // pred_check
          %p655 = pneg %p177
        $region58: #{bert_classifier_forward.1} parent=55 // pred_check_branch
          %657 = sbr.rel (%p655) target = $region60
        $region59: #{bert_classifier_forward.1} parent=55 // pred_region
          %s658 = sand.u32 %s31, 1
          %s659 = scalar_lea.sflag [#allocation4], %s658
          %s660 = sand.u32 %s167, 1
          %s661 = smul.addr %s660, 192
          %s662 = scalar_lea.vmem [#allocation7], %s661
          %s664 = ssub.s32 3072, 3072
          %665 = vsyncadd %s659, %s664
          %s666 = smul.addr %s31, 48
          %s667 = smul.addr %s666, 64
          %s668 = scalar_lea.hbm %s6, %s667
          %s669 = sshll.u32 %s662, 4
          %s670 = int_to_ptr.vmem [resolvable:$true] %s669
          %675 = dma.hbm_to_vmem [thread:$0]  %s668, 3072, %s670, %s659, 192, 192, 12
        $region60: #{bert_classifier_forward.1} parent=55 // pred_fallthru
          _
        // Predicated region
        $region61: #{bert_classifier_forward.1} parent=55 // pred_check
          %p676 = pneg %p203
        $region62: #{bert_classifier_forward.1} parent=55 // pred_check_branch
          %678 = sbr.rel (%p676) target = $region64
        $region63: #{bert_classifier_forward.1} parent=55 // pred_region
          %p679 = scmp.lt.s32.totalorder %s31, 1
          %s680 = scalar_select %p679, %s31, 1
          %s681 = smul.addr %s680, 3
          %s682 = scalar_lea.vmem %s7, %s681
        $region64: #{bert_classifier_forward.1} parent=55 // pred_fallthru
          _
        // Predicated region
        $region65: #{bert_classifier_forward.1} parent=55 // pred_check
          %p683 = pneg %p229
        $region66: #{bert_classifier_forward.1} parent=55 // pred_check_branch
          %685 = sbr.rel (%p683) target = $region68
        $region67: #{bert_classifier_forward.1} parent=55 // pred_region
          %p686 = scmp.lt.s32.totalorder %s31, 1
          %s687 = scalar_select %p686, %s31, 1
          %s688 = smul.addr %s687, 16
          %s689 = smul.addr %s688, 4
          %s690 = scalar_lea.vmem %s8, %s689
        $region68: #{bert_classifier_forward.1} parent=55 // pred_fallthru
          _
        // Predicated region
        $region69: #{bert_classifier_forward.1} parent=55 // pred_check
          %p691 = pneg %p255
        $region70: #{bert_classifier_forward.1} parent=55 // pred_check_branch
          %693 = sbr.rel (%p691) target = $region72
        $region71: #{bert_classifier_forward.1} parent=55 // pred_region
          %p694 = scmp.lt.s32.totalorder %s31, 1
          %s695 = scalar_select %p694, %s31, 1
          %s696 = scalar_lea.vmem %s9, %s695
        $region72: #{bert_classifier_forward.1} parent=55 // pred_fallthru
          _
        // Predicated region
        $region73: #{bert_classifier_forward.1} parent=55 // pred_check
          %p697 = pneg %p281
        $region74: #{bert_classifier_forward.1} parent=55 // pred_check_branch
          %699 = sbr.rel (%p697) target = $region76
        $region75: #{bert_classifier_forward.1} parent=55 // pred_region
          %p700 = scmp.lt.s32.totalorder %s31, 1
          %s701 = scalar_select %p700, %s31, 1
          %s702 = scalar_lea.vmem %s10, %s701
        $region76: #{bert_classifier_forward.1} parent=55 // pred_fallthru
          _
        // Predicated region
        $region77: #{bert_classifier_forward.1} parent=55 // pred_check
          %p703 = pneg %p307
        $region78: #{bert_classifier_forward.1} parent=55 // pred_check_branch
          %705 = sbr.rel (%p703) target = $region80
        $region79: #{bert_classifier_forward.1} parent=55 // pred_region
          %s706 = sand.u32 %s31, 1
          %s707 = scalar_lea.sflag [#allocation4], %s706
          %s708 = sand.u32 %s297, 1
          %s709 = scalar_lea.vmem [#allocation8], %s708
          %s711 = ssub.s32 16, 16
          %712 = vsyncadd %s707, %s711
          %s713 = smul.addr %s31, 16
          %s714 = scalar_lea.hbm %s11, %s713
          %s716 = sshll.u32 %s709, 4
          %s717 = int_to_ptr.vmem [resolvable:$true] %s716
          %719 = dma.hbm_to_vmem [thread:$0]  %s714, 16, %s717, %s707
        $region80: #{bert_classifier_forward.1} parent=55 // pred_fallthru
          _
        // Predicated region
        $region81: #{bert_classifier_forward.1} parent=55 // pred_check
          %p720 = pneg %p333
        $region82: #{bert_classifier_forward.1} parent=55 // pred_check_branch
          %722 = sbr.rel (%p720) target = $region84
        $region83: #{bert_classifier_forward.1} parent=55 // pred_region
          %s723 = sand.u32 %s31, 1
          %s724 = scalar_lea.sflag [#allocation4], %s723
          %s725 = sand.u32 %s323, 1
          %s726 = smul.addr %s725, 256
          %s727 = scalar_lea.vmem [#allocation9], %s726
          %s729 = ssub.s32 4096, 4096
          %730 = vsyncadd %s724, %s729
          %s731 = smul.addr %s31, 64
          %s732 = smul.addr %s731, 64
          %s733 = scalar_lea.hbm %s12, %s732
          %s734 = sshll.u32 %s727, 4
          %s735 = int_to_ptr.vmem [resolvable:$true] %s734
          %740 = dma.hbm_to_vmem [thread:$0]  %s733, 4096, %s735, %s724, 256, 256, 16
        $region84: #{bert_classifier_forward.1} parent=55 // pred_fallthru
          _
        // Predicated region
        $region85: #{bert_classifier_forward.1} parent=55 // pred_check
          %p741 = pneg %p359
        $region86: #{bert_classifier_forward.1} parent=55 // pred_check_branch
          %743 = sbr.rel (%p741) target = $region88
        $region87: #{bert_classifier_forward.1} parent=55 // pred_region
          %s744 = sand.u32 %s31, 1
          %s745 = scalar_lea.sflag [#allocation4], %s744
          %s746 = sand.u32 %s349, 1
          %s747 = smul.addr %s746, 4
          %s748 = scalar_lea.vmem [#allocation10], %s747
          %s750 = ssub.s32 64, 64
          %751 = vsyncadd %s745, %s750
          %s752 = smul.addr %s31, 4
          %s753 = smul.addr %s752, 16
          %s754 = scalar_lea.hbm %s13, %s753
          %s756 = sshll.u32 %s748, 4
          %s757 = int_to_ptr.vmem [resolvable:$true] %s756
          %759 = dma.hbm_to_vmem [thread:$0]  %s754, 64, %s757, %s745
        $region88: #{bert_classifier_forward.1} parent=55 // pred_fallthru
          _
        // Predicated region
        $region89: #{bert_classifier_forward.1} parent=55 // pred_check
          %p760 = pneg %p385
        $region90: #{bert_classifier_forward.1} parent=55 // pred_check_branch
          %762 = sbr.rel (%p760) target = $region92
        $region91: #{bert_classifier_forward.1} parent=55 // pred_region
          %s763 = sand.u32 %s31, 1
          %s764 = scalar_lea.sflag [#allocation4], %s763
          %s765 = sand.u32 %s375, 1
          %s766 = smul.addr %s765, 256
          %s767 = scalar_lea.vmem [#allocation11], %s766
          %s769 = ssub.s32 4096, 4096
          %770 = vsyncadd %s764, %s769
          %s771 = smul.addr %s31, 64
          %s772 = smul.addr %s771, 64
          %s773 = scalar_lea.hbm %s14, %s772
          %s774 = sshll.u32 %s767, 4
          %s775 = int_to_ptr.vmem [resolvable:$true] %s774
          %780 = dma.hbm_to_vmem [thread:$0]  %s773, 4096, %s775, %s764, 64, 64, 4
        $region92: #{bert_classifier_forward.1} parent=55 // pred_fallthru
          _
        // Predicated region
        $region93: #{bert_classifier_forward.1} parent=55 // pred_check
          %p781 = pneg %p411
        $region94: #{bert_classifier_forward.1} parent=55 // pred_check_branch
          %783 = sbr.rel (%p781) target = $region96
        $region95: #{bert_classifier_forward.1} parent=55 // pred_region
          %s784 = sand.u32 %s31, 1
          %s785 = scalar_lea.sflag [#allocation4], %s784
          %s786 = sand.u32 %s401, 1
          %s787 = scalar_lea.vmem [#allocation12], %s786
          %s789 = ssub.s32 16, 16
          %790 = vsyncadd %s785, %s789
          %s791 = smul.addr %s31, 16
          %s792 = scalar_lea.hbm %s15, %s791
          %s794 = sshll.u32 %s787, 4
          %s795 = int_to_ptr.vmem [resolvable:$true] %s794
          %797 = dma.hbm_to_vmem [thread:$0]  %s792, 16, %s795, %s785
        $region96: #{bert_classifier_forward.1} parent=55 // pred_fallthru
          _
        // Predicated region
        $region97: #{bert_classifier_forward.1} parent=55 // pred_check
          %p798 = pneg %p437
        $region98: #{bert_classifier_forward.1} parent=55 // pred_check_branch
          %800 = sbr.rel (%p798) target = $region100
        $region99: #{bert_classifier_forward.1} parent=55 // pred_region
          %p801 = scmp.lt.s32.totalorder %s31, 1
          %s802 = scalar_select %p801, %s31, 1
          %s803 = scalar_lea.vmem %s16, %s802
        $region100: #{bert_classifier_forward.1} parent=55 // pred_fallthru
          _
        // Predicated region
        $region101: #{bert_classifier_forward.1} parent=55 // pred_check
          %p804 = pneg %p463
        $region102: #{bert_classifier_forward.1} parent=55 // pred_check_branch
          %806 = sbr.rel (%p804) target = $region104
        $region103: #{bert_classifier_forward.1} parent=55 // pred_region
          %s807 = sand.u32 %s31, 1
          %s808 = scalar_lea.sflag [#allocation4], %s807
          %s809 = sand.u32 %s453, 1
          %s810 = scalar_lea.vmem [#allocation13], %s809
          %s812 = ssub.s32 16, 16
          %813 = vsyncadd %s808, %s812
          %s814 = smul.addr %s31, 16
          %s815 = scalar_lea.hbm %s17, %s814
          %s817 = sshll.u32 %s810, 4
          %s818 = int_to_ptr.vmem [resolvable:$true] %s817
          %820 = dma.hbm_to_vmem [thread:$0]  %s815, 16, %s818, %s808
        $region104: #{bert_classifier_forward.1} parent=55 // pred_fallthru
          _
      $region56: #{bert_classifier_forward.1} parent=5 // pred_fallthru
        _
      %p821 = scmp.le.s32.totalorder 1, %s31
      %p822 = scmp.lt.s32.totalorder %s31, 3
      %p823 = pnand %p821, %p822
      %p824 = pneg %p823
      // Predicated region
      $region105: #{bert_classifier_forward.1} parent=5 // pred_check
        _
      $region106: #{bert_classifier_forward.1} parent=5 // pred_check_branch
        %826 = sbr.rel (%p823) target = $region108
      $region107: #{bert_classifier_forward.1} parent=5 // pred_region
        %s827 = ssub.s32 %s31, 1
        // Predicated region
        $region109: #{bert_classifier_forward.1} parent=107 // pred_check
          %p828 = pneg %p136
        $region110: #{bert_classifier_forward.1} parent=107 // pred_check_branch
          %830 = sbr.rel (%p828) target = $region112
        $region111: #{bert_classifier_forward.1} parent=107 // pred_region
          %831 = dma.done [#allocation4], 16
        $region112: #{bert_classifier_forward.1} parent=107 // pred_fallthru
          _
        // Predicated region
        $region113: #{bert_classifier_forward.1} parent=107 // pred_check
          %p832 = pneg %p157
        $region114: #{bert_classifier_forward.1} parent=107 // pred_check_branch
          %834 = sbr.rel (%p832) target = $region116
        $region115: #{bert_classifier_forward.1} parent=107 // pred_region
          %835 = dma.done [#allocation6], 16
        $region116: #{bert_classifier_forward.1} parent=107 // pred_fallthru
          _
        %s836 = sand.u32 %s36, 1
        %s837 = scalar_lea.sflag [#allocation4], %s836
        %s838 = sand.u32 %s170, 1
        %s839 = smul.addr %s838, 192
        %s840 = scalar_lea.vmem [#allocation7], %s839
        // Predicated region
        $region117: #{bert_classifier_forward.1} parent=107 // pred_check
          %p841 = pneg %p183
        $region118: #{bert_classifier_forward.1} parent=107 // pred_check_branch
          %843 = sbr.rel (%p841) target = $region120
        $region119: #{bert_classifier_forward.1} parent=107 // pred_region
          %844 = dma.done %s837, 3072
        $region120: #{bert_classifier_forward.1} parent=107 // pred_fallthru
          _
        %s845 = sand.u32 %s36, 1
        %s846 = scalar_lea.sflag [#allocation4], %s845
        %s847 = sand.u32 %s300, 1
        %s848 = scalar_lea.vmem [#allocation8], %s847
        // Predicated region
        $region121: #{bert_classifier_forward.1} parent=107 // pred_check
          %p849 = pneg %p313
        $region122: #{bert_classifier_forward.1} parent=107 // pred_check_branch
          %851 = sbr.rel (%p849) target = $region124
        $region123: #{bert_classifier_forward.1} parent=107 // pred_region
          %852 = dma.done %s846, 16
        $region124: #{bert_classifier_forward.1} parent=107 // pred_fallthru
          _
        %s853 = sand.u32 %s36, 1
        %s854 = scalar_lea.sflag [#allocation4], %s853
        %s855 = sand.u32 %s326, 1
        %s856 = smul.addr %s855, 256
        %s857 = scalar_lea.vmem [#allocation9], %s856
        // Predicated region
        $region125: #{bert_classifier_forward.1} parent=107 // pred_check
          %p858 = pneg %p339
        $region126: #{bert_classifier_forward.1} parent=107 // pred_check_branch
          %860 = sbr.rel (%p858) target = $region128
        $region127: #{bert_classifier_forward.1} parent=107 // pred_region
          %861 = dma.done %s854, 4096
        $region128: #{bert_classifier_forward.1} parent=107 // pred_fallthru
          _
        %s862 = sand.u32 %s36, 1
        %s863 = scalar_lea.sflag [#allocation4], %s862
        %s864 = sand.u32 %s352, 1
        %s865 = smul.addr %s864, 4
        %s866 = scalar_lea.vmem [#allocation10], %s865
        // Predicated region
        $region129: #{bert_classifier_forward.1} parent=107 // pred_check
          %p867 = pneg %p365
        $region130: #{bert_classifier_forward.1} parent=107 // pred_check_branch
          %869 = sbr.rel (%p867) target = $region132
        $region131: #{bert_classifier_forward.1} parent=107 // pred_region
          %870 = dma.done %s863, 64
        $region132: #{bert_classifier_forward.1} parent=107 // pred_fallthru
          _
        %s871 = sand.u32 %s36, 1
        %s872 = scalar_lea.sflag [#allocation4], %s871
        %s873 = sand.u32 %s378, 1
        %s874 = smul.addr %s873, 256
        %s875 = scalar_lea.vmem [#allocation11], %s874
        // Predicated region
        $region133: #{bert_classifier_forward.1} parent=107 // pred_check
          %p876 = pneg %p391
        $region134: #{bert_classifier_forward.1} parent=107 // pred_check_branch
          %878 = sbr.rel (%p876) target = $region136
        $region135: #{bert_classifier_forward.1} parent=107 // pred_region
          %879 = dma.done %s872, 4096
        $region136: #{bert_classifier_forward.1} parent=107 // pred_fallthru
          _
        %s880 = sand.u32 %s36, 1
        %s881 = scalar_lea.sflag [#allocation4], %s880
        %s882 = sand.u32 %s404, 1
        %s883 = scalar_lea.vmem [#allocation12], %s882
        // Predicated region
        $region137: #{bert_classifier_forward.1} parent=107 // pred_check
          %p884 = pneg %p417
        $region138: #{bert_classifier_forward.1} parent=107 // pred_check_branch
          %886 = sbr.rel (%p884) target = $region140
        $region139: #{bert_classifier_forward.1} parent=107 // pred_region
          %887 = dma.done %s881, 16
        $region140: #{bert_classifier_forward.1} parent=107 // pred_fallthru
          _
        %s888 = sand.u32 %s36, 1
        %s889 = scalar_lea.sflag [#allocation4], %s888
        %s890 = sand.u32 %s456, 1
        %s891 = scalar_lea.vmem [#allocation13], %s890
        // Predicated region
        $region141: #{bert_classifier_forward.1} parent=107 // pred_check
          %p892 = pneg %p469
        $region142: #{bert_classifier_forward.1} parent=107 // pred_check_branch
          %894 = sbr.rel (%p892) target = $region144
        $region143: #{bert_classifier_forward.1} parent=107 // pred_region
          %895 = dma.done %s889, 16
        $region144: #{bert_classifier_forward.1} parent=107 // pred_fallthru
          _
        // Predicated region
        $region145: #{bert_classifier_forward.1} parent=107 // pred_check
          %p896 = pneg %p511
        $region146: #{bert_classifier_forward.1} parent=107 // pred_check_branch
          %898 = sbr.rel (%p896) target = $region148
        $region147: #{bert_classifier_forward.1} parent=107 // pred_region
          %899 = dma.done [#allocation6], 16
        $region148: #{bert_classifier_forward.1} parent=107 // pred_fallthru
          _
        // Predicated region
        $region149: #{bert_classifier_forward.1} parent=107 // pred_check
          %p900 = pneg %p553
        $region150: #{bert_classifier_forward.1} parent=107 // pred_check_branch
          %902 = sbr.rel (%p900) target = $region152
        $region151: #{bert_classifier_forward.1} parent=107 // pred_region
          %903 = dma.done [#allocation16], 16
        $region152: #{bert_classifier_forward.1} parent=107 // pred_fallthru
          _
        %p904 = pneg %p52
        %p905 = pneg %p49
        %p906 = pneg %p73
        %p907 = pneg %p70
        %p908 = pneg %p94
        %p909 = pneg %p91
        %p910 = pneg %p115
        %p911 = pneg %p112
        %p912 = pneg %p136
        %p913 = pneg %p133
        %p914 = pneg %p157
        %p915 = pneg %p154
        %s916 = sand.u32 %s36, 1
        %s917 = scalar_lea.sflag [#allocation4], %s916
        %s918 = sand.u32 %s170, 1
        %s919 = smul.addr %s918, 192
        %s920 = scalar_lea.vmem [#allocation7], %s919
        %p921 = pneg %p183
        %p922 = pneg %p180
        %p923 = scmp.lt.s32.totalorder %s36, 1
        %s924 = scalar_select %p923, %s36, 1
        %s925 = smul.addr %s924, 3
        %s926 = scalar_lea.vmem %s7, %s925
        %p927 = pneg %p209
        %p928 = pneg %p206
        %p929 = scmp.lt.s32.totalorder %s36, 1
        %s930 = scalar_select %p929, %s36, 1
        %s931 = smul.addr %s930, 16
        %s932 = smul.addr %s931, 4
        %s933 = scalar_lea.vmem %s8, %s932
        %p934 = pneg %p235
        %p935 = pneg %p232
        %p936 = scmp.lt.s32.totalorder %s36, 1
        %s937 = scalar_select %p936, %s36, 1
        %s938 = scalar_lea.vmem %s9, %s937
        %p939 = pneg %p261
        %p940 = pneg %p258
        %p941 = scmp.lt.s32.totalorder %s36, 1
        %s942 = scalar_select %p941, %s36, 1
        %s943 = scalar_lea.vmem %s10, %s942
        %p944 = pneg %p287
        %p945 = pneg %p284
        %s946 = sand.u32 %s36, 1
        %s947 = scalar_lea.sflag [#allocation4], %s946
        %s948 = sand.u32 %s300, 1
        %s949 = scalar_lea.vmem [#allocation8], %s948
        %p950 = pneg %p313
        %p951 = pneg %p310
        %s952 = sand.u32 %s36, 1
        %s953 = scalar_lea.sflag [#allocation4], %s952
        %s954 = sand.u32 %s326, 1
        %s955 = smul.addr %s954, 256
        %s956 = scalar_lea.vmem [#allocation9], %s955
        %p957 = pneg %p339
        %p958 = pneg %p336
        %s959 = sand.u32 %s36, 1
        %s960 = scalar_lea.sflag [#allocation4], %s959
        %s961 = sand.u32 %s352, 1
        %s962 = smul.addr %s961, 4
        %s963 = scalar_lea.vmem [#allocation10], %s962
        %p964 = pneg %p365
        %p965 = pneg %p362
        %s966 = sand.u32 %s36, 1
        %s967 = scalar_lea.sflag [#allocation4], %s966
        %s968 = sand.u32 %s378, 1
        %s969 = smul.addr %s968, 256
        %s970 = scalar_lea.vmem [#allocation11], %s969
        %p971 = pneg %p391
        %p972 = pneg %p388
        %s973 = sand.u32 %s36, 1
        %s974 = scalar_lea.sflag [#allocation4], %s973
        %s975 = sand.u32 %s404, 1
        %s976 = scalar_lea.vmem [#allocation12], %s975
        %p977 = pneg %p417
        %p978 = pneg %p414
        %p979 = scmp.lt.s32.totalorder %s36, 1
        %s980 = scalar_select %p979, %s36, 1
        %s981 = scalar_lea.vmem %s16, %s980
        %p982 = pneg %p443
        %p983 = pneg %p440
        %s984 = sand.u32 %s36, 1
        %s985 = scalar_lea.sflag [#allocation4], %s984
        %s986 = sand.u32 %s456, 1
        %s987 = scalar_lea.vmem [#allocation13], %s986
        %p988 = pneg %p469
        %p989 = pneg %p466
        %p990 = pneg %p490
        %p991 = pneg %p487
        %p992 = pneg %p511
        %p993 = pneg %p508
        %p994 = pneg %p532
        %p995 = pneg %p529
        %p996 = pneg %p553
        %p997 = pneg %p550
        %p998 = pneg %p574
        %p999 = pneg %p571
        %p1000 = scmp.lt.s32.totalorder %s36, 1
        %s1001 = scalar_select %p1000, %s36, 1
        %s1002 = smul.addr %s1001, 3
        %s1003 = scalar_lea.vmem %s7, %s1002
        %p1004 = scmp.lt.s32.totalorder %s36, 1
        %s1005 = scalar_select %p1004, %s36, 1
        %s1006 = smul.addr %s1005, 16
        %s1007 = smul.addr %s1006, 4
        %s1008 = scalar_lea.vmem %s8, %s1007
        %p1009 = scmp.lt.s32.totalorder %s36, 1
        %s1010 = scalar_select %p1009, %s36, 1
        %s1011 = scalar_lea.vmem %s9, %s1010
        %p1012 = scmp.lt.s32.totalorder %s36, 1
        %s1013 = scalar_select %p1012, %s36, 1
        %s1014 = scalar_lea.vmem %s10, %s1013
        %p1015 = scmp.lt.s32.totalorder %s36, 1
        %s1016 = scalar_select %p1015, %s36, 1
        %s1017 = scalar_lea.vmem %s16, %s1016
        %p1019 = scmp.eq.s32.totalorder %s36, 0
        // Predicated region
        $region153: #{bert_classifier_forward.1} parent=107 // pred_check
          %p1020 = pneg %p1019
        $region154: #{bert_classifier_forward.1} parent=107 // pred_check_branch
          %1022 = sbr.rel (%p1020) target = $region156
        $region155: #{bert_classifier_forward.1} parent=107 // pred_region
          %v1023 = vld [vmem:[%s0] sm:$0xff]
          %v1024 = vld [vmem:[%s0 + $0x8] sm:$0xff]
          %v1025 = vld [vmem:[#allocation3] sm:$0x1]
          %v1026 = vld [vmem:[#allocation5] sm:$0x1]
          %1027 = vadd.xlane.f32.xlu0 %v1023
          %v1028 = vpop.xlane.xlu0 %1027
          %1029 = vadd.xlane.f32.xlu0 %v1024
          %v1030 = vpop.xlane.xlu0 %1029
          %v1031 = vrcp.pop 128.0
          %v1032 = vmul.f32 %v1028, %v1031
          %v1033 = vmul.f32 %v1030, %v1031
          %v1034 = vsub.f32 %v1023, %v1032
          %v1035 = vsub.f32 %v1024, %v1033
          %v1036 = vmul.f32 %v1034, %v1034
          %v1037 = vmul.f32 %v1035, %v1035
          %1038 = vadd.xlane.f32.xlu0 %v1036
          %v1039 = vpop.xlane.xlu0 %1038
          %1040 = vadd.xlane.f32.xlu0 %v1037
          %v1041 = vpop.xlane.xlu0 %1040
          %v1042 = vmul.f32 %v1039, %v1031
          %v1043 = vmul.f32 %v1041, %v1031
          %v1044 = vadd.f32 %v1042, 1e-12
          %v1045 = vadd.f32 %v1043, 1e-12
          %v1046 = vrsqrt.pop %v1044
          %v1047 = vrsqrt.pop %v1045
          %v1048 = vmul.f32 %v1034, %v1046
          %v1049 = vmul.f32 %v1035, %v1047
          %v1051 = vlaneseq
          %v1052 = vshrl.u32 %v1051, 7
          %v1053 = vsub.s32 0, %v1052
          %v1054 = vrot.slane %v1025, %v1053
          %v1056 = vmul.f32 %v1048, %v1054
          %v1057 = vmul.f32 %v1049, %v1054
          %v1059 = vlaneseq
          %v1060 = vshrl.u32 %v1059, 7
          %v1061 = vsub.s32 0, %v1060
          %v1062 = vrot.slane %v1026, %v1061
          %v1064 = vadd.f32 %v1056, %v1062
          %v1065 = vadd.f32 %v1057, %v1062
          %1066 = vst [vmem:[#allocation2] sm:$0xff] %v1064
          %1067 = vst [vmem:[#allocation2 + $0x8] sm:$0xff] %v1065
        $region156: #{bert_classifier_forward.1} parent=107 // pred_fallthru
          _
        %v1068 = vld [vmem:[%s1] sm:$0x1]
        %v1069 = vsub.f32 1.0, %v1068
        %v1070 = vmul.f32 %v1069, -10000.0
        %v1071 = vld [vmem:[%s2] sm:$0xff]
        %v1072 = vld [vmem:[%s2 + $0x8] sm:$0xff]
        %v1073 = vld [vmem:[%s3] sm:$0x1]
        %1075 = vset.pattern.permute.xlu0 0
        %1076 = vperm.xlu0 %1075, %v1071
        %v1077 = vpop.permute.xlu0 %1076
        %1080 = vset.pattern.permute.xlu0 0
        %1081 = vperm.xlu0 %1080, %v1072
        %v1082 = vpop.permute.xlu0 %1081
        %v1085 = vlaneseq
        %v1086 = vshrl.u32 %v1085, 7
        %v1087 = vsub.s32 0, %v1086
        %v1088 = vrot.slane %v1073, %v1087
        %vm1090 = vcmp.eq.f32.partialorder %v1077, %v1088
        %vm1091 = vcmp.eq.f32.partialorder %v1082, %v1088
        %v1092 = vsel %vm1090, 0.0, -1e+09
        %v1093 = vsel %vm1091, 0.0, -1e+09
        %v1095 = vlaneseq
        %v1096 = vshrl.u32 %v1095, 7
        %v1097 = vsub.s32 0, %v1096
        %v1098 = vrot.slane %v1070, %v1097
        %v1100 = vadd.f32 %v1092, %v1098
        %v1101 = vadd.f32 %v1093, %v1098
        %v1102 = vld [vmem:[#allocation2] sm:$0xff]
        %v1103 = vld [vmem:[#allocation2 + $0x8] sm:$0xff]
        %v1104 = vpack.c.bf16 %v1103, %v1102
        %v1105 = vld [vmem:[%s840] sm:$0xff]
        %v1106 = vld [vmem:[%s840 + $0x8] sm:$0xf]
        %v1107 = vld [vmem:[%s840 + $0xc] sm:$0xff]
        %v1108 = vld [vmem:[%s840 + $0x14] sm:$0xf]
        %v1109 = vld [vmem:[%s840 + $0x18] sm:$0xff]
        %v1110 = vld [vmem:[%s840 + $0x20] sm:$0xf]
        %v1111 = vld [vmem:[%s840 + $0x24] sm:$0xff]
        %v1112 = vld [vmem:[%s840 + $0x2c] sm:$0xf]
        %v1113 = vld [vmem:[%s840 + $0x30] sm:$0xff]
        %v1114 = vld [vmem:[%s840 + $0x38] sm:$0xf]
        %v1115 = vld [vmem:[%s840 + $0x3c] sm:$0xff]
        %v1116 = vld [vmem:[%s840 + $0x44] sm:$0xf]
        %v1117 = vld [vmem:[%s840 + $0x48] sm:$0xff]
        %v1118 = vld [vmem:[%s840 + $0x50] sm:$0xf]
        %v1119 = vld [vmem:[%s840 + $0x54] sm:$0xff]
        %v1120 = vld [vmem:[%s840 + $0x5c] sm:$0xf]
        %v1121 = vld [vmem:[%s840 + $0x60] sm:$0xff]
        %v1122 = vld [vmem:[%s840 + $0x68] sm:$0xf]
        %v1123 = vld [vmem:[%s840 + $0x6c] sm:$0xff]
        %v1124 = vld [vmem:[%s840 + $0x74] sm:$0xf]
        %v1125 = vld [vmem:[%s840 + $0x78] sm:$0xff]
        %v1126 = vld [vmem:[%s840 + $0x80] sm:$0xf]
        %v1127 = vld [vmem:[%s840 + $0x84] sm:$0xff]
        %v1128 = vld [vmem:[%s840 + $0x8c] sm:$0xf]
        %v1129 = vld [vmem:[%s840 + $0x90] sm:$0xff]
        %v1130 = vld [vmem:[%s840 + $0x98] sm:$0xf]
        %v1131 = vld [vmem:[%s840 + $0x9c] sm:$0xff]
        %v1132 = vld [vmem:[%s840 + $0xa4] sm:$0xf]
        %v1133 = vld [vmem:[%s840 + $0xa8] sm:$0xff]
        %v1134 = vld [vmem:[%s840 + $0xb0] sm:$0xf]
        %v1135 = vld [vmem:[%s840 + $0xb4] sm:$0xff]
        %v1136 = vld [vmem:[%s840 + $0xbc] sm:$0xf]
        %v1137 = vld [vmem:[%s1003] sm:$0x7]
        %v1139 = vlaneseq
        %v1140 = vshrl.u32 %v1139, 7
        %v1141 = vsub.s32 0, %v1140
        %v1142 = vrot.slane %v1137, %v1141
        %v1143 = vlaneseq
        %v1144 = vshrl.u32 %v1143, 7
        %v1145 = vsub.s32 1, %v1144
        %v1146 = vrot.slane %v1137, %v1145
        %v1147 = vlaneseq
        %v1148 = vshrl.u32 %v1147, 7
        %v1149 = vsub.s32 2, %v1148
        %v1150 = vrot.slane %v1137, %v1149
        %v1186 = vunpack.c.l.b16 %v1105
        %v1187 = vunpack.c.h.b16 %v1105
        %v1188 = vunpack.c.l.b16 %v1106
        %v1189 = vunpack.c.l.b16 %v1107
        %v1190 = vunpack.c.h.b16 %v1107
        %v1191 = vunpack.c.l.b16 %v1108
        %v1192 = vunpack.c.l.b16 %v1109
        %v1193 = vunpack.c.h.b16 %v1109
        %v1194 = vunpack.c.l.b16 %v1110
        %v1195 = vunpack.c.l.b16 %v1111
        %v1196 = vunpack.c.h.b16 %v1111
        %v1197 = vunpack.c.l.b16 %v1112
        %v1198 = vunpack.c.l.b16 %v1113
        %v1199 = vunpack.c.h.b16 %v1113
        %v1200 = vunpack.c.l.b16 %v1114
        %v1201 = vunpack.c.l.b16 %v1115
        %v1202 = vunpack.c.h.b16 %v1115
        %v1203 = vunpack.c.l.b16 %v1116
        %v1204 = vunpack.c.l.b16 %v1117
        %v1205 = vunpack.c.h.b16 %v1117
        %v1206 = vunpack.c.l.b16 %v1118
        %v1207 = vunpack.c.l.b16 %v1119
        %v1208 = vunpack.c.h.b16 %v1119
        %v1209 = vunpack.c.l.b16 %v1120
        %v1210 = vunpack.c.l.b16 %v1121
        %v1211 = vunpack.c.h.b16 %v1121
        %v1212 = vunpack.c.l.b16 %v1122
        %v1213 = vunpack.c.l.b16 %v1123
        %v1214 = vunpack.c.h.b16 %v1123
        %v1215 = vunpack.c.l.b16 %v1124
        %v1216 = vunpack.c.l.b16 %v1125
        %v1217 = vunpack.c.h.b16 %v1125
        %v1218 = vunpack.c.l.b16 %v1126
        %v1219 = vunpack.c.l.b16 %v1127
        %v1220 = vunpack.c.h.b16 %v1127
        %v1221 = vunpack.c.l.b16 %v1128
        %v1222 = vunpack.c.l.b16 %v1129
        %v1223 = vunpack.c.h.b16 %v1129
        %v1224 = vunpack.c.l.b16 %v1130
        %v1225 = vunpack.c.l.b16 %v1131
        %v1226 = vunpack.c.h.b16 %v1131
        %v1227 = vunpack.c.l.b16 %v1132
        %v1228 = vunpack.c.l.b16 %v1133
        %v1229 = vunpack.c.h.b16 %v1133
        %v1230 = vunpack.c.l.b16 %v1134
        %v1231 = vunpack.c.l.b16 %v1135
        %v1232 = vunpack.c.h.b16 %v1135
        %v1233 = vunpack.c.l.b16 %v1136
        %v1234 = vpack.c.b16 %v1189, %v1186
        %v1235 = vpack.c.b16 %v1190, %v1187
        %v1236 = vpack.c.b16 %v1191, %v1188
        %v1237 = vpack.c.b16 %v1195, %v1192
        %v1238 = vpack.c.b16 %v1196, %v1193
        %v1239 = vpack.c.b16 %v1197, %v1194
        %v1240 = vpack.c.b16 %v1201, %v1198
        %v1241 = vpack.c.b16 %v1202, %v1199
        %v1242 = vpack.c.b16 %v1203, %v1200
        %v1243 = vpack.c.b16 %v1207, %v1204
        %v1244 = vpack.c.b16 %v1208, %v1205
        %v1245 = vpack.c.b16 %v1209, %v1206
        %v1246 = vpack.c.b16 %v1213, %v1210
        %v1247 = vpack.c.b16 %v1214, %v1211
        %v1248 = vpack.c.b16 %v1215, %v1212
        %v1249 = vpack.c.b16 %v1219, %v1216
        %v1250 = vpack.c.b16 %v1220, %v1217
        %v1251 = vpack.c.b16 %v1221, %v1218
        %v1252 = vpack.c.b16 %v1225, %v1222
        %v1253 = vpack.c.b16 %v1226, %v1223
        %v1254 = vpack.c.b16 %v1227, %v1224
        %v1255 = vpack.c.b16 %v1231, %v1228
        %v1256 = vpack.c.b16 %v1232, %v1229
        %v1257 = vpack.c.b16 %v1233, %v1230
        %1282 = vmatprep.subr.bf16.mxu0 %v1256
        %1283 = vmatpush1.bf16.msra.mxu0 %v1255
        %1284 = vmatprep.subr.bf16.mxu0 %v1253
        %1285 = vmatpush1.bf16.msra.mxu0 %v1252
        %1286 = vmatprep.subr.bf16.mxu0 %v1250
        %1287 = vmatpush1.bf16.msra.mxu0 %v1249
        %1288 = vmatprep.subr.bf16.mxu0 %v1247
        %1289 = vmatpush1.bf16.msra.mxu0 %v1246
        %1290 = vmatprep.subr.bf16.mxu0 %v1244
        %1291 = vmatpush1.bf16.msra.mxu0 %v1243
        %1292 = vmatprep.subr.bf16.mxu0 %v1241
        %1293 = vmatpush1.bf16.msra.mxu0 %v1240
        %1294 = vmatprep.subr.bf16.mxu0 %v1238
        %1295 = vmatpush1.bf16.msra.mxu0 %v1237
        %1296 = vmatprep.subr.bf16.mxu0 %v1235
        %1297 = vmatpush1.bf16.msra.mxu0 %v1234
        %1298 = vmatprep.subr.bf16.mxu0 0
        %1299 = vmatpush2.bf16.msra.mxu0 0
        %1300 = vmatprep.subr.bf16.mxu0 0
        %1301 = vmatpush2.bf16.msra.mxu0 0
        %1302 = vmatprep.subr.bf16.mxu0 0
        %1303 = vmatpush2.bf16.msra.mxu0 0
        %1304 = vmatprep.subr.bf16.mxu0 0
        %1305 = vmatpush2.bf16.msra.mxu0 0
        %1306 = vmatprep.subr.bf16.mxu0 0
        %1307 = vmatpush2.bf16.msra.mxu0 0
        %1308 = vmatprep.subr.bf16.mxu0 0
        %1309 = vmatpush2.bf16.msra.mxu0 0
        %1310 = vmatprep.subr.bf16.mxu0 0
        %1311 = vmatpush2.bf16.msra.mxu0 0
        %1312 = vmatprep.subr.bf16.mxu0 0
        %1313 = vmatpush2.bf16.msra.mxu0 0
        %1314 = vmatprep.mubr.bf16.mxu0 0
        %1315 = vmatmul.mubr.bf16.gmra.mxu0 %v1104
        %v1316 = vpop.f32.mrf.mxu0
        %v1317 = vadd.f32 %v1142, %v1316
        %v1318 = vpop.f32.mrf.mxu0
        %v1319 = vadd.f32 %v1146, %v1318
        %v1320 = vpop.f32.mrf.mxu0
        %v1321 = vadd.f32 %v1142, %v1320
        %v1322 = vpop.f32.mrf.mxu0
        %v1323 = vadd.f32 %v1146, %v1322
        %1324 = vdwg.mxu0
        %1325 = vmatprep.subr.bf16.mxu0 0
        %1326 = vmatpush1.bf16.msra.mxu0 %v1257
        %1327 = vmatprep.subr.bf16.mxu0 0
        %1328 = vmatpush1.bf16.msra.mxu0 %v1254
        %1329 = vmatprep.subr.bf16.mxu0 0
        %1330 = vmatpush1.bf16.msra.mxu0 %v1251
        %1331 = vmatprep.subr.bf16.mxu0 0
        %1332 = vmatpush1.bf16.msra.mxu0 %v1248
        %1333 = vmatprep.subr.bf16.mxu0 0
        %1334 = vmatpush1.bf16.msra.mxu0 %v1245
        %1335 = vmatprep.subr.bf16.mxu0 0
        %1336 = vmatpush1.bf16.msra.mxu0 %v1242
        %1337 = vmatprep.subr.bf16.mxu0 0
        %1338 = vmatpush1.bf16.msra.mxu0 %v1239
        %1339 = vmatprep.subr.bf16.mxu0 0
        %1340 = vmatpush1.bf16.msra.mxu0 %v1236
        %1341 = vmatprep.subr.bf16.mxu0 0
        %1342 = vmatpush2.bf16.msra.mxu0 0
        %1343 = vmatprep.subr.bf16.mxu0 0
        %1344 = vmatpush2.bf16.msra.mxu0 0
        %1345 = vmatprep.subr.bf16.mxu0 0
        %1346 = vmatpush2.bf16.msra.mxu0 0
        %1347 = vmatprep.subr.bf16.mxu0 0
        %1348 = vmatpush2.bf16.msra.mxu0 0
        %1349 = vmatprep.subr.bf16.mxu0 0
        %1350 = vmatpush2.bf16.msra.mxu0 0
        %1351 = vmatprep.subr.bf16.mxu0 0
        %1352 = vmatpush2.bf16.msra.mxu0 0
        %1353 = vmatprep.subr.bf16.mxu0 0
        %1354 = vmatpush2.bf16.msra.mxu0 0
        %1355 = vmatprep.subr.bf16.mxu0 0
        %1356 = vmatpush2.bf16.msra.mxu0 0
        %1357 = vmatprep.mubr.bf16.mxu0 0
        %1358 = vmatmul.mubr.bf16.gmra.mxu0 %v1104
        %v1359 = vpop.f32.mrf.mxu0
        %v1360 = vadd.f32 %v1150, %v1359
        %v1361 = vpop.f32.mrf.mxu0
        %v1362 = vpop.f32.mrf.mxu0
        %v1363 = vadd.f32 %v1150, %v1362
        %v1364 = vpop.f32.mrf.mxu0
        %1365 = vdwg.mxu0
        %v1366 = vpack.c.bf16 %v1321, %v1317
        %v1367 = vpack.c.bf16 %v1323, %v1319
        %v1368 = vpack.c.bf16 %v1363, %v1360
        %vm1369 = vcmask 523264
        %v1371 = vsel %vm1369, %v1366, 0
        %v1374 = vsel %vm1369, %v1367, 0
        %1376 = vmatprep.subr.bf16.mxu0 0
        %1377 = vmatpush1.bf16.xpose.msra.mxu0 0
        %1378 = vmatprep.subr.bf16.mxu0 0
        %1379 = vmatpush1.bf16.xpose.msra.mxu0 0
        %1380 = vmatprep.subr.bf16.mxu0 0
        %1381 = vmatpush1.bf16.xpose.msra.mxu0 0
        %1382 = vmatprep.subr.bf16.mxu0 0
        %1383 = vmatpush1.bf16.xpose.msra.mxu0 0
        %1384 = vmatprep.subr.bf16.mxu0 0
        %1385 = vmatpush1.bf16.xpose.msra.mxu0 0
        %1386 = vmatprep.subr.bf16.mxu0 0
        %1387 = vmatpush1.bf16.xpose.msra.mxu0 0
        %1388 = vmatprep.subr.bf16.mxu0 0
        %1389 = vmatpush1.bf16.xpose.msra.mxu0 0
        %1390 = vmatprep.subr.bf16.mxu0 0
        %1391 = vmatpush1.bf16.xpose.msra.mxu0 %v1374
        %1392 = vmatprep.subr.bf16.mxu0 0
        %1393 = vmatpush2.bf16.xpose.msra.mxu0 0
        %1394 = vmatprep.subr.bf16.mxu0 0
        %1395 = vmatpush2.bf16.xpose.msra.mxu0 0
        %1396 = vmatprep.subr.bf16.mxu0 0
        %1397 = vmatpush2.bf16.xpose.msra.mxu0 0
        %1398 = vmatprep.subr.bf16.mxu0 0
        %1399 = vmatpush2.bf16.xpose.msra.mxu0 0
        %1400 = vmatprep.subr.bf16.mxu0 0
        %1401 = vmatpush2.bf16.xpose.msra.mxu0 0
        %1402 = vmatprep.subr.bf16.mxu0 0
        %1403 = vmatpush2.bf16.xpose.msra.mxu0 0
        %1404 = vmatprep.subr.bf16.mxu0 0
        %1405 = vmatpush2.bf16.xpose.msra.mxu0 0
        %1406 = vmatprep.subr.bf16.mxu0 0
        %1407 = vmatpush2.bf16.xpose.msra.mxu0 0
        %1408 = vmatprep.mubr.bf16.mxu0 0
        %1409 = vmatmul.mubr.bf16.gmra.mxu0 %v1371
        %v1410 = vpop.f32.mrf.mxu0
        %v1411 = vadd.f32 %v1100, %v1410
        %v1412 = vpop.f32.mrf.mxu0
        %v1413 = vpop.f32.mrf.mxu0
        %v1414 = vadd.f32 %v1101, %v1413
        %v1415 = vpop.f32.mrf.mxu0
        %1416 = vdwg.mxu0
        %vm1417 = vcmask 130048
        %v1418 = vsel %vm1417, %v1411, -inf
        %1419 = vmax.xlane.f32.xlu0 %v1418
        %v1420 = vpop.xlane.xlu0 %1419
        %v1421 = vsel %vm1417, %v1414, -inf
        %1422 = vmax.xlane.f32.xlu0 %v1421
        %v1423 = vpop.xlane.xlu0 %1422
        %v1424 = vsub.f32 %v1411, %v1420
        %v1425 = vsub.f32 %v1414, %v1423
        %v1426 = vmul.f32 %v1424, 1.442695
        %v1427 = vpow.pop %v1426
        %v1428 = vmul.f32 %v1425, 1.442695
        %v1429 = vpow.pop %v1428
        %v1430 = vsel %vm1417, %v1427, 0.0
        %1431 = vadd.xlane.f32.xlu0 %v1430
        %v1432 = vpop.xlane.xlu0 %1431
        %v1433 = vsel %vm1417, %v1429, 0.0
        %1434 = vadd.xlane.f32.xlu0 %v1433
        %v1435 = vpop.xlane.xlu0 %1434
        %v1436 = vrcp.pop %v1432
        %v1437 = vrcp.pop %v1435
        %v1438 = vmul.f32 %v1427, %v1436
        %v1439 = vmul.f32 %v1429, %v1437
        %v1440 = vpack.c.bf16 %v1439, %v1438
        %v1442 = vsel %vm1417, %v1440, 0
        %1444 = vmatprep.subr.bf16.mxu0 0
        %1445 = vmatpush1.bf16.msra.mxu0 0
        %1446 = vmatprep.subr.bf16.mxu0 0
        %1447 = vmatpush1.bf16.msra.mxu0 0
        %1448 = vmatprep.subr.bf16.mxu0 0
        %1449 = vmatpush1.bf16.msra.mxu0 0
        %1450 = vmatprep.subr.bf16.mxu0 0
        %1451 = vmatpush1.bf16.msra.mxu0 0
        %1452 = vmatprep.subr.bf16.mxu0 0
        %1453 = vmatpush1.bf16.msra.mxu0 0
        %1454 = vmatprep.subr.bf16.mxu0 0
        %1455 = vmatpush1.bf16.msra.mxu0 0
        %1456 = vmatprep.subr.bf16.mxu0 0
        %1457 = vmatpush1.bf16.msra.mxu0 0
        %1458 = vmatprep.subr.bf16.mxu0 0
        %1459 = vmatpush1.bf16.msra.mxu0 %v1368
        %1460 = vmatprep.subr.bf16.mxu0 0
        %1461 = vmatpush2.bf16.msra.mxu0 0
        %1462 = vmatprep.subr.bf16.mxu0 0
        %1463 = vmatpush2.bf16.msra.mxu0 0
        %1464 = vmatprep.subr.bf16.mxu0 0
        %1465 = vmatpush2.bf16.msra.mxu0 0
        %1466 = vmatprep.subr.bf16.mxu0 0
        %1467 = vmatpush2.bf16.msra.mxu0 0
        %1468 = vmatprep.subr.bf16.mxu0 0
        %1469 = vmatpush2.bf16.msra.mxu0 0
        %1470 = vmatprep.subr.bf16.mxu0 0
        %1471 = vmatpush2.bf16.msra.mxu0 0
        %1472 = vmatprep.subr.bf16.mxu0 0
        %1473 = vmatpush2.bf16.msra.mxu0 0
        %1474 = vmatprep.subr.bf16.mxu0 0
        %1475 = vmatpush2.bf16.msra.mxu0 0
        %1476 = vmatprep.mubr.bf16.mxu0 0
        %1477 = vmatmul.mubr.bf16.gmra.mxu0 %v1442
        %v1478 = vpop.f32.mrf.mxu0
        %v1479 = vadd.f32 0.0, %v1478
        %v1480 = vpop.f32.mrf.mxu0
        %v1481 = vpop.f32.mrf.mxu0
        %v1482 = vadd.f32 0.0, %v1481
        %v1483 = vpop.f32.mrf.mxu0
        %1484 = vdwg.mxu0
        %v1485 = vpack.c.bf16 %v1482, %v1479
        %v1486 = vld [vmem:[%s1008] sm:$0xf]
        %v1487 = vld [vmem:[%s1008 + $0x4] sm:$0xf]
        %v1488 = vld [vmem:[%s1008 + $0x8] sm:$0xf]
        %v1489 = vld [vmem:[%s1008 + $0xc] sm:$0xf]
        %v1490 = vld [vmem:[%s1008 + $0x10] sm:$0xf]
        %v1491 = vld [vmem:[%s1008 + $0x14] sm:$0xf]
        %v1492 = vld [vmem:[%s1008 + $0x18] sm:$0xf]
        %v1493 = vld [vmem:[%s1008 + $0x1c] sm:$0xf]
        %1495 = vrot.lane.b32.xlu0 %v1366, 64
        %v1496 = vpop.permute.xlu0 %1495
        %1498 = vrot.lane.b32.xlu0 %v1367, 64
        %v1499 = vpop.permute.xlu0 %1498
        %v1501 = vsel %vm1369, %v1496, 0
        %v1504 = vsel %vm1369, %v1499, 0
        %1506 = vmatprep.subr.bf16.mxu0 0
        %1507 = vmatpush1.bf16.xpose.msra.mxu0 0
        %1508 = vmatprep.subr.bf16.mxu0 0
        %1509 = vmatpush1.bf16.xpose.msra.mxu0 0
        %1510 = vmatprep.subr.bf16.mxu0 0
        %1511 = vmatpush1.bf16.xpose.msra.mxu0 0
        %1512 = vmatprep.subr.bf16.mxu0 0
        %1513 = vmatpush1.bf16.xpose.msra.mxu0 0
        %1514 = vmatprep.subr.bf16.mxu0 0
        %1515 = vmatpush1.bf16.xpose.msra.mxu0 0
        %1516 = vmatprep.subr.bf16.mxu0 0
        %1517 = vmatpush1.bf16.xpose.msra.mxu0 0
        %1518 = vmatprep.subr.bf16.mxu0 0
        %1519 = vmatpush1.bf16.xpose.msra.mxu0 0
        %1520 = vmatprep.subr.bf16.mxu0 0
        %1521 = vmatpush1.bf16.xpose.msra.mxu0 %v1504
        %1522 = vmatprep.subr.bf16.mxu0 0
        %1523 = vmatpush2.bf16.xpose.msra.mxu0 0
        %1524 = vmatprep.subr.bf16.mxu0 0
        %1525 = vmatpush2.bf16.xpose.msra.mxu0 0
        %1526 = vmatprep.subr.bf16.mxu0 0
        %1527 = vmatpush2.bf16.xpose.msra.mxu0 0
        %1528 = vmatprep.subr.bf16.mxu0 0
        %1529 = vmatpush2.bf16.xpose.msra.mxu0 0
        %1530 = vmatprep.subr.bf16.mxu0 0
        %1531 = vmatpush2.bf16.xpose.msra.mxu0 0
        %1532 = vmatprep.subr.bf16.mxu0 0
        %1533 = vmatpush2.bf16.xpose.msra.mxu0 0
        %1534 = vmatprep.subr.bf16.mxu0 0
        %1535 = vmatpush2.bf16.xpose.msra.mxu0 0
        %1536 = vmatprep.subr.bf16.mxu0 0
        %1537 = vmatpush2.bf16.xpose.msra.mxu0 0
        %1538 = vmatprep.mubr.bf16.mxu0 0
        %1539 = vmatmul.mubr.bf16.gmra.mxu0 %v1501
        %v1540 = vpop.f32.mrf.mxu0
        %v1541 = vadd.f32 %v1100, %v1540
        %v1542 = vpop.f32.mrf.mxu0
        %v1543 = vpop.f32.mrf.mxu0
        %v1544 = vadd.f32 %v1101, %v1543
        %v1545 = vpop.f32.mrf.mxu0
        %1546 = vdwg.mxu0
        %v1547 = vsel %vm1417, %v1541, -inf
        %1548 = vmax.xlane.f32.xlu0 %v1547
        %v1549 = vpop.xlane.xlu0 %1548
        %v1550 = vsel %vm1417, %v1544, -inf
        %1551 = vmax.xlane.f32.xlu0 %v1550
        %v1552 = vpop.xlane.xlu0 %1551
        %v1553 = vsub.f32 %v1541, %v1549
        %v1554 = vsub.f32 %v1544, %v1552
        %v1555 = vmul.f32 %v1553, 1.442695
        %v1556 = vpow.pop %v1555
        %v1557 = vmul.f32 %v1554, 1.442695
        %v1558 = vpow.pop %v1557
        %v1559 = vsel %vm1417, %v1556, 0.0
        %1560 = vadd.xlane.f32.xlu0 %v1559
        %v1561 = vpop.xlane.xlu0 %1560
        %v1562 = vsel %vm1417, %v1558, 0.0
        %1563 = vadd.xlane.f32.xlu0 %v1562
        %v1564 = vpop.xlane.xlu0 %1563
        %v1565 = vrcp.pop %v1561
        %v1566 = vrcp.pop %v1564
        %v1567 = vmul.f32 %v1556, %v1565
        %v1568 = vmul.f32 %v1558, %v1566
        %v1569 = vpack.c.bf16 %v1568, %v1567
        %1571 = vrot.lane.b32.xlu0 %v1368, 64
        %v1572 = vpop.permute.xlu0 %1571
        %v1575 = vsel %vm1417, %v1569, 0
        %1577 = vmatprep.subr.bf16.mxu0 0
        %1578 = vmatpush1.bf16.msra.mxu0 0
        %1579 = vmatprep.subr.bf16.mxu0 0
        %1580 = vmatpush1.bf16.msra.mxu0 0
        %1581 = vmatprep.subr.bf16.mxu0 0
        %1582 = vmatpush1.bf16.msra.mxu0 0
        %1583 = vmatprep.subr.bf16.mxu0 0
        %1584 = vmatpush1.bf16.msra.mxu0 0
        %1585 = vmatprep.subr.bf16.mxu0 0
        %1586 = vmatpush1.bf16.msra.mxu0 0
        %1587 = vmatprep.subr.bf16.mxu0 0
        %1588 = vmatpush1.bf16.msra.mxu0 0
        %1589 = vmatprep.subr.bf16.mxu0 0
        %1590 = vmatpush1.bf16.msra.mxu0 0
        %1591 = vmatprep.subr.bf16.mxu0 0
        %1592 = vmatpush1.bf16.msra.mxu0 %v1572
        %1593 = vmatprep.subr.bf16.mxu0 0
        %1594 = vmatpush2.bf16.msra.mxu0 0
        %1595 = vmatprep.subr.bf16.mxu0 0
        %1596 = vmatpush2.bf16.msra.mxu0 0
        %1597 = vmatprep.subr.bf16.mxu0 0
        %1598 = vmatpush2.bf16.msra.mxu0 0
        %1599 = vmatprep.subr.bf16.mxu0 0
        %1600 = vmatpush2.bf16.msra.mxu0 0
        %1601 = vmatprep.subr.bf16.mxu0 0
        %1602 = vmatpush2.bf16.msra.mxu0 0
        %1603 = vmatprep.subr.bf16.mxu0 0
        %1604 = vmatpush2.bf16.msra.mxu0 0
        %1605 = vmatprep.subr.bf16.mxu0 0
        %1606 = vmatpush2.bf16.msra.mxu0 0
        %1607 = vmatprep.subr.bf16.mxu0 0
        %1608 = vmatpush2.bf16.msra.mxu0 0
        %1609 = vmatprep.mubr.bf16.mxu0 0
        %1610 = vmatmul.mubr.bf16.gmra.mxu0 %v1575
        %v1611 = vpop.f32.mrf.mxu0
        %v1612 = vadd.f32 0.0, %v1611
        %v1613 = vpop.f32.mrf.mxu0
        %v1614 = vpop.f32.mrf.mxu0
        %v1615 = vadd.f32 0.0, %v1614
        %v1616 = vpop.f32.mrf.mxu0
        %1617 = vdwg.mxu0
        %v1618 = vpack.c.bf16 %v1615, %v1612
        %v1619 = vld [vmem:[%s1008 + $0x20] sm:$0xf]
        %v1620 = vld [vmem:[%s1008 + $0x24] sm:$0xf]
        %v1621 = vld [vmem:[%s1008 + $0x28] sm:$0xf]
        %v1622 = vld [vmem:[%s1008 + $0x2c] sm:$0xf]
        %v1623 = vld [vmem:[%s1008 + $0x30] sm:$0xf]
        %v1624 = vld [vmem:[%s1008 + $0x34] sm:$0xf]
        %v1625 = vld [vmem:[%s1008 + $0x38] sm:$0xf]
        %v1626 = vld [vmem:[%s1008 + $0x3c] sm:$0xf]
        %v1635 = vunpack.c.l.b16 %v1619
        %v1636 = vunpack.c.l.b16 %v1620
        %v1637 = vunpack.c.l.b16 %v1621
        %v1638 = vunpack.c.l.b16 %v1622
        %v1639 = vunpack.c.l.b16 %v1623
        %v1640 = vunpack.c.l.b16 %v1624
        %v1641 = vunpack.c.l.b16 %v1625
        %v1642 = vunpack.c.l.b16 %v1626
        %v1643 = vpack.c.b16 %v1636, %v1635
        %v1644 = vpack.c.b16 %v1638, %v1637
        %v1645 = vpack.c.b16 %v1640, %v1639
        %v1646 = vpack.c.b16 %v1642, %v1641
        %v1652 = vsel %vm1369, %v1618, 0
        %1654 = vmatprep.subr.bf16.mxu0 0
        %1655 = vmatpush1.bf16.msra.mxu0 0
        %1656 = vmatprep.subr.bf16.mxu0 0
        %1657 = vmatpush1.bf16.msra.mxu0 0
        %1658 = vmatprep.subr.bf16.mxu0 0
        %1659 = vmatpush1.bf16.msra.mxu0 0
        %1660 = vmatprep.subr.bf16.mxu0 0
        %1661 = vmatpush1.bf16.msra.mxu0 0
        %1662 = vmatprep.subr.bf16.mxu0 0
        %1663 = vmatpush1.bf16.msra.mxu0 %v1646
        %1664 = vmatprep.subr.bf16.mxu0 0
        %1665 = vmatpush1.bf16.msra.mxu0 %v1645
        %1666 = vmatprep.subr.bf16.mxu0 0
        %1667 = vmatpush1.bf16.msra.mxu0 %v1644
        %1668 = vmatprep.subr.bf16.mxu0 0
        %1669 = vmatpush1.bf16.msra.mxu0 %v1643
        %1670 = vmatprep.subr.bf16.mxu0 0
        %1671 = vmatpush2.bf16.msra.mxu0 0
        %1672 = vmatprep.subr.bf16.mxu0 0
        %1673 = vmatpush2.bf16.msra.mxu0 0
        %1674 = vmatprep.subr.bf16.mxu0 0
        %1675 = vmatpush2.bf16.msra.mxu0 0
        %1676 = vmatprep.subr.bf16.mxu0 0
        %1677 = vmatpush2.bf16.msra.mxu0 0
        %1678 = vmatprep.subr.bf16.mxu0 0
        %1679 = vmatpush2.bf16.msra.mxu0 0
        %1680 = vmatprep.subr.bf16.mxu0 0
        %1681 = vmatpush2.bf16.msra.mxu0 0
        %1682 = vmatprep.subr.bf16.mxu0 0
        %1683 = vmatpush2.bf16.msra.mxu0 0
        %1684 = vmatprep.subr.bf16.mxu0 0
        %1685 = vmatpush2.bf16.msra.mxu0 0
        %1686 = vmatprep.mubr.bf16.mxu0 0
        %1687 = vmatmul.mubr.bf16.gmra.mxu0 %v1652
        %v1688 = vpop.f32.mrf.mxu0
        %v1689 = vadd.f32 0.0, %v1688
        %v1690 = vpop.f32.mrf.mxu0
        %v1691 = vpop.f32.mrf.mxu0
        %v1692 = vadd.f32 0.0, %v1691
        %v1693 = vpop.f32.mrf.mxu0
        %1694 = vdwg.mxu0
        %v1703 = vunpack.c.l.b16 %v1486
        %v1704 = vunpack.c.l.b16 %v1487
        %v1705 = vunpack.c.l.b16 %v1488
        %v1706 = vunpack.c.l.b16 %v1489
        %v1707 = vunpack.c.l.b16 %v1490
        %v1708 = vunpack.c.l.b16 %v1491
        %v1709 = vunpack.c.l.b16 %v1492
        %v1710 = vunpack.c.l.b16 %v1493
        %v1711 = vpack.c.b16 %v1704, %v1703
        %v1712 = vpack.c.b16 %v1706, %v1705
        %v1713 = vpack.c.b16 %v1708, %v1707
        %v1714 = vpack.c.b16 %v1710, %v1709
        %v1720 = vsel %vm1369, %v1485, 0
        %1722 = vmatprep.subr.bf16.mxu0 0
        %1723 = vmatpush1.bf16.msra.mxu0 0
        %1724 = vmatprep.subr.bf16.mxu0 0
        %1725 = vmatpush1.bf16.msra.mxu0 0
        %1726 = vmatprep.subr.bf16.mxu0 0
        %1727 = vmatpush1.bf16.msra.mxu0 0
        %1728 = vmatprep.subr.bf16.mxu0 0
        %1729 = vmatpush1.bf16.msra.mxu0 0
        %1730 = vmatprep.subr.bf16.mxu0 0
        %1731 = vmatpush1.bf16.msra.mxu0 %v1714
        %1732 = vmatprep.subr.bf16.mxu0 0
        %1733 = vmatpush1.bf16.msra.mxu0 %v1713
        %1734 = vmatprep.subr.bf16.mxu0 0
        %1735 = vmatpush1.bf16.msra.mxu0 %v1712
        %1736 = vmatprep.subr.bf16.mxu0 0
        %1737 = vmatpush1.bf16.msra.mxu0 %v1711
        %1738 = vmatprep.subr.bf16.mxu0 0
        %1739 = vmatpush2.bf16.msra.mxu0 0
        %1740 = vmatprep.subr.bf16.mxu0 0
        %1741 = vmatpush2.bf16.msra.mxu0 0
        %1742 = vmatprep.subr.bf16.mxu0 0
        %1743 = vmatpush2.bf16.msra.mxu0 0
        %1744 = vmatprep.subr.bf16.mxu0 0
        %1745 = vmatpush2.bf16.msra.mxu0 0
        %1746 = vmatprep.subr.bf16.mxu0 0
        %1747 = vmatpush2.bf16.msra.mxu0 0
        %1748 = vmatprep.subr.bf16.mxu0 0
        %1749 = vmatpush2.bf16.msra.mxu0 0
        %1750 = vmatprep.subr.bf16.mxu0 0
        %1751 = vmatpush2.bf16.msra.mxu0 0
        %1752 = vmatprep.subr.bf16.mxu0 0
        %1753 = vmatpush2.bf16.msra.mxu0 0
        %1754 = vmatprep.mubr.bf16.mxu0 0
        %1755 = vmatmul.mubr.bf16.gmra.mxu0 %v1720
        %v1756 = vpop.f32.mrf.mxu0
        %v1757 = vadd.f32 %v1689, %v1756
        %v1758 = vpop.f32.mrf.mxu0
        %v1759 = vpop.f32.mrf.mxu0
        %v1760 = vadd.f32 %v1692, %v1759
        %v1761 = vpop.f32.mrf.mxu0
        %1762 = vdwg.mxu0
        %v1763 = vld [vmem:[%s1011] sm:$0x1]
        %v1765 = vlaneseq
        %v1766 = vshrl.u32 %v1765, 7
        %v1767 = vsub.s32 0, %v1766
        %v1768 = vrot.slane %v1763, %v1767
        %v1770 = vadd.f32 %v1757, %v1768
        %v1771 = vadd.f32 %v1760, %v1768
        %v1772 = vadd.f32 %v1102, %v1770
        %v1773 = vadd.f32 %v1103, %v1771
        %v1774 = vld [vmem:[%s1014] sm:$0x1]
        %v1775 = vld [vmem:[%s848] sm:$0x1]
        %1776 = vadd.xlane.f32.xlu0 %v1772
        %v1777 = vpop.xlane.xlu0 %1776
        %1778 = vadd.xlane.f32.xlu0 %v1773
        %v1779 = vpop.xlane.xlu0 %1778
        %v1780 = vrcp.pop 128.0
        %v1781 = vmul.f32 %v1777, %v1780
        %v1782 = vmul.f32 %v1779, %v1780
        %v1783 = vsub.f32 %v1772, %v1781
        %v1784 = vsub.f32 %v1773, %v1782
        %v1785 = vmul.f32 %v1783, %v1783
        %v1786 = vmul.f32 %v1784, %v1784
        %1787 = vadd.xlane.f32.xlu0 %v1785
        %v1788 = vpop.xlane.xlu0 %1787
        %1789 = vadd.xlane.f32.xlu0 %v1786
        %v1790 = vpop.xlane.xlu0 %1789
        %v1791 = vmul.f32 %v1788, %v1780
        %v1792 = vmul.f32 %v1790, %v1780
        %v1793 = vadd.f32 %v1791, 1e-12
        %v1794 = vadd.f32 %v1792, 1e-12
        %v1795 = vrsqrt.pop %v1793
        %v1796 = vrsqrt.pop %v1794
        %v1797 = vmul.f32 %v1783, %v1795
        %v1798 = vmul.f32 %v1784, %v1796
        %v1800 = vlaneseq
        %v1801 = vshrl.u32 %v1800, 7
        %v1802 = vsub.s32 0, %v1801
        %v1803 = vrot.slane %v1774, %v1802
        %v1805 = vmul.f32 %v1797, %v1803
        %v1806 = vmul.f32 %v1798, %v1803
        %v1808 = vlaneseq
        %v1809 = vshrl.u32 %v1808, 7
        %v1810 = vsub.s32 0, %v1809
        %v1811 = vrot.slane %v1775, %v1810
        %v1813 = vadd.f32 %v1805, %v1811
        %v1814 = vadd.f32 %v1806, %v1811
        %v1815 = vpack.c.bf16 %v1814, %v1813
        %v1816 = vld [vmem:[%s857] sm:$0xff]
        %v1817 = vld [vmem:[%s857 + $0x8] sm:$0xff]
        %v1818 = vld [vmem:[%s857 + $0x10] sm:$0xff]
        %v1819 = vld [vmem:[%s857 + $0x18] sm:$0xff]
        %v1820 = vld [vmem:[%s857 + $0x20] sm:$0xff]
        %v1821 = vld [vmem:[%s857 + $0x28] sm:$0xff]
        %v1822 = vld [vmem:[%s857 + $0x30] sm:$0xff]
        %v1823 = vld [vmem:[%s857 + $0x38] sm:$0xff]
        %v1824 = vld [vmem:[%s857 + $0x40] sm:$0xff]
        %v1825 = vld [vmem:[%s857 + $0x48] sm:$0xff]
        %v1826 = vld [vmem:[%s857 + $0x50] sm:$0xff]
        %v1827 = vld [vmem:[%s857 + $0x58] sm:$0xff]
        %v1828 = vld [vmem:[%s857 + $0x60] sm:$0xff]
        %v1829 = vld [vmem:[%s857 + $0x68] sm:$0xff]
        %v1830 = vld [vmem:[%s857 + $0x70] sm:$0xff]
        %v1831 = vld [vmem:[%s857 + $0x78] sm:$0xff]
        %v1832 = vld [vmem:[%s857 + $0x80] sm:$0xff]
        %v1833 = vld [vmem:[%s857 + $0x88] sm:$0xff]
        %v1834 = vld [vmem:[%s857 + $0x90] sm:$0xff]
        %v1835 = vld [vmem:[%s857 + $0x98] sm:$0xff]
        %v1836 = vld [vmem:[%s857 + $0xa0] sm:$0xff]
        %v1837 = vld [vmem:[%s857 + $0xa8] sm:$0xff]
        %v1838 = vld [vmem:[%s857 + $0xb0] sm:$0xff]
        %v1839 = vld [vmem:[%s857 + $0xb8] sm:$0xff]
        %v1840 = vld [vmem:[%s857 + $0xc0] sm:$0xff]
        %v1841 = vld [vmem:[%s857 + $0xc8] sm:$0xff]
        %v1842 = vld [vmem:[%s857 + $0xd0] sm:$0xff]
        %v1843 = vld [vmem:[%s857 + $0xd8] sm:$0xff]
        %v1844 = vld [vmem:[%s857 + $0xe0] sm:$0xff]
        %v1845 = vld [vmem:[%s857 + $0xe8] sm:$0xff]
        %v1846 = vld [vmem:[%s857 + $0xf0] sm:$0xff]
        %v1847 = vld [vmem:[%s857 + $0xf8] sm:$0xff]
        %v1848 = vld [vmem:[%s866] sm:$0xf]
        %v1850 = vlaneseq
        %v1851 = vshrl.u32 %v1850, 7
        %v1852 = vsub.s32 0, %v1851
        %v1853 = vrot.slane %v1848, %v1852
        %v1854 = vlaneseq
        %v1855 = vshrl.u32 %v1854, 7
        %v1856 = vsub.s32 1, %v1855
        %v1857 = vrot.slane %v1848, %v1856
        %v1858 = vlaneseq
        %v1859 = vshrl.u32 %v1858, 7
        %v1860 = vsub.s32 2, %v1859
        %v1861 = vrot.slane %v1848, %v1860
        %v1862 = vlaneseq
        %v1863 = vshrl.u32 %v1862, 7
        %v1864 = vsub.s32 3, %v1863
        %v1865 = vrot.slane %v1848, %v1864
        %v1902 = vunpack.c.l.b16 %v1816
        %v1903 = vunpack.c.h.b16 %v1816
        %v1904 = vunpack.c.l.b16 %v1817
        %v1905 = vunpack.c.h.b16 %v1817
        %v1906 = vunpack.c.l.b16 %v1818
        %v1907 = vunpack.c.h.b16 %v1818
        %v1908 = vunpack.c.l.b16 %v1819
        %v1909 = vunpack.c.h.b16 %v1819
        %v1910 = vunpack.c.l.b16 %v1820
        %v1911 = vunpack.c.h.b16 %v1820
        %v1912 = vunpack.c.l.b16 %v1821
        %v1913 = vunpack.c.h.b16 %v1821
        %v1914 = vunpack.c.l.b16 %v1822
        %v1915 = vunpack.c.h.b16 %v1822
        %v1916 = vunpack.c.l.b16 %v1823
        %v1917 = vunpack.c.h.b16 %v1823
        %v1918 = vunpack.c.l.b16 %v1824
        %v1919 = vunpack.c.h.b16 %v1824
        %v1920 = vunpack.c.l.b16 %v1825
        %v1921 = vunpack.c.h.b16 %v1825
        %v1922 = vunpack.c.l.b16 %v1826
        %v1923 = vunpack.c.h.b16 %v1826
        %v1924 = vunpack.c.l.b16 %v1827
        %v1925 = vunpack.c.h.b16 %v1827
        %v1926 = vunpack.c.l.b16 %v1828
        %v1927 = vunpack.c.h.b16 %v1828
        %v1928 = vunpack.c.l.b16 %v1829
        %v1929 = vunpack.c.h.b16 %v1829
        %v1930 = vunpack.c.l.b16 %v1830
        %v1931 = vunpack.c.h.b16 %v1830
        %v1932 = vunpack.c.l.b16 %v1831
        %v1933 = vunpack.c.h.b16 %v1831
        %v1934 = vunpack.c.l.b16 %v1832
        %v1935 = vunpack.c.h.b16 %v1832
        %v1936 = vunpack.c.l.b16 %v1833
        %v1937 = vunpack.c.h.b16 %v1833
        %v1938 = vunpack.c.l.b16 %v1834
        %v1939 = vunpack.c.h.b16 %v1834
        %v1940 = vunpack.c.l.b16 %v1835
        %v1941 = vunpack.c.h.b16 %v1835
        %v1942 = vunpack.c.l.b16 %v1836
        %v1943 = vunpack.c.h.b16 %v1836
        %v1944 = vunpack.c.l.b16 %v1837
        %v1945 = vunpack.c.h.b16 %v1837
        %v1946 = vunpack.c.l.b16 %v1838
        %v1947 = vunpack.c.h.b16 %v1838
        %v1948 = vunpack.c.l.b16 %v1839
        %v1949 = vunpack.c.h.b16 %v1839
        %v1950 = vunpack.c.l.b16 %v1840
        %v1951 = vunpack.c.h.b16 %v1840
        %v1952 = vunpack.c.l.b16 %v1841
        %v1953 = vunpack.c.h.b16 %v1841
        %v1954 = vunpack.c.l.b16 %v1842
        %v1955 = vunpack.c.h.b16 %v1842
        %v1956 = vunpack.c.l.b16 %v1843
        %v1957 = vunpack.c.h.b16 %v1843
        %v1958 = vunpack.c.l.b16 %v1844
        %v1959 = vunpack.c.h.b16 %v1844
        %v1960 = vunpack.c.l.b16 %v1845
        %v1961 = vunpack.c.h.b16 %v1845
        %v1962 = vunpack.c.l.b16 %v1846
        %v1963 = vunpack.c.h.b16 %v1846
        %v1964 = vunpack.c.l.b16 %v1847
        %v1965 = vunpack.c.h.b16 %v1847
        %v1966 = vpack.c.b16 %v1906, %v1902
        %v1967 = vpack.c.b16 %v1907, %v1903
        %v1968 = vpack.c.b16 %v1908, %v1904
        %v1969 = vpack.c.b16 %v1909, %v1905
        %v1970 = vpack.c.b16 %v1914, %v1910
        %v1971 = vpack.c.b16 %v1915, %v1911
        %v1972 = vpack.c.b16 %v1916, %v1912
        %v1973 = vpack.c.b16 %v1917, %v1913
        %v1974 = vpack.c.b16 %v1922, %v1918
        %v1975 = vpack.c.b16 %v1923, %v1919
        %v1976 = vpack.c.b16 %v1924, %v1920
        %v1977 = vpack.c.b16 %v1925, %v1921
        %v1978 = vpack.c.b16 %v1930, %v1926
        %v1979 = vpack.c.b16 %v1931, %v1927
        %v1980 = vpack.c.b16 %v1932, %v1928
        %v1981 = vpack.c.b16 %v1933, %v1929
        %v1982 = vpack.c.b16 %v1938, %v1934
        %v1983 = vpack.c.b16 %v1939, %v1935
        %v1984 = vpack.c.b16 %v1940, %v1936
        %v1985 = vpack.c.b16 %v1941, %v1937
        %v1986 = vpack.c.b16 %v1946, %v1942
        %v1987 = vpack.c.b16 %v1947, %v1943
        %v1988 = vpack.c.b16 %v1948, %v1944
        %v1989 = vpack.c.b16 %v1949, %v1945
        %v1990 = vpack.c.b16 %v1954, %v1950
        %v1991 = vpack.c.b16 %v1955, %v1951
        %v1992 = vpack.c.b16 %v1956, %v1952
        %v1993 = vpack.c.b16 %v1957, %v1953
        %v1994 = vpack.c.b16 %v1962, %v1958
        %v1995 = vpack.c.b16 %v1963, %v1959
        %v1996 = vpack.c.b16 %v1964, %v1960
        %v1997 = vpack.c.b16 %v1965, %v1961
        %2030 = vmatprep.subr.bf16.mxu0 %v1995
        %2031 = vmatpush1.bf16.msra.mxu0 %v1994
        %2032 = vmatprep.subr.bf16.mxu0 %v1991
        %2033 = vmatpush1.bf16.msra.mxu0 %v1990
        %2034 = vmatprep.subr.bf16.mxu0 %v1987
        %2035 = vmatpush1.bf16.msra.mxu0 %v1986
        %2036 = vmatprep.subr.bf16.mxu0 %v1983
        %2037 = vmatpush1.bf16.msra.mxu0 %v1982
        %2038 = vmatprep.subr.bf16.mxu0 %v1979
        %2039 = vmatpush1.bf16.msra.mxu0 %v1978
        %2040 = vmatprep.subr.bf16.mxu0 %v1975
        %2041 = vmatpush1.bf16.msra.mxu0 %v1974
        %2042 = vmatprep.subr.bf16.mxu0 %v1971
        %2043 = vmatpush1.bf16.msra.mxu0 %v1970
        %2044 = vmatprep.subr.bf16.mxu0 %v1967
        %2045 = vmatpush1.bf16.msra.mxu0 %v1966
        %2046 = vmatprep.subr.bf16.mxu0 0
        %2047 = vmatpush2.bf16.msra.mxu0 0
        %2048 = vmatprep.subr.bf16.mxu0 0
        %2049 = vmatpush2.bf16.msra.mxu0 0
        %2050 = vmatprep.subr.bf16.mxu0 0
        %2051 = vmatpush2.bf16.msra.mxu0 0
        %2052 = vmatprep.subr.bf16.mxu0 0
        %2053 = vmatpush2.bf16.msra.mxu0 0
        %2054 = vmatprep.subr.bf16.mxu0 0
        %2055 = vmatpush2.bf16.msra.mxu0 0
        %2056 = vmatprep.subr.bf16.mxu0 0
        %2057 = vmatpush2.bf16.msra.mxu0 0
        %2058 = vmatprep.subr.bf16.mxu0 0
        %2059 = vmatpush2.bf16.msra.mxu0 0
        %2060 = vmatprep.subr.bf16.mxu0 0
        %2061 = vmatpush2.bf16.msra.mxu0 0
        %2062 = vmatprep.mubr.bf16.mxu0 0
        %2063 = vmatmul.mubr.bf16.gmra.mxu0 %v1815
        %v2064 = vpop.f32.mrf.mxu0
        %v2065 = vadd.f32 %v1853, %v2064
        %v2066 = vpop.f32.mrf.mxu0
        %v2067 = vadd.f32 %v1857, %v2066
        %v2068 = vpop.f32.mrf.mxu0
        %v2069 = vadd.f32 %v1853, %v2068
        %v2070 = vpop.f32.mrf.mxu0
        %v2071 = vadd.f32 %v1857, %v2070
        %2072 = vdwg.mxu0
        %2073 = vmatprep.subr.bf16.mxu0 %v1997
        %2074 = vmatpush1.bf16.msra.mxu0 %v1996
        %2075 = vmatprep.subr.bf16.mxu0 %v1993
        %2076 = vmatpush1.bf16.msra.mxu0 %v1992
        %2077 = vmatprep.subr.bf16.mxu0 %v1989
        %2078 = vmatpush1.bf16.msra.mxu0 %v1988
        %2079 = vmatprep.subr.bf16.mxu0 %v1985
        %2080 = vmatpush1.bf16.msra.mxu0 %v1984
        %2081 = vmatprep.subr.bf16.mxu0 %v1981
        %2082 = vmatpush1.bf16.msra.mxu0 %v1980
        %2083 = vmatprep.subr.bf16.mxu0 %v1977
        %2084 = vmatpush1.bf16.msra.mxu0 %v1976
        %2085 = vmatprep.subr.bf16.mxu0 %v1973
        %2086 = vmatpush1.bf16.msra.mxu0 %v1972
        %2087 = vmatprep.subr.bf16.mxu0 %v1969
        %2088 = vmatpush1.bf16.msra.mxu0 %v1968
        %2089 = vmatprep.subr.bf16.mxu0 0
        %2090 = vmatpush2.bf16.msra.mxu0 0
        %2091 = vmatprep.subr.bf16.mxu0 0
        %2092 = vmatpush2.bf16.msra.mxu0 0
        %2093 = vmatprep.subr.bf16.mxu0 0
        %2094 = vmatpush2.bf16.msra.mxu0 0
        %2095 = vmatprep.subr.bf16.mxu0 0
        %2096 = vmatpush2.bf16.msra.mxu0 0
        %2097 = vmatprep.subr.bf16.mxu0 0
        %2098 = vmatpush2.bf16.msra.mxu0 0
        %2099 = vmatprep.subr.bf16.mxu0 0
        %2100 = vmatpush2.bf16.msra.mxu0 0
        %2101 = vmatprep.subr.bf16.mxu0 0
        %2102 = vmatpush2.bf16.msra.mxu0 0
        %2103 = vmatprep.subr.bf16.mxu0 0
        %2104 = vmatpush2.bf16.msra.mxu0 0
        %2105 = vmatprep.mubr.bf16.mxu0 0
        %2106 = vmatmul.mubr.bf16.gmra.mxu0 %v1815
        %v2107 = vpop.f32.mrf.mxu0
        %v2108 = vadd.f32 %v1861, %v2107
        %v2109 = vpop.f32.mrf.mxu0
        %v2110 = vadd.f32 %v1865, %v2109
        %v2111 = vpop.f32.mrf.mxu0
        %v2112 = vadd.f32 %v1861, %v2111
        %v2113 = vpop.f32.mrf.mxu0
        %v2114 = vadd.f32 %v1865, %v2113
        %2115 = vdwg.mxu0
        %v2116 = vmul.f32 %v2065, 0.5
        %v2117 = vmul.f32 %v2067, 0.5
        %v2118 = vmul.f32 %v2108, 0.5
        %v2119 = vmul.f32 %v2110, 0.5
        %v2120 = vmul.f32 %v2069, 0.5
        %v2121 = vmul.f32 %v2071, 0.5
        %v2122 = vmul.f32 %v2112, 0.5
        %v2123 = vmul.f32 %v2114, 0.5
        %v2124 = vmul.f32 %v2065, 0.044715
        %v2125 = vmul.f32 %v2067, 0.044715
        %v2126 = vmul.f32 %v2108, 0.044715
        %v2127 = vmul.f32 %v2110, 0.044715
        %v2128 = vmul.f32 %v2069, 0.044715
        %v2129 = vmul.f32 %v2071, 0.044715
        %v2130 = vmul.f32 %v2112, 0.044715
        %v2131 = vmul.f32 %v2114, 0.044715
        %v2132 = vmul.f32 %v2124, %v2065
        %v2133 = vmul.f32 %v2125, %v2067
        %v2134 = vmul.f32 %v2126, %v2108
        %v2135 = vmul.f32 %v2127, %v2110
        %v2136 = vmul.f32 %v2128, %v2069
        %v2137 = vmul.f32 %v2129, %v2071
        %v2138 = vmul.f32 %v2130, %v2112
        %v2139 = vmul.f32 %v2131, %v2114
        %v2140 = vmul.f32 %v2132, %v2065
        %v2141 = vmul.f32 %v2133, %v2067
        %v2142 = vmul.f32 %v2134, %v2108
        %v2143 = vmul.f32 %v2135, %v2110
        %v2144 = vmul.f32 %v2136, %v2069
        %v2145 = vmul.f32 %v2137, %v2071
        %v2146 = vmul.f32 %v2138, %v2112
        %v2147 = vmul.f32 %v2139, %v2114
        %v2148 = vadd.f32 %v2065, %v2140
        %v2149 = vadd.f32 %v2067, %v2141
        %v2150 = vadd.f32 %v2108, %v2142
        %v2151 = vadd.f32 %v2110, %v2143
        %v2152 = vadd.f32 %v2069, %v2144
        %v2153 = vadd.f32 %v2071, %v2145
        %v2154 = vadd.f32 %v2112, %v2146
        %v2155 = vadd.f32 %v2114, %v2147
        %v2156 = vmul.f32 %v2148, 0.7978846
        %v2157 = vmul.f32 %v2149, 0.7978846
        %v2158 = vmul.f32 %v2150, 0.7978846
        %v2159 = vmul.f32 %v2151, 0.7978846
        %v2160 = vmul.f32 %v2152, 0.7978846
        %v2161 = vmul.f32 %v2153, 0.7978846
        %v2162 = vmul.f32 %v2154, 0.7978846
        %v2163 = vmul.f32 %v2155, 0.7978846
        %v2164 = vtanh.pop %v2156
        %v2165 = vtanh.pop %v2157
        %v2166 = vtanh.pop %v2158
        %v2167 = vtanh.pop %v2159
        %v2168 = vtanh.pop %v2160
        %v2169 = vtanh.pop %v2161
        %v2170 = vtanh.pop %v2162
        %v2171 = vtanh.pop %v2163
        %v2172 = vadd.f32 %v2164, 1.0
        %v2173 = vadd.f32 %v2165, 1.0
        %v2174 = vadd.f32 %v2166, 1.0
        %v2175 = vadd.f32 %v2167, 1.0
        %v2176 = vadd.f32 %v2168, 1.0
        %v2177 = vadd.f32 %v2169, 1.0
        %v2178 = vadd.f32 %v2170, 1.0
        %v2179 = vadd.f32 %v2171, 1.0
        %v2180 = vmul.f32 %v2116, %v2172
        %v2181 = vmul.f32 %v2117, %v2173
        %v2182 = vmul.f32 %v2118, %v2174
        %v2183 = vmul.f32 %v2119, %v2175
        %v2184 = vmul.f32 %v2120, %v2176
        %v2185 = vmul.f32 %v2121, %v2177
        %v2186 = vmul.f32 %v2122, %v2178
        %v2187 = vmul.f32 %v2123, %v2179
        %v2188 = vpack.c.bf16 %v2184, %v2180
        %v2189 = vpack.c.bf16 %v2185, %v2181
        %v2190 = vpack.c.bf16 %v2186, %v2182
        %v2191 = vpack.c.bf16 %v2187, %v2183
        %v2192 = vld [vmem:[%s875] sm:$0xf]
        %v2193 = vld [vmem:[%s875 + $0x4] sm:$0xf]
        %v2194 = vld [vmem:[%s875 + $0x8] sm:$0xf]
        %v2195 = vld [vmem:[%s875 + $0xc] sm:$0xf]
        %v2196 = vld [vmem:[%s875 + $0x10] sm:$0xf]
        %v2197 = vld [vmem:[%s875 + $0x14] sm:$0xf]
        %v2198 = vld [vmem:[%s875 + $0x18] sm:$0xf]
        %v2199 = vld [vmem:[%s875 + $0x1c] sm:$0xf]
        %v2200 = vld [vmem:[%s875 + $0x20] sm:$0xf]
        %v2201 = vld [vmem:[%s875 + $0x24] sm:$0xf]
        %v2202 = vld [vmem:[%s875 + $0x28] sm:$0xf]
        %v2203 = vld [vmem:[%s875 + $0x2c] sm:$0xf]
        %v2204 = vld [vmem:[%s875 + $0x30] sm:$0xf]
        %v2205 = vld [vmem:[%s875 + $0x34] sm:$0xf]
        %v2206 = vld [vmem:[%s875 + $0x38] sm:$0xf]
        %v2207 = vld [vmem:[%s875 + $0x3c] sm:$0xf]
        %v2208 = vld [vmem:[%s875 + $0x40] sm:$0xf]
        %v2209 = vld [vmem:[%s875 + $0x44] sm:$0xf]
        %v2210 = vld [vmem:[%s875 + $0x48] sm:$0xf]
        %v2211 = vld [vmem:[%s875 + $0x4c] sm:$0xf]
        %v2212 = vld [vmem:[%s875 + $0x50] sm:$0xf]
        %v2213 = vld [vmem:[%s875 + $0x54] sm:$0xf]
        %v2214 = vld [vmem:[%s875 + $0x58] sm:$0xf]
        %v2215 = vld [vmem:[%s875 + $0x5c] sm:$0xf]
        %v2216 = vld [vmem:[%s875 + $0x60] sm:$0xf]
        %v2217 = vld [vmem:[%s875 + $0x64] sm:$0xf]
        %v2218 = vld [vmem:[%s875 + $0x68] sm:$0xf]
        %v2219 = vld [vmem:[%s875 + $0x6c] sm:$0xf]
        %v2220 = vld [vmem:[%s875 + $0x70] sm:$0xf]
        %v2221 = vld [vmem:[%s875 + $0x74] sm:$0xf]
        %v2222 = vld [vmem:[%s875 + $0x78] sm:$0xf]
        %v2223 = vld [vmem:[%s875 + $0x7c] sm:$0xf]
        %v2224 = vld [vmem:[%s875 + $0x80] sm:$0xf]
        %v2225 = vld [vmem:[%s875 + $0x84] sm:$0xf]
        %v2226 = vld [vmem:[%s875 + $0x88] sm:$0xf]
        %v2227 = vld [vmem:[%s875 + $0x8c] sm:$0xf]
        %v2228 = vld [vmem:[%s875 + $0x90] sm:$0xf]
        %v2229 = vld [vmem:[%s875 + $0x94] sm:$0xf]
        %v2230 = vld [vmem:[%s875 + $0x98] sm:$0xf]
        %v2231 = vld [vmem:[%s875 + $0x9c] sm:$0xf]
        %v2232 = vld [vmem:[%s875 + $0xa0] sm:$0xf]
        %v2233 = vld [vmem:[%s875 + $0xa4] sm:$0xf]
        %v2234 = vld [vmem:[%s875 + $0xa8] sm:$0xf]
        %v2235 = vld [vmem:[%s875 + $0xac] sm:$0xf]
        %v2236 = vld [vmem:[%s875 + $0xb0] sm:$0xf]
        %v2237 = vld [vmem:[%s875 + $0xb4] sm:$0xf]
        %v2238 = vld [vmem:[%s875 + $0xb8] sm:$0xf]
        %v2239 = vld [vmem:[%s875 + $0xbc] sm:$0xf]
        %v2240 = vld [vmem:[%s875 + $0xc0] sm:$0xf]
        %v2241 = vld [vmem:[%s875 + $0xc4] sm:$0xf]
        %v2242 = vld [vmem:[%s875 + $0xc8] sm:$0xf]
        %v2243 = vld [vmem:[%s875 + $0xcc] sm:$0xf]
        %v2244 = vld [vmem:[%s875 + $0xd0] sm:$0xf]
        %v2245 = vld [vmem:[%s875 + $0xd4] sm:$0xf]
        %v2246 = vld [vmem:[%s875 + $0xd8] sm:$0xf]
        %v2247 = vld [vmem:[%s875 + $0xdc] sm:$0xf]
        %v2248 = vld [vmem:[%s875 + $0xe0] sm:$0xf]
        %v2249 = vld [vmem:[%s875 + $0xe4] sm:$0xf]
        %v2250 = vld [vmem:[%s875 + $0xe8] sm:$0xf]
        %v2251 = vld [vmem:[%s875 + $0xec] sm:$0xf]
        %v2252 = vld [vmem:[%s875 + $0xf0] sm:$0xf]
        %v2253 = vld [vmem:[%s875 + $0xf4] sm:$0xf]
        %v2254 = vld [vmem:[%s875 + $0xf8] sm:$0xf]
        %v2255 = vld [vmem:[%s875 + $0xfc] sm:$0xf]
        %v2256 = vld [vmem:[%s883] sm:$0x1]
        %v2258 = vlaneseq
        %v2259 = vshrl.u32 %v2258, 7
        %v2260 = vsub.s32 0, %v2259
        %v2261 = vrot.slane %v2256, %v2260
        %v2327 = vunpack.c.l.b16 %v2192
        %v2328 = vunpack.c.l.b16 %v2193
        %v2329 = vunpack.c.l.b16 %v2194
        %v2330 = vunpack.c.l.b16 %v2195
        %v2331 = vunpack.c.l.b16 %v2196
        %v2332 = vunpack.c.l.b16 %v2197
        %v2333 = vunpack.c.l.b16 %v2198
        %v2334 = vunpack.c.l.b16 %v2199
        %v2335 = vunpack.c.l.b16 %v2200
        %v2336 = vunpack.c.l.b16 %v2201
        %v2337 = vunpack.c.l.b16 %v2202
        %v2338 = vunpack.c.l.b16 %v2203
        %v2339 = vunpack.c.l.b16 %v2204
        %v2340 = vunpack.c.l.b16 %v2205
        %v2341 = vunpack.c.l.b16 %v2206
        %v2342 = vunpack.c.l.b16 %v2207
        %v2343 = vunpack.c.l.b16 %v2208
        %v2344 = vunpack.c.l.b16 %v2209
        %v2345 = vunpack.c.l.b16 %v2210
        %v2346 = vunpack.c.l.b16 %v2211
        %v2347 = vunpack.c.l.b16 %v2212
        %v2348 = vunpack.c.l.b16 %v2213
        %v2349 = vunpack.c.l.b16 %v2214
        %v2350 = vunpack.c.l.b16 %v2215
        %v2351 = vunpack.c.l.b16 %v2216
        %v2352 = vunpack.c.l.b16 %v2217
        %v2353 = vunpack.c.l.b16 %v2218
        %v2354 = vunpack.c.l.b16 %v2219
        %v2355 = vunpack.c.l.b16 %v2220
        %v2356 = vunpack.c.l.b16 %v2221
        %v2357 = vunpack.c.l.b16 %v2222
        %v2358 = vunpack.c.l.b16 %v2223
        %v2359 = vunpack.c.l.b16 %v2224
        %v2360 = vunpack.c.l.b16 %v2225
        %v2361 = vunpack.c.l.b16 %v2226
        %v2362 = vunpack.c.l.b16 %v2227
        %v2363 = vunpack.c.l.b16 %v2228
        %v2364 = vunpack.c.l.b16 %v2229
        %v2365 = vunpack.c.l.b16 %v2230
        %v2366 = vunpack.c.l.b16 %v2231
        %v2367 = vunpack.c.l.b16 %v2232
        %v2368 = vunpack.c.l.b16 %v2233
        %v2369 = vunpack.c.l.b16 %v2234
        %v2370 = vunpack.c.l.b16 %v2235
        %v2371 = vunpack.c.l.b16 %v2236
        %v2372 = vunpack.c.l.b16 %v2237
        %v2373 = vunpack.c.l.b16 %v2238
        %v2374 = vunpack.c.l.b16 %v2239
        %v2375 = vunpack.c.l.b16 %v2240
        %v2376 = vunpack.c.l.b16 %v2241
        %v2377 = vunpack.c.l.b16 %v2242
        %v2378 = vunpack.c.l.b16 %v2243
        %v2379 = vunpack.c.l.b16 %v2244
        %v2380 = vunpack.c.l.b16 %v2245
        %v2381 = vunpack.c.l.b16 %v2246
        %v2382 = vunpack.c.l.b16 %v2247
        %v2383 = vunpack.c.l.b16 %v2248
        %v2384 = vunpack.c.l.b16 %v2249
        %v2385 = vunpack.c.l.b16 %v2250
        %v2386 = vunpack.c.l.b16 %v2251
        %v2387 = vunpack.c.l.b16 %v2252
        %v2388 = vunpack.c.l.b16 %v2253
        %v2389 = vunpack.c.l.b16 %v2254
        %v2390 = vunpack.c.l.b16 %v2255
        %v2391 = vpack.c.b16 %v2328, %v2327
        %v2392 = vpack.c.b16 %v2330, %v2329
        %v2393 = vpack.c.b16 %v2332, %v2331
        %v2394 = vpack.c.b16 %v2334, %v2333
        %v2395 = vpack.c.b16 %v2336, %v2335
        %v2396 = vpack.c.b16 %v2338, %v2337
        %v2397 = vpack.c.b16 %v2340, %v2339
        %v2398 = vpack.c.b16 %v2342, %v2341
        %v2399 = vpack.c.b16 %v2344, %v2343
        %v2400 = vpack.c.b16 %v2346, %v2345
        %v2401 = vpack.c.b16 %v2348, %v2347
        %v2402 = vpack.c.b16 %v2350, %v2349
        %v2403 = vpack.c.b16 %v2352, %v2351
        %v2404 = vpack.c.b16 %v2354, %v2353
        %v2405 = vpack.c.b16 %v2356, %v2355
        %v2406 = vpack.c.b16 %v2358, %v2357
        %v2407 = vpack.c.b16 %v2360, %v2359
        %v2408 = vpack.c.b16 %v2362, %v2361
        %v2409 = vpack.c.b16 %v2364, %v2363
        %v2410 = vpack.c.b16 %v2366, %v2365
        %v2411 = vpack.c.b16 %v2368, %v2367
        %v2412 = vpack.c.b16 %v2370, %v2369
        %v2413 = vpack.c.b16 %v2372, %v2371
        %v2414 = vpack.c.b16 %v2374, %v2373
        %v2415 = vpack.c.b16 %v2376, %v2375
        %v2416 = vpack.c.b16 %v2378, %v2377
        %v2417 = vpack.c.b16 %v2380, %v2379
        %v2418 = vpack.c.b16 %v2382, %v2381
        %v2419 = vpack.c.b16 %v2384, %v2383
        %v2420 = vpack.c.b16 %v2386, %v2385
        %v2421 = vpack.c.b16 %v2388, %v2387
        %v2422 = vpack.c.b16 %v2390, %v2389
        %2455 = vmatprep.subr.bf16.mxu0 0
        %2456 = vmatpush1.bf16.msra.mxu0 %v2398
        %2457 = vmatprep.subr.bf16.mxu0 0
        %2458 = vmatpush1.bf16.msra.mxu0 %v2397
        %2459 = vmatprep.subr.bf16.mxu0 0
        %2460 = vmatpush1.bf16.msra.mxu0 %v2396
        %2461 = vmatprep.subr.bf16.mxu0 0
        %2462 = vmatpush1.bf16.msra.mxu0 %v2395
        %2463 = vmatprep.subr.bf16.mxu0 0
        %2464 = vmatpush1.bf16.msra.mxu0 %v2394
        %2465 = vmatprep.subr.bf16.mxu0 0
        %2466 = vmatpush1.bf16.msra.mxu0 %v2393
        %2467 = vmatprep.subr.bf16.mxu0 0
        %2468 = vmatpush1.bf16.msra.mxu0 %v2392
        %2469 = vmatprep.subr.bf16.mxu0 0
        %2470 = vmatpush1.bf16.msra.mxu0 %v2391
        %2471 = vmatprep.subr.bf16.mxu0 0
        %2472 = vmatpush2.bf16.msra.mxu0 %v2406
        %2473 = vmatprep.subr.bf16.mxu0 0
        %2474 = vmatpush2.bf16.msra.mxu0 %v2405
        %2475 = vmatprep.subr.bf16.mxu0 0
        %2476 = vmatpush2.bf16.msra.mxu0 %v2404
        %2477 = vmatprep.subr.bf16.mxu0 0
        %2478 = vmatpush2.bf16.msra.mxu0 %v2403
        %2479 = vmatprep.subr.bf16.mxu0 0
        %2480 = vmatpush2.bf16.msra.mxu0 %v2402
        %2481 = vmatprep.subr.bf16.mxu0 0
        %2482 = vmatpush2.bf16.msra.mxu0 %v2401
        %2483 = vmatprep.subr.bf16.mxu0 0
        %2484 = vmatpush2.bf16.msra.mxu0 %v2400
        %2485 = vmatprep.subr.bf16.mxu0 0
        %2486 = vmatpush2.bf16.msra.mxu0 %v2399
        %2487 = vmatprep.mubr.bf16.mxu0 %v2189
        %2488 = vmatmul.mubr.bf16.gmra.mxu0 %v2188
        %v2489 = vpop.f32.mrf.mxu0
        %v2490 = vadd.f32 %v2261, %v2489
        %v2491 = vpop.f32.mrf.mxu0
        %v2492 = vpop.f32.mrf.mxu0
        %v2493 = vadd.f32 %v2261, %v2492
        %v2494 = vpop.f32.mrf.mxu0
        %2495 = vdwg.mxu0
        %2496 = vmatprep.subr.bf16.mxu0 0
        %2497 = vmatpush1.bf16.msra.mxu0 %v2414
        %2498 = vmatprep.subr.bf16.mxu0 0
        %2499 = vmatpush1.bf16.msra.mxu0 %v2413
        %2500 = vmatprep.subr.bf16.mxu0 0
        %2501 = vmatpush1.bf16.msra.mxu0 %v2412
        %2502 = vmatprep.subr.bf16.mxu0 0
        %2503 = vmatpush1.bf16.msra.mxu0 %v2411
        %2504 = vmatprep.subr.bf16.mxu0 0
        %2505 = vmatpush1.bf16.msra.mxu0 %v2410
        %2506 = vmatprep.subr.bf16.mxu0 0
        %2507 = vmatpush1.bf16.msra.mxu0 %v2409
        %2508 = vmatprep.subr.bf16.mxu0 0
        %2509 = vmatpush1.bf16.msra.mxu0 %v2408
        %2510 = vmatprep.subr.bf16.mxu0 0
        %2511 = vmatpush1.bf16.msra.mxu0 %v2407
        %2512 = vmatprep.subr.bf16.mxu0 0
        %2513 = vmatpush2.bf16.msra.mxu0 %v2422
        %2514 = vmatprep.subr.bf16.mxu0 0
        %2515 = vmatpush2.bf16.msra.mxu0 %v2421
        %2516 = vmatprep.subr.bf16.mxu0 0
        %2517 = vmatpush2.bf16.msra.mxu0 %v2420
        %2518 = vmatprep.subr.bf16.mxu0 0
        %2519 = vmatpush2.bf16.msra.mxu0 %v2419
        %2520 = vmatprep.subr.bf16.mxu0 0
        %2521 = vmatpush2.bf16.msra.mxu0 %v2418
        %2522 = vmatprep.subr.bf16.mxu0 0
        %2523 = vmatpush2.bf16.msra.mxu0 %v2417
        %2524 = vmatprep.subr.bf16.mxu0 0
        %2525 = vmatpush2.bf16.msra.mxu0 %v2416
        %2526 = vmatprep.subr.bf16.mxu0 0
        %2527 = vmatpush2.bf16.msra.mxu0 %v2415
        %2528 = vmatprep.mubr.bf16.mxu0 %v2191
        %2529 = vmatmul.mubr.bf16.gmra.mxu0 %v2190
        %v2530 = vpop.f32.mrf.mxu0
        %v2531 = vadd.f32 %v2490, %v2530
        %v2532 = vpop.f32.mrf.mxu0
        %v2533 = vpop.f32.mrf.mxu0
        %v2534 = vadd.f32 %v2493, %v2533
        %v2535 = vpop.f32.mrf.mxu0
        %2536 = vdwg.mxu0
        %v2537 = vadd.f32 %v1813, %v2531
        %v2538 = vadd.f32 %v1814, %v2534
        %v2539 = vld [vmem:[%s1017] sm:$0x1]
        %v2540 = vld [vmem:[%s891] sm:$0x1]
        %2541 = vadd.xlane.f32.xlu0 %v2537
        %v2542 = vpop.xlane.xlu0 %2541
        %2543 = vadd.xlane.f32.xlu0 %v2538
        %v2544 = vpop.xlane.xlu0 %2543
        %v2545 = vmul.f32 %v2542, %v1780
        %v2546 = vmul.f32 %v2544, %v1780
        %v2547 = vsub.f32 %v2537, %v2545
        %v2548 = vsub.f32 %v2538, %v2546
        %v2549 = vmul.f32 %v2547, %v2547
        %v2550 = vmul.f32 %v2548, %v2548
        %2551 = vadd.xlane.f32.xlu0 %v2549
        %v2552 = vpop.xlane.xlu0 %2551
        %2553 = vadd.xlane.f32.xlu0 %v2550
        %v2554 = vpop.xlane.xlu0 %2553
        %v2555 = vmul.f32 %v2552, %v1780
        %v2556 = vmul.f32 %v2554, %v1780
        %v2557 = vadd.f32 %v2555, 1e-12
        %v2558 = vadd.f32 %v2556, 1e-12
        %v2559 = vrsqrt.pop %v2557
        %v2560 = vrsqrt.pop %v2558
        %v2561 = vmul.f32 %v2547, %v2559
        %v2562 = vmul.f32 %v2548, %v2560
        %v2564 = vlaneseq
        %v2565 = vshrl.u32 %v2564, 7
        %v2566 = vsub.s32 0, %v2565
        %v2567 = vrot.slane %v2539, %v2566
        %v2569 = vmul.f32 %v2561, %v2567
        %v2570 = vmul.f32 %v2562, %v2567
        %v2572 = vlaneseq
        %v2573 = vshrl.u32 %v2572, 7
        %v2574 = vsub.s32 0, %v2573
        %v2575 = vrot.slane %v2540, %v2574
        %v2577 = vadd.f32 %v2569, %v2575
        %v2578 = vadd.f32 %v2570, %v2575
        %2579 = vst [vmem:[#allocation2] sm:$0xff] %v2577
        %2580 = vst [vmem:[#allocation2 + $0x8] sm:$0xff] %v2578
        %p2581 = scmp.eq.s32.totalorder %s36, 1
        // Predicated region
        $region157: #{bert_classifier_forward.1} parent=107 // pred_check
          %p2582 = pneg %p2581
        $region158: #{bert_classifier_forward.1} parent=107 // pred_check_branch
          %2584 = sbr.rel (%p2582) target = $region160
        $region159: #{bert_classifier_forward.1} parent=107 // pred_region
          %v2585 = vpack.c.bf16 %v2578, %v2577
          %v2586 = vld [vmem:[%s18] sm:$0xf]
          %v2587 = vld [vmem:[%s18 + $0x4] sm:$0xf]
          %v2588 = vld [vmem:[%s18 + $0x8] sm:$0xf]
          %v2589 = vld [vmem:[%s18 + $0xc] sm:$0xf]
          %v2590 = vld [vmem:[%s18 + $0x10] sm:$0xf]
          %v2591 = vld [vmem:[%s18 + $0x14] sm:$0xf]
          %v2592 = vld [vmem:[%s18 + $0x18] sm:$0xf]
          %v2593 = vld [vmem:[%s18 + $0x1c] sm:$0xf]
          %v2594 = vld [vmem:[%s18 + $0x20] sm:$0xf]
          %v2595 = vld [vmem:[%s18 + $0x24] sm:$0xf]
          %v2596 = vld [vmem:[%s18 + $0x28] sm:$0xf]
          %v2597 = vld [vmem:[%s18 + $0x2c] sm:$0xf]
          %v2598 = vld [vmem:[%s18 + $0x30] sm:$0xf]
          %v2599 = vld [vmem:[%s18 + $0x34] sm:$0xf]
          %v2600 = vld [vmem:[%s18 + $0x38] sm:$0xf]
          %v2601 = vld [vmem:[%s18 + $0x3c] sm:$0xf]
          %v2602 = vld [vmem:[#allocation14] sm:$0x1]
          %v2604 = vlaneseq
          %v2605 = vshrl.u32 %v2604, 7
          %v2606 = vsub.s32 0, %v2605
          %v2607 = vrot.slane %v2602, %v2606
          %v2625 = vunpack.c.l.b16 %v2586
          %v2626 = vunpack.c.l.b16 %v2587
          %v2627 = vunpack.c.l.b16 %v2588
          %v2628 = vunpack.c.l.b16 %v2589
          %v2629 = vunpack.c.l.b16 %v2590
          %v2630 = vunpack.c.l.b16 %v2591
          %v2631 = vunpack.c.l.b16 %v2592
          %v2632 = vunpack.c.l.b16 %v2593
          %v2633 = vunpack.c.l.b16 %v2594
          %v2634 = vunpack.c.l.b16 %v2595
          %v2635 = vunpack.c.l.b16 %v2596
          %v2636 = vunpack.c.l.b16 %v2597
          %v2637 = vunpack.c.l.b16 %v2598
          %v2638 = vunpack.c.l.b16 %v2599
          %v2639 = vunpack.c.l.b16 %v2600
          %v2640 = vunpack.c.l.b16 %v2601
          %v2641 = vpack.c.b16 %v2626, %v2625
          %v2642 = vpack.c.b16 %v2628, %v2627
          %v2643 = vpack.c.b16 %v2630, %v2629
          %v2644 = vpack.c.b16 %v2632, %v2631
          %v2645 = vpack.c.b16 %v2634, %v2633
          %v2646 = vpack.c.b16 %v2636, %v2635
          %v2647 = vpack.c.b16 %v2638, %v2637
          %v2648 = vpack.c.b16 %v2640, %v2639
          %2657 = vmatprep.subr.bf16.mxu0 0
          %2658 = vmatpush1.bf16.msra.mxu0 %v2648
          %2659 = vmatprep.subr.bf16.mxu0 0
          %2660 = vmatpush1.bf16.msra.mxu0 %v2647
          %2661 = vmatprep.subr.bf16.mxu0 0
          %2662 = vmatpush1.bf16.msra.mxu0 %v2646
          %2663 = vmatprep.subr.bf16.mxu0 0
          %2664 = vmatpush1.bf16.msra.mxu0 %v2645
          %2665 = vmatprep.subr.bf16.mxu0 0
          %2666 = vmatpush1.bf16.msra.mxu0 %v2644
          %2667 = vmatprep.subr.bf16.mxu0 0
          %2668 = vmatpush1.bf16.msra.mxu0 %v2643
          %2669 = vmatprep.subr.bf16.mxu0 0
          %2670 = vmatpush1.bf16.msra.mxu0 %v2642
          %2671 = vmatprep.subr.bf16.mxu0 0
          %2672 = vmatpush1.bf16.msra.mxu0 %v2641
          %2673 = vmatprep.subr.bf16.mxu0 0
          %2674 = vmatpush2.bf16.msra.mxu0 0
          %2675 = vmatprep.subr.bf16.mxu0 0
          %2676 = vmatpush2.bf16.msra.mxu0 0
          %2677 = vmatprep.subr.bf16.mxu0 0
          %2678 = vmatpush2.bf16.msra.mxu0 0
          %2679 = vmatprep.subr.bf16.mxu0 0
          %2680 = vmatpush2.bf16.msra.mxu0 0
          %2681 = vmatprep.subr.bf16.mxu0 0
          %2682 = vmatpush2.bf16.msra.mxu0 0
          %2683 = vmatprep.subr.bf16.mxu0 0
          %2684 = vmatpush2.bf16.msra.mxu0 0
          %2685 = vmatprep.subr.bf16.mxu0 0
          %2686 = vmatpush2.bf16.msra.mxu0 0
          %2687 = vmatprep.subr.bf16.mxu0 0
          %2688 = vmatpush2.bf16.msra.mxu0 0
          %2689 = vmatprep.mubr.bf16.mxu0 0
          %2690 = vmatmul.mubr.bf16.gmra.mxu0 %v2585
          %v2691 = vpop.f32.mrf.mxu0
          %v2692 = vadd.f32 %v2607, %v2691
          %v2693 = vpop.f32.mrf.mxu0
          %v2694 = vpop.f32.mrf.mxu0
          %v2695 = vadd.f32 %v2607, %v2694
          %v2696 = vpop.f32.mrf.mxu0
          %2697 = vdwg.mxu0
          %v2698 = vmax.f32 %v2692, 0.0
          %v2699 = vmax.f32 %v2695, 0.0
          %v2700 = vpack.c.bf16 %v2699, %v2698
          %v2701 = vld [vmem:[%s20] sm:$0xf]
          %v2702 = vld [vmem:[%s20 + $0x4] sm:$0xf]
          %v2703 = vld [vmem:[%s20 + $0x8] sm:$0xf]
          %v2704 = vld [vmem:[%s20 + $0xc] sm:$0xf]
          %v2705 = vld [vmem:[%s20 + $0x10] sm:$0xf]
          %v2706 = vld [vmem:[%s20 + $0x14] sm:$0xf]
          %v2707 = vld [vmem:[%s20 + $0x18] sm:$0xf]
          %v2708 = vld [vmem:[%s20 + $0x1c] sm:$0xf]
          %v2709 = vld [vmem:[%s20 + $0x20] sm:$0xf]
          %v2710 = vld [vmem:[%s20 + $0x24] sm:$0xf]
          %v2711 = vld [vmem:[%s20 + $0x28] sm:$0xf]
          %v2712 = vld [vmem:[%s20 + $0x2c] sm:$0xf]
          %v2713 = vld [vmem:[%s20 + $0x30] sm:$0xf]
          %v2714 = vld [vmem:[%s20 + $0x34] sm:$0xf]
          %v2715 = vld [vmem:[%s20 + $0x38] sm:$0xf]
          %v2716 = vld [vmem:[%s20 + $0x3c] sm:$0xf]
          %v2717 = vld [vmem:[#allocation15] sm:$0x1]
          %v2719 = vlaneseq
          %v2720 = vshrl.u32 %v2719, 7
          %v2721 = vsub.s32 0, %v2720
          %v2722 = vrot.slane %v2717, %v2721
          %v2740 = vunpack.c.l.b16 %v2701
          %v2741 = vunpack.c.l.b16 %v2702
          %v2742 = vunpack.c.l.b16 %v2703
          %v2743 = vunpack.c.l.b16 %v2704
          %v2744 = vunpack.c.l.b16 %v2705
          %v2745 = vunpack.c.l.b16 %v2706
          %v2746 = vunpack.c.l.b16 %v2707
          %v2747 = vunpack.c.l.b16 %v2708
          %v2748 = vunpack.c.l.b16 %v2709
          %v2749 = vunpack.c.l.b16 %v2710
          %v2750 = vunpack.c.l.b16 %v2711
          %v2751 = vunpack.c.l.b16 %v2712
          %v2752 = vunpack.c.l.b16 %v2713
          %v2753 = vunpack.c.l.b16 %v2714
          %v2754 = vunpack.c.l.b16 %v2715
          %v2755 = vunpack.c.l.b16 %v2716
          %v2756 = vpack.c.b16 %v2741, %v2740
          %v2757 = vpack.c.b16 %v2743, %v2742
          %v2758 = vpack.c.b16 %v2745, %v2744
          %v2759 = vpack.c.b16 %v2747, %v2746
          %v2760 = vpack.c.b16 %v2749, %v2748
          %v2761 = vpack.c.b16 %v2751, %v2750
          %v2762 = vpack.c.b16 %v2753, %v2752
          %v2763 = vpack.c.b16 %v2755, %v2754
          %2772 = vmatprep.subr.bf16.mxu0 0
          %2773 = vmatpush1.bf16.msra.mxu0 %v2763
          %2774 = vmatprep.subr.bf16.mxu0 0
          %2775 = vmatpush1.bf16.msra.mxu0 %v2762
          %2776 = vmatprep.subr.bf16.mxu0 0
          %2777 = vmatpush1.bf16.msra.mxu0 %v2761
          %2778 = vmatprep.subr.bf16.mxu0 0
          %2779 = vmatpush1.bf16.msra.mxu0 %v2760
          %2780 = vmatprep.subr.bf16.mxu0 0
          %2781 = vmatpush1.bf16.msra.mxu0 %v2759
          %2782 = vmatprep.subr.bf16.mxu0 0
          %2783 = vmatpush1.bf16.msra.mxu0 %v2758
          %2784 = vmatprep.subr.bf16.mxu0 0
          %2785 = vmatpush1.bf16.msra.mxu0 %v2757
          %2786 = vmatprep.subr.bf16.mxu0 0
          %2787 = vmatpush1.bf16.msra.mxu0 %v2756
          %2788 = vmatprep.subr.bf16.mxu0 0
          %2789 = vmatpush2.bf16.msra.mxu0 0
          %2790 = vmatprep.subr.bf16.mxu0 0
          %2791 = vmatpush2.bf16.msra.mxu0 0
          %2792 = vmatprep.subr.bf16.mxu0 0
          %2793 = vmatpush2.bf16.msra.mxu0 0
          %2794 = vmatprep.subr.bf16.mxu0 0
          %2795 = vmatpush2.bf16.msra.mxu0 0
          %2796 = vmatprep.subr.bf16.mxu0 0
          %2797 = vmatpush2.bf16.msra.mxu0 0
          %2798 = vmatprep.subr.bf16.mxu0 0
          %2799 = vmatpush2.bf16.msra.mxu0 0
          %2800 = vmatprep.subr.bf16.mxu0 0
          %2801 = vmatpush2.bf16.msra.mxu0 0
          %2802 = vmatprep.subr.bf16.mxu0 0
          %2803 = vmatpush2.bf16.msra.mxu0 0
          %2804 = vmatprep.mubr.bf16.mxu0 0
          %2805 = vmatmul.mubr.bf16.gmra.mxu0 %v2700
          %v2806 = vpop.f32.mrf.mxu0
          %v2807 = vadd.f32 %v2722, %v2806
          %v2808 = vpop.f32.mrf.mxu0
          %v2809 = vpop.f32.mrf.mxu0
          %v2810 = vadd.f32 %v2722, %v2809
          %v2811 = vpop.f32.mrf.mxu0
          %2812 = vdwg.mxu0
          %2813 = vst [vmem:[%s22] sm:$0xff] %v2807
          %2814 = vst [vmem:[%s22 + $0x8] sm:$0xff] %v2810
        $region160: #{bert_classifier_forward.1} parent=107 // pred_fallthru
          _
        // Predicated region
        $region161: #{bert_classifier_forward.1} parent=107 // pred_check
          %p2815 = pneg %p571
        $region162: #{bert_classifier_forward.1} parent=107 // pred_check_branch
          %2817 = sbr.rel (%p2815) target = $region164
        $region163: #{bert_classifier_forward.1} parent=107 // pred_region
          _
        $region164: #{bert_classifier_forward.1} parent=107 // pred_fallthru
          _
        // Predicated region
        $region165: #{bert_classifier_forward.1} parent=107 // pred_check
          %p2818 = pneg %p571
        $region166: #{bert_classifier_forward.1} parent=107 // pred_check_branch
          %2820 = sbr.rel (%p2818) target = $region168
        $region167: #{bert_classifier_forward.1} parent=107 // pred_region
          _
        $region168: #{bert_classifier_forward.1} parent=107 // pred_fallthru
          _
      $region108: #{bert_classifier_forward.1} parent=5 // pred_fallthru
        _
      %p2821 = scmp.le.s32.totalorder 2, %s31
      // Predicated region
      $region169: #{bert_classifier_forward.1} parent=5 // pred_check
        %p2822 = pneg %p2821
      $region170: #{bert_classifier_forward.1} parent=5 // pred_check_branch
        %2824 = sbr.rel (%p2822) target = $region172
      $region171: #{bert_classifier_forward.1} parent=5 // pred_region
        %s2825 = ssub.s32 %s31, 2
      $region172: #{bert_classifier_forward.1} parent=5 // pred_fallthru
        _
    $region6: #{bert_classifier_forward.1} parent=1 // loop_footer
      %s35 = sadd.s32 1, %s31
    $region7: #{bert_classifier_forward.1} parent=1 // loop_footer_branch
      %30 = sbr.rel target = $region3
    $region8: #{bert_classifier_forward.1} parent=1 // loop_exit
      _
    %2826 = vsyncpa [#allocation4], 1
    %s2827 = scalar_lea.sflag [#allocation4], 1
    %2828 = vsyncpa %s2827, 1
    %2829 = vsyncpa [#allocation6], 1
    %2830 = vsyncpa [#allocation16], 1

</llo_original>
